<compile_context>
chip_gen: v6e
topology: v6e:2x2x1
jax: 0.10.0
libtpu: 0.0.40
codegen_flags: <defaults>
</compile_context>

<pallas_src>
import functools

import jax
import jax.numpy as jnp
from jax import lax
from jax.experimental import pallas as pl
from jax.experimental.pallas import tpu as pltpu


def _tpu_vmem_capacity_bytes(default=128 << 20):
    try:
        info = pltpu.get_tpu_info()
        return int(getattr(info, "vmem_capacity_bytes", default))
    except Exception:
        return int(default)


def _attention_kernel(x_ref, w1_ref, w2_ref, ctx_ref, attw_ref, *,
                      seq_len, mxu_context):
    # x_ref:   (TB, Sp, D)  block of batch rows (Sp = S padded to sublane mult)
    # w1_ref:  (D, D)       attention_weights.weight (PyTorch out x in layout)
    # w2_ref:  (1, D)       context_vector.weight
    # ctx_ref: (TB, D)      context output block
    # attw_ref:(TB, Sp)     attention-weight output block
    x = x_ref[...]                                   # native dtype (f32/bf16)
    tb, sp, d = x.shape

    # scores = tanh(x @ W1^T): one (TB*Sp, D) x (D, D) MXU matmul, contracting
    # the last dims of both operands (nn.Linear semantics, no W1 transpose),
    # with f32 accumulation.
    x2 = x.reshape(tb * sp, d)
    h2 = jnp.tanh(
        lax.dot_general(
            x2, w1_ref[...],
            dimension_numbers=(((1,), (1,)), ((), ())),
            preferred_element_type=jnp.float32))      # (TB*Sp, D) f32
    # TODO(synk): on v6e/v7x a bf16 tanh path would halve this temp; skipped to
    # keep one code path valid on v5e (no bf16 VPU/EUP).

    # Linear(D, 1) score projection: VPU multiply + lane reduce.
    w2 = w2_ref[...].astype(jnp.float32)              # (1, D)
    scores = jnp.sum(h2.reshape(tb, sp, d) * w2, axis=-1)   # (TB, Sp) f32

    # Mask padded sequence positions (present only when S % 8 != 0).
    if sp != seq_len:
        pos = lax.broadcasted_iota(jnp.int32, (tb, sp), 1)
        scores = jnp.where(pos < seq_len, scores, -1e30)

    # softmax over the sequence axis, in f32, exactly normalized.
    m = jnp.max(scores, axis=-1, keepdims=True)       # (TB, 1)
    e = jnp.exp(scores - m)                           # (TB, Sp)
    p = e / jnp.sum(e, axis=-1, keepdims=True)        # (TB, Sp) f32

    # context = softmax(scores) @ x
    if mxu_context:
        # Batched M=1 matmul: the MXU is idle in this HBM-bound regime and this
        # avoids materializing a (TB, Sp, D) f32 broadcast product.
        ctx = jnp.einsum(
            "bqs,bsd->bqd",
            p.reshape(tb, 1, sp).astype(x.dtype), x,
            preferred_element_type=jnp.float32)[:, 0, :]     # (TB, D) f32
    else:
        # Fallback: broadcast multiply + sublane reduce (previously validated).
        ctx = jnp.sum(p[..., None] * x, axis=1)               # (TB, D) f32

    ctx_ref[...] = ctx.astype(ctx_ref.dtype)
    attw_ref[...] = p.astype(attw_ref.dtype)


def attention_forward(lstm_output, w1, w2, *, block_b=None):
    """lstm_output: (B, S, D) with D = 2*hidden_size.
    w1: (D, D)  -- nn.Linear(D, D, bias=False).weight
    w2: (1, D)  -- nn.Linear(D, 1, bias=False).weight
    Returns (context (B, D), attention_weights (B, S))."""
    B, S, D = lstm_output.shape
    out_dtype = lstm_output.dtype
    itemsize = jnp.dtype(out_dtype).itemsize

    vmem_cap = _tpu_vmem_capacity_bytes()
    # Raise the scoped-VMEM cap (defaults are 16/32 MiB) but leave headroom.
    vmem_limit = int(min(100 << 20, (vmem_cap * 3) // 4))

    # Pad S to a sublane multiple so the in-kernel (TB*S, D) reshape never
    # forces a relayout copy; padded positions are masked in-kernel.
    Sp = pl.cdiv(S, 8) * 8

    if block_b is None:
        # HBM-bound kernel: target a multi-MiB x tile per grid step (smaller
        # on v7x's 64 MiB VMEM), rounded to a sublane multiple.
        target = (3 << 20) if vmem_cap <= (64 << 20) else (6 << 20)
        row_bytes = max(1, Sp * D * itemsize)
        bb = max(8, (target // row_bytes) // 8 * 8)
        # Per-step live footprint: double-buffered x tile + ~2 block-sized f32
        # temps (tanh activations, score product) + outputs.
        per_row = (2 * itemsize + 2 * 4) * Sp * D + 2 * (D + Sp) * itemsize
        w_bytes = 2 * (D * D + D) * jnp.dtype(w1.dtype).itemsize
        budget = max(vmem_limit - w_bytes, 8 * per_row)
        bb = min(bb, max(8, (budget // per_row) // 8 * 8))
        # Keep >= 2 grid steps when the (padded) batch allows it, for v7x's
        # two TensorCores sharing the "parallel" axis.
        b8 = pl.cdiv(B, 8) * 8
        if b8 >= 16:
            bb = min(bb, pl.cdiv(b8 // 2, 8) * 8)
        block_b = int(min(bb, b8))
        # TODO(synk): for very large S*D (esp. v7x), add an S-tile "arbitrary"
        # grid axis with online-softmax accumulators instead of a
        # full-sequence VMEM-resident block.

    n_blocks = pl.cdiv(B, block_b)
    Bp = n_blocks * block_b

    x = lstm_output
    if (Bp != B) or (Sp != S):
        x = jnp.pad(x, ((0, Bp - B), (0, Sp - S), (0, 0)))

    def _build_call(single_buffer_weights, mxu_context):
        wkw = {}
        if single_buffer_weights:
            # Weights are grid-invariant: one VMEM copy is enough.
            wkw = dict(pipeline_mode=pl.Buffered(1))
        kernel = functools.partial(
            _attention_kernel, seq_len=S, mxu_context=mxu_context)
        return pl.pallas_call(
            kernel,
            out_shape=(
                jax.ShapeDtypeStruct((Bp, D), out_dtype),
                jax.ShapeDtypeStruct((Bp, Sp), out_dtype),
            ),
            grid_spec=pltpu.PrefetchScalarGridSpec(
                num_scalar_prefetch=0,
                grid=(n_blocks,),
                in_specs=[
                    pl.BlockSpec((block_b, Sp, D), lambda b: (b, 0, 0)),
                    pl.BlockSpec((D, D), lambda b: (0, 0), **wkw),
                    pl.BlockSpec((1, D), lambda b: (0, 0), **wkw),
                ],
                out_specs=[
                    pl.BlockSpec((block_b, D), lambda b: (b, 0)),
                    pl.BlockSpec((block_b, Sp), lambda b: (b, 0)),
                ],
            ),
            compiler_params=pltpu.CompilerParams(
                dimension_semantics=("parallel",),
                vmem_limit_bytes=vmem_limit),
        )

    # Prefer single-buffered weights + MXU context reduction; degrade
    # gracefully if the installed JAX/Mosaic build rejects either.
    attempts = (
        dict(single_buffer_weights=True, mxu_context=True),
        dict(single_buffer_weights=False, mxu_context=True),
        dict(single_buffer_weights=True, mxu_context=False),
        dict(single_buffer_weights=False, mxu_context=False),
    )
    last_err = None
    for opt in attempts:
        try:
            ctx, attw = _build_call(**opt)(x, w1, w2)
            break
        except Exception as e:  # fall through to the next configuration
            last_err = e
    else:
        raise last_err

    return ctx[:B], attw[:B, :S]


def attention_ref(lstm_output, w1, w2):
    scores = jnp.einsum("bsd,od->bso", lstm_output, w1)
    scores = jnp.tanh(scores)
    scores = jnp.einsum("bsd,od->bso", scores, w2)[..., 0]   # (B, S)
    attw = jax.nn.softmax(scores, axis=-1)
    ctx = jnp.einsum("bs,bsd->bd", attw, lstm_output)
    return ctx, attw


if __name__ == "__main__":
    key = jax.random.PRNGKey(0)
    B, S, hidden = 2, 8, 16
    D = hidden * 2  # 32

    k1, k2, k3 = jax.random.split(key, 3)
    lstm_output = jax.random.normal(k1, (B, S, D), dtype=jnp.float32)
    # Deterministic "Linear" weights (PyTorch layout: out_features x in_features)
    w1 = jax.random.normal(k2, (D, D), dtype=jnp.float32) * 0.1
    w2 = jax.random.normal(k3, (1, D), dtype=jnp.float32) * 0.1

    ctx, attw = attention_forward(lstm_output, w1, w2)
    jax.block_until_ready((ctx, attw))

    ctx_ref, attw_ref = attention_ref(lstm_output, w1, w2)
    assert jnp.allclose(ctx, ctx_ref, atol=2e-3, rtol=2e-3), "context mismatch"
    assert jnp.allclose(attw, attw_ref, atol=2e-3, rtol=2e-3), "attn mismatch"

    print("KERNEL_OK")
</pallas_src>

<mosaic_0001>
module attributes {stable_mosaic.version = 11 : i64} {
  func.func @_attention_kernel(%arg0: i32, %arg1: memref<8x8x32xf32, #tpu.memory_space<vmem>>, %arg2: memref<32x32xf32, #tpu.memory_space<vmem>>, %arg3: memref<1x32xf32, #tpu.memory_space<vmem>>, %arg4: memref<8x32xf32, #tpu.memory_space<vmem>>, %arg5: memref<8x8xf32, #tpu.memory_space<vmem>>) attributes {dimension_semantics = [#tpu.dimension_semantics<parallel>], iteration_bounds = array<i64: 1>, scalar_prefetch = 0 : i64, scratch_operands = 0 : i64, tpu.core_type = #tpu.core_type<tc>, window_params = [{transform_indices = @transform_0, window_bounds = array<i64: 8, 8, 32>}, {pipeline_mode = #tpu.pipeline_mode<synchronous>, transform_indices = @transform_1, window_bounds = array<i64: 32, 32>}, {pipeline_mode = #tpu.pipeline_mode<synchronous>, transform_indices = @transform_2, window_bounds = array<i64: 1, 32>}, {transform_indices = @transform_3, window_bounds = array<i64: 8, 32>}, {transform_indices = @transform_4, window_bounds = array<i64: 8, 8>}]} {
    %c0 = arith.constant 0 : index
    %c0_0 = arith.constant 0 : index
    %c0_1 = arith.constant 0 : index
    %0 = vector.load %arg1[%c0, %c0_0, %c0_1] : memref<8x8x32xf32, #tpu.memory_space<vmem>>, vector<8x8x32xf32>
    %1 = vector.shape_cast %0 : vector<8x8x32xf32> to vector<64x32xf32>
    %c0_2 = arith.constant 0 : index
    %c0_3 = arith.constant 0 : index
    %2 = vector.load %arg2[%c0_2, %c0_3] : memref<32x32xf32, #tpu.memory_space<vmem>>, vector<32x32xf32>
    %cst = arith.constant dense<0.000000e+00> : vector<64x32xf32>
    %3 = tpu.matmul %1, %2, %cst {dimension_numbers = #tpu.dot_dimension_numbers<[1], [1], [0], [0], [0, 0, 1, 0], [], []>} : vector<64x32xf32>, vector<32x32xf32>, vector<64x32xf32> -> vector<64x32xf32>
    %4 = math.tanh %3 : vector<64x32xf32>
    %c0_4 = arith.constant 0 : index
    %c0_5 = arith.constant 0 : index
    %5 = vector.load %arg3[%c0_4, %c0_5] : memref<1x32xf32, #tpu.memory_space<vmem>>, vector<1x32xf32>
    %6 = vector.shape_cast %4 : vector<64x32xf32> to vector<8x8x32xf32>
    %7 = vector.shape_cast %5 : vector<1x32xf32> to vector<1x1x32xf32>
    %8 = vector.broadcast %7 : vector<1x1x32xf32> to vector<8x8x32xf32>
    %9 = arith.mulf %6, %8 : vector<8x8x32xf32>
    %cst_6 = arith.constant dense<0.000000e+00> : vector<8x8xf32>
    %10 = vector.multi_reduction <add>, %9, %cst_6 [2] : vector<8x8x32xf32> to vector<8x8xf32>
    %cst_7 = arith.constant dense<0xFF800000> : vector<8xf32>
    %11 = vector.multi_reduction <maximumf>, %10, %cst_7 [1] : vector<8x8xf32> to vector<8xf32>
    %12 = vector.shape_cast %11 : vector<8xf32> to vector<8x1xf32>
    %13 = vector.broadcast %12 : vector<8x1xf32> to vector<8x8xf32>
    %14 = arith.subf %10, %13 : vector<8x8xf32>
    %15 = math.exp %14 : vector<8x8xf32>
    %cst_8 = arith.constant dense<0.000000e+00> : vector<8xf32>
    %16 = vector.multi_reduction <add>, %15, %cst_8 [1] : vector<8x8xf32> to vector<8xf32>
    %17 = vector.shape_cast %16 : vector<8xf32> to vector<8x1xf32>
    %18 = vector.broadcast %17 : vector<8x1xf32> to vector<8x8xf32>
    %19 = arith.divf %15, %18 : vector<8x8xf32>
    %20 = vector.shape_cast %19 : vector<8x8xf32> to vector<8x1x8xf32>
    "tpu.trace_start"() <{level = 10 : i32, message = "bqs,bsd->bqd"}> : () -> ()
    %cst_9 = arith.constant dense<0.000000e+00> : vector<8x1x32xf32>
    %21 = tpu.matmul %20, %0, %cst_9 {dimension_numbers = #tpu.dot_dimension_numbers<[2], [1], [1], [2], [0, 0, 0, 1, 1, 2], [0], [0]>} : vector<8x1x8xf32>, vector<8x8x32xf32>, vector<8x1x32xf32> -> vector<8x1x32xf32>
    "tpu.trace_stop"() : () -> ()
    %22 = vector.shape_cast %21 : vector<8x1x32xf32> to vector<8x32xf32>
    %c0_10 = arith.constant 0 : index
    %c0_11 = arith.constant 0 : index
    %23 = vector.load %arg4[%c0_10, %c0_11] : memref<8x32xf32, #tpu.memory_space<vmem>>, vector<8x32xf32>
    tpu.vector_store %arg4[%c0_10, %c0_11], %22 {strides = array<i32>} : memref<8x32xf32, #tpu.memory_space<vmem>>, vector<8x32xf32>,
    %c0_12 = arith.constant 0 : index
    %c0_13 = arith.constant 0 : index
    %24 = vector.load %arg5[%c0_12, %c0_13] : memref<8x8xf32, #tpu.memory_space<vmem>>, vector<8x8xf32>
    tpu.vector_store %arg5[%c0_12, %c0_13], %19 {strides = array<i32>} : memref<8x8xf32, #tpu.memory_space<vmem>>, vector<8x8xf32>,
    return
  }
  func.func @transform_0(%arg0: i32) -> (i32, i32, i32) {
    %c0_i32 = arith.constant 0 : i32
    %c0_i32_0 = arith.constant 0 : i32
    %c0_i32_1 = arith.constant 0 : i32
    return %arg0, %c0_i32, %c0_i32_0 : i32, i32, i32
  }
  func.func @transform_1(%arg0: i32) -> (i32, i32) {
    %c0_i32 = arith.constant 0 : i32
    %c0_i32_0 = arith.constant 0 : i32
    %c0_i32_1 = arith.constant 0 : i32
    return %c0_i32, %c0_i32_0 : i32, i32
  }
  func.func @transform_2(%arg0: i32) -> (i32, i32) {
    %c0_i32 = arith.constant 0 : i32
    %c0_i32_0 = arith.constant 0 : i32
    %c0_i32_1 = arith.constant 0 : i32
    return %c0_i32, %c0_i32_0 : i32, i32
  }
  func.func @transform_3(%arg0: i32) -> (i32, i32) {
    %c0_i32 = arith.constant 0 : i32
    %c0_i32_0 = arith.constant 0 : i32
    return %arg0, %c0_i32 : i32, i32
  }
  func.func @transform_4(%arg0: i32) -> (i32, i32) {
    %c0_i32 = arith.constant 0 : i32
    %c0_i32_0 = arith.constant 0 : i32
    return %arg0, %c0_i32 : i32, i32
  }
}

module attributes {stable_mosaic.version = 11 : i64} {
  func.func @_attention_kernel(%arg0: i32, %arg1: memref<8x8x32xf32, #tpu.memory_space<vmem>>, %arg2: memref<32x32xf32, #tpu.memory_space<vmem>>, %arg3: memref<1x32xf32, #tpu.memory_space<vmem>>, %arg4: memref<8x32xf32, #tpu.memory_space<vmem>>, %arg5: memref<8x8xf32, #tpu.memory_space<vmem>>) attributes {dimension_semantics = [#tpu.dimension_semantics<parallel>], iteration_bounds = array<i64: 1>, scalar_prefetch = 0 : i64, scratch_operands = 0 : i64, tpu.core_type = #tpu.core_type<tc>, window_params = [{transform_indices = @transform_0, window_bounds = array<i64: 8, 8, 32>}, {pipeline_mode = #tpu.pipeline_mode<synchronous>, transform_indices = @transform_1, window_bounds = array<i64: 32, 32>}, {pipeline_mode = #tpu.pipeline_mode<synchronous>, transform_indices = @transform_2, window_bounds = array<i64: 1, 32>}, {transform_indices = @transform_3, window_bounds = array<i64: 8, 32>}, {transform_indices = @transform_4, window_bounds = array<i64: 8, 8>}]} {
    %c0 = arith.constant 0 : index
    %c0_0 = arith.constant 0 : index
    %c0_1 = arith.constant 0 : index
    %0 = vector.load %arg1[%c0, %c0_0, %c0_1] : memref<8x8x32xf32, #tpu.memory_space<vmem>>, vector<8x8x32xf32>
    %1 = vector.shape_cast %0 : vector<8x8x32xf32> to vector<64x32xf32>
    %c0_2 = arith.constant 0 : index
    %c0_3 = arith.constant 0 : index
    %2 = vector.load %arg2[%c0_2, %c0_3] : memref<32x32xf32, #tpu.memory_space<vmem>>, vector<32x32xf32>
    %cst = arith.constant dense<0.000000e+00> : vector<64x32xf32>
    %3 = tpu.matmul %1, %2, %cst {dimension_numbers = #tpu.dot_dimension_numbers<[1], [1], [0], [0], [0, 0, 1, 0], [], []>} : vector<64x32xf32>, vector<32x32xf32>, vector<64x32xf32> -> vector<64x32xf32>
    %4 = math.tanh %3 : vector<64x32xf32>
    %c0_4 = arith.constant 0 : index
    %c0_5 = arith.constant 0 : index
    %5 = vector.load %arg3[%c0_4, %c0_5] : memref<1x32xf32, #tpu.memory_space<vmem>>, vector<1x32xf32>
    %6 = vector.shape_cast %4 : vector<64x32xf32> to vector<8x8x32xf32>
    %7 = vector.shape_cast %5 : vector<1x32xf32> to vector<1x1x32xf32>
    %8 = vector.broadcast %7 : vector<1x1x32xf32> to vector<8x8x32xf32>
    %9 = arith.mulf %6, %8 : vector<8x8x32xf32>
    %cst_6 = arith.constant dense<0.000000e+00> : vector<8x8xf32>
    %10 = vector.multi_reduction <add>, %9, %cst_6 [2] : vector<8x8x32xf32> to vector<8x8xf32>
    %cst_7 = arith.constant dense<0xFF800000> : vector<8xf32>
    %11 = vector.multi_reduction <maximumf>, %10, %cst_7 [1] : vector<8x8xf32> to vector<8xf32>
    %12 = vector.shape_cast %11 : vector<8xf32> to vector<8x1xf32>
    %13 = vector.broadcast %12 : vector<8x1xf32> to vector<8x8xf32>
    %14 = arith.subf %10, %13 : vector<8x8xf32>
    %15 = math.exp %14 : vector<8x8xf32>
    %cst_8 = arith.constant dense<0.000000e+00> : vector<8xf32>
    %16 = vector.multi_reduction <add>, %15, %cst_8 [1] : vector<8x8xf32> to vector<8xf32>
    %17 = vector.shape_cast %16 : vector<8xf32> to vector<8x1xf32>
    %18 = vector.broadcast %17 : vector<8x1xf32> to vector<8x8xf32>
    %19 = arith.divf %15, %18 : vector<8x8xf32>
    %20 = vector.shape_cast %19 : vector<8x8xf32> to vector<8x1x8xf32>
    "tpu.trace_start"() <{level = 10 : i32, message = "bqs,bsd->bqd"}> : () -> ()
    %cst_9 = arith.constant dense<0.000000e+00> : vector<8x1x32xf32>
    %21 = tpu.matmul %20, %0, %cst_9 {dimension_numbers = #tpu.dot_dimension_numbers<[2], [1], [1], [2], [0, 0, 0, 1, 1, 2], [0], [0]>} : vector<8x1x8xf32>, vector<8x8x32xf32>, vector<8x1x32xf32> -> vector<8x1x32xf32>
    "tpu.trace_stop"() : () -> ()
    %22 = vector.shape_cast %21 : vector<8x1x32xf32> to vector<8x32xf32>
    %c0_10 = arith.constant 0 : index
    %c0_11 = arith.constant 0 : index
    %23 = vector.load %arg4[%c0_10, %c0_11] : memref<8x32xf32, #tpu.memory_space<vmem>>, vector<8x32xf32>
    tpu.vector_store %arg4[%c0_10, %c0_11], %22 {strides = array<i32>} : memref<8x32xf32, #tpu.memory_space<vmem>>, vector<8x32xf32>,
    %c0_12 = arith.constant 0 : index
    %c0_13 = arith.constant 0 : index
    %24 = vector.load %arg5[%c0_12, %c0_13] : memref<8x8xf32, #tpu.memory_space<vmem>>, vector<8x8xf32>
    tpu.vector_store %arg5[%c0_12, %c0_13], %19 {strides = array<i32>} : memref<8x8xf32, #tpu.memory_space<vmem>>, vector<8x8xf32>,
    return
  }
  func.func @transform_0(%arg0: i32) -> (i32, i32, i32) {
    %c0_i32 = arith.constant 0 : i32
    %c0_i32_0 = arith.constant 0 : i32
    %c0_i32_1 = arith.constant 0 : i32
    return %arg0, %c0_i32, %c0_i32_0 : i32, i32, i32
  }
  func.func @transform_1(%arg0: i32) -> (i32, i32) {
    %c0_i32 = arith.constant 0 : i32
    %c0_i32_0 = arith.constant 0 : i32
    %c0_i32_1 = arith.constant 0 : i32
    return %c0_i32, %c0_i32_0 : i32, i32
  }
  func.func @transform_2(%arg0: i32) -> (i32, i32) {
    %c0_i32 = arith.constant 0 : i32
    %c0_i32_0 = arith.constant 0 : i32
    %c0_i32_1 = arith.constant 0 : i32
    return %c0_i32, %c0_i32_0 : i32, i32
  }
  func.func @transform_3(%arg0: i32) -> (i32, i32) {
    %c0_i32 = arith.constant 0 : i32
    %c0_i32_0 = arith.constant 0 : i32
    return %arg0, %c0_i32 : i32, i32
  }
  func.func @transform_4(%arg0: i32) -> (i32, i32) {
    %c0_i32 = arith.constant 0 : i32
    %c0_i32_0 = arith.constant 0 : i32
    return %arg0, %c0_i32 : i32, i32
  }
}

module attributes {stable_mosaic.version = 11 : i64} {
  func.func @_attention_kernel(%arg0: i32, %arg1: memref<8x8x32xf32, #tpu.memory_space<vmem>>, %arg2: memref<32x32xf32, #tpu.memory_space<vmem>>, %arg3: memref<1x32xf32, #tpu.memory_space<vmem>>, %arg4: memref<8x32xf32, #tpu.memory_space<vmem>>, %arg5: memref<8x8xf32, #tpu.memory_space<vmem>>) attributes {dimension_semantics = [#tpu.dimension_semantics<parallel>], iteration_bounds = array<i64: 1>, scalar_prefetch = 0 : i64, scratch_operands = 0 : i64, tpu.core_type = #tpu.core_type<tc>, window_params = [{transform_indices = @transform_0, window_bounds = array<i64: 8, 8, 32>}, {pipeline_mode = #tpu.pipeline_mode<synchronous>, transform_indices = @transform_1, window_bounds = array<i64: 32, 32>}, {pipeline_mode = #tpu.pipeline_mode<synchronous>, transform_indices = @transform_2, window_bounds = array<i64: 1, 32>}, {transform_indices = @transform_3, window_bounds = array<i64: 8, 32>}, {transform_indices = @transform_4, window_bounds = array<i64: 8, 8>}]} {
    %c0 = arith.constant 0 : index
    %c0_0 = arith.constant 0 : index
    %c0_1 = arith.constant 0 : index
    %0 = vector.load %arg1[%c0, %c0_0, %c0_1] : memref<8x8x32xf32, #tpu.memory_space<vmem>>, vector<8x8x32xf32>
    %1 = vector.shape_cast %0 : vector<8x8x32xf32> to vector<64x32xf32>
    %c0_2 = arith.constant 0 : index
    %c0_3 = arith.constant 0 : index
    %2 = vector.load %arg2[%c0_2, %c0_3] : memref<32x32xf32, #tpu.memory_space<vmem>>, vector<32x32xf32>
    %cst = arith.constant dense<0.000000e+00> : vector<64x32xf32>
    %3 = tpu.matmul %1, %2, %cst {dimension_numbers = #tpu.dot_dimension_numbers<[1], [1], [0], [0], [0, 0, 1, 0], [], []>} : vector<64x32xf32>, vector<32x32xf32>, vector<64x32xf32> -> vector<64x32xf32>
    %4 = math.tanh %3 : vector<64x32xf32>
    %c0_4 = arith.constant 0 : index
    %c0_5 = arith.constant 0 : index
    %5 = vector.load %arg3[%c0_4, %c0_5] : memref<1x32xf32, #tpu.memory_space<vmem>>, vector<1x32xf32>
    %6 = vector.shape_cast %4 : vector<64x32xf32> to vector<8x8x32xf32>
    %7 = vector.shape_cast %5 : vector<1x32xf32> to vector<1x1x32xf32>
    %8 = vector.broadcast %7 : vector<1x1x32xf32> to vector<8x8x32xf32>
    %9 = arith.mulf %6, %8 : vector<8x8x32xf32>
    %cst_6 = arith.constant dense<0.000000e+00> : vector<8x8xf32>
    %10 = vector.multi_reduction <add>, %9, %cst_6 [2] : vector<8x8x32xf32> to vector<8x8xf32>
    %cst_7 = arith.constant dense<0xFF800000> : vector<8xf32>
    %11 = vector.multi_reduction <maximumf>, %10, %cst_7 [1] : vector<8x8xf32> to vector<8xf32>
    %12 = vector.shape_cast %11 : vector<8xf32> to vector<8x1xf32>
    %13 = vector.broadcast %12 : vector<8x1xf32> to vector<8x8xf32>
    %14 = arith.subf %10, %13 : vector<8x8xf32>
    %15 = math.exp %14 : vector<8x8xf32>
    %cst_8 = arith.constant dense<0.000000e+00> : vector<8xf32>
    %16 = vector.multi_reduction <add>, %15, %cst_8 [1] : vector<8x8xf32> to vector<8xf32>
    %17 = vector.shape_cast %16 : vector<8xf32> to vector<8x1xf32>
    %18 = vector.broadcast %17 : vector<8x1xf32> to vector<8x8xf32>
    %19 = arith.divf %15, %18 : vector<8x8xf32>
    %20 = vector.shape_cast %19 : vector<8x8xf32> to vector<8x8x1xf32>
    %21 = vector.broadcast %20 : vector<8x8x1xf32> to vector<8x8x32xf32>
    %22 = arith.mulf %21, %0 : vector<8x8x32xf32>
    %cst_9 = arith.constant dense<0.000000e+00> : vector<8x32xf32>
    %23 = vector.multi_reduction <add>, %22, %cst_9 [1] : vector<8x8x32xf32> to vector<8x32xf32>
    %c0_10 = arith.constant 0 : index
    %c0_11 = arith.constant 0 : index
    %24 = vector.load %arg4[%c0_10, %c0_11] : memref<8x32xf32, #tpu.memory_space<vmem>>, vector<8x32xf32>
    tpu.vector_store %arg4[%c0_10, %c0_11], %23 {strides = array<i32>} : memref<8x32xf32, #tpu.memory_space<vmem>>, vector<8x32xf32>,
    %c0_12 = arith.constant 0 : index
    %c0_13 = arith.constant 0 : index
    %25 = vector.load %arg5[%c0_12, %c0_13] : memref<8x8xf32, #tpu.memory_space<vmem>>, vector<8x8xf32>
    tpu.vector_store %arg5[%c0_12, %c0_13], %19 {strides = array<i32>} : memref<8x8xf32, #tpu.memory_space<vmem>>, vector<8x8xf32>,
    return
  }
  func.func @transform_0(%arg0: i32) -> (i32, i32, i32) {
    %c0_i32 = arith.constant 0 : i32
    %c0_i32_0 = arith.constant 0 : i32
    %c0_i32_1 = arith.constant 0 : i32
    return %arg0, %c0_i32, %c0_i32_0 : i32, i32, i32
  }
  func.func @transform_1(%arg0: i32) -> (i32, i32) {
    %c0_i32 = arith.constant 0 : i32
    %c0_i32_0 = arith.constant 0 : i32
    %c0_i32_1 = arith.constant 0 : i32
    return %c0_i32, %c0_i32_0 : i32, i32
  }
  func.func @transform_2(%arg0: i32) -> (i32, i32) {
    %c0_i32 = arith.constant 0 : i32
    %c0_i32_0 = arith.constant 0 : i32
    %c0_i32_1 = arith.constant 0 : i32
    return %c0_i32, %c0_i32_0 : i32, i32
  }
  func.func @transform_3(%arg0: i32) -> (i32, i32) {
    %c0_i32 = arith.constant 0 : i32
    %c0_i32_0 = arith.constant 0 : i32
    return %arg0, %c0_i32 : i32, i32
  }
  func.func @transform_4(%arg0: i32) -> (i32, i32) {
    %c0_i32 = arith.constant 0 : i32
    %c0_i32_0 = arith.constant 0 : i32
    return %arg0, %c0_i32 : i32, i32
  }
}

module attributes {stable_mosaic.version = 11 : i64} {
  func.func @_attention_kernel(%arg0: i32, %arg1: memref<8x8x32xf32, #tpu.memory_space<vmem>>, %arg2: memref<32x32xf32, #tpu.memory_space<vmem>>, %arg3: memref<1x32xf32, #tpu.memory_space<vmem>>, %arg4: memref<8x32xf32, #tpu.memory_space<vmem>>, %arg5: memref<8x8xf32, #tpu.memory_space<vmem>>) attributes {dimension_semantics = [#tpu.dimension_semantics<parallel>], iteration_bounds = array<i64: 1>, scalar_prefetch = 0 : i64, scratch_operands = 0 : i64, tpu.core_type = #tpu.core_type<tc>, window_params = [{transform_indices = @transform_0, window_bounds = array<i64: 8, 8, 32>}, {pipeline_mode = #tpu.pipeline_mode<synchronous>, transform_indices = @transform_1, window_bounds = array<i64: 32, 32>}, {pipeline_mode = #tpu.pipeline_mode<synchronous>, transform_indices = @transform_2, window_bounds = array<i64: 1, 32>}, {transform_indices = @transform_3, window_bounds = array<i64: 8, 32>}, {transform_indices = @transform_4, window_bounds = array<i64: 8, 8>}]} {
    %c0 = arith.constant 0 : index
    %c0_0 = arith.constant 0 : index
    %c0_1 = arith.constant 0 : index
    %0 = vector.load %arg1[%c0, %c0_0, %c0_1] : memref<8x8x32xf32, #tpu.memory_space<vmem>>, vector<8x8x32xf32>
    %1 = vector.shape_cast %0 : vector<8x8x32xf32> to vector<64x32xf32>
    %c0_2 = arith.constant 0 : index
    %c0_3 = arith.constant 0 : index
    %2 = vector.load %arg2[%c0_2, %c0_3] : memref<32x32xf32, #tpu.memory_space<vmem>>, vector<32x32xf32>
    %cst = arith.constant dense<0.000000e+00> : vector<64x32xf32>
    %3 = tpu.matmul %1, %2, %cst {dimension_numbers = #tpu.dot_dimension_numbers<[1], [1], [0], [0], [0, 0, 1, 0], [], []>} : vector<64x32xf32>, vector<32x32xf32>, vector<64x32xf32> -> vector<64x32xf32>
    %4 = math.tanh %3 : vector<64x32xf32>
    %c0_4 = arith.constant 0 : index
    %c0_5 = arith.constant 0 : index
    %5 = vector.load %arg3[%c0_4, %c0_5] : memref<1x32xf32, #tpu.memory_space<vmem>>, vector<1x32xf32>
    %6 = vector.shape_cast %4 : vector<64x32xf32> to vector<8x8x32xf32>
    %7 = vector.shape_cast %5 : vector<1x32xf32> to vector<1x1x32xf32>
    %8 = vector.broadcast %7 : vector<1x1x32xf32> to vector<8x8x32xf32>
    %9 = arith.mulf %6, %8 : vector<8x8x32xf32>
    %cst_6 = arith.constant dense<0.000000e+00> : vector<8x8xf32>
    %10 = vector.multi_reduction <add>, %9, %cst_6 [2] : vector<8x8x32xf32> to vector<8x8xf32>
    %cst_7 = arith.constant dense<0xFF800000> : vector<8xf32>
    %11 = vector.multi_reduction <maximumf>, %10, %cst_7 [1] : vector<8x8xf32> to vector<8xf32>
    %12 = vector.shape_cast %11 : vector<8xf32> to vector<8x1xf32>
    %13 = vector.broadcast %12 : vector<8x1xf32> to vector<8x8xf32>
    %14 = arith.subf %10, %13 : vector<8x8xf32>
    %15 = math.exp %14 : vector<8x8xf32>
    %cst_8 = arith.constant dense<0.000000e+00> : vector<8xf32>
    %16 = vector.multi_reduction <add>, %15, %cst_8 [1] : vector<8x8xf32> to vector<8xf32>
    %17 = vector.shape_cast %16 : vector<8xf32> to vector<8x1xf32>
    %18 = vector.broadcast %17 : vector<8x1xf32> to vector<8x8xf32>
    %19 = arith.divf %15, %18 : vector<8x8xf32>
    %20 = vector.shape_cast %19 : vector<8x8xf32> to vector<8x8x1xf32>
    %21 = vector.broadcast %20 : vector<8x8x1xf32> to vector<8x8x32xf32>
    %22 = arith.mulf %21, %0 : vector<8x8x32xf32>
    %cst_9 = arith.constant dense<0.000000e+00> : vector<8x32xf32>
    %23 = vector.multi_reduction <add>, %22, %cst_9 [1] : vector<8x8x32xf32> to vector<8x32xf32>
    %c0_10 = arith.constant 0 : index
    %c0_11 = arith.constant 0 : index
    %24 = vector.load %arg4[%c0_10, %c0_11] : memref<8x32xf32, #tpu.memory_space<vmem>>, vector<8x32xf32>
    tpu.vector_store %arg4[%c0_10, %c0_11], %23 {strides = array<i32>} : memref<8x32xf32, #tpu.memory_space<vmem>>, vector<8x32xf32>,
    %c0_12 = arith.constant 0 : index
    %c0_13 = arith.constant 0 : index
    %25 = vector.load %arg5[%c0_12, %c0_13] : memref<8x8xf32, #tpu.memory_space<vmem>>, vector<8x8xf32>
    tpu.vector_store %arg5[%c0_12, %c0_13], %19 {strides = array<i32>} : memref<8x8xf32, #tpu.memory_space<vmem>>, vector<8x8xf32>,
    return
  }
  func.func @transform_0(%arg0: i32) -> (i32, i32, i32) {
    %c0_i32 = arith.constant 0 : i32
    %c0_i32_0 = arith.constant 0 : i32
    %c0_i32_1 = arith.constant 0 : i32
    return %arg0, %c0_i32, %c0_i32_0 : i32, i32, i32
  }
  func.func @transform_1(%arg0: i32) -> (i32, i32) {
    %c0_i32 = arith.constant 0 : i32
    %c0_i32_0 = arith.constant 0 : i32
    %c0_i32_1 = arith.constant 0 : i32
    return %c0_i32, %c0_i32_0 : i32, i32
  }
  func.func @transform_2(%arg0: i32) -> (i32, i32) {
    %c0_i32 = arith.constant 0 : i32
    %c0_i32_0 = arith.constant 0 : i32
    %c0_i32_1 = arith.constant 0 : i32
    return %c0_i32, %c0_i32_0 : i32, i32
  }
  func.func @transform_3(%arg0: i32) -> (i32, i32) {
    %c0_i32 = arith.constant 0 : i32
    %c0_i32_0 = arith.constant 0 : i32
    return %arg0, %c0_i32 : i32, i32
  }
  func.func @transform_4(%arg0: i32) -> (i32, i32) {
    %c0_i32 = arith.constant 0 : i32
    %c0_i32_0 = arith.constant 0 : i32
    return %arg0, %c0_i32 : i32, i32
  }
}

</mosaic_0001>

<llo_original>
// kernel: tpu_custom_call.1
$region0: #{tpu_custom_call.1}
  #allocation0 [shape = 'u32[]', space=smem, size = 0x4, offset = 0x4, fixed_abs, tag = 'smem constant byte address 0x4 - core index']
  #allocation1 [shape = 'u32[144,128]{1,0:T(1,128)}', space=vmem, size = 0x12000, scoped, tag = 'internal scratch']
  %s0 = inlined_call_operand.hbm [shape: f32[8,8,32], index: 0, kind: input, shape index: {}]
  %s1 = inlined_call_operand.hbm [shape: f32[32,32], index: 1, kind: input, shape index: {}]
  %s2 = inlined_call_operand.vmem [shape: f32[1,32], index: 2, kind: input, shape index: {}]
  %s3 = inlined_call_operand.hbm [shape: f32[8,32], index: 3, kind: output, shape index: {0}]
  %s4 = inlined_call_operand.hbm [shape: f32[8,8], index: 4, kind: output, shape index: {1}]
  %5 = xla_tuple %s3, %s4
  %s6 = sld [smem:[#allocation0]]
  $region38: #{tpu_custom_call.1} parent=0
    _
  %s8 = ssub.s32 1, %s6
  %s9 = scalar_select 0, %s8, %s6
  $region1: #{tpu_custom_call.1} parent=0
    #allocation2 [shape = 'u8[32768]{0}', space=vmem, size = 0x8000, scoped, tag = 'input window, operand 0, single buffered']
    #allocation3 [shape = 's32[1]{0}', space=sflag, size = 0x4, scoped, tag = 'scoped memory for tpu_custom_call.1']
    #allocation4 [shape = 's32[1]{0}', space=sflag, size = 0x4, scoped, tag = 'scoped memory for tpu_custom_call.1']
    #allocation5 [shape = 'u8[16384]{0}', space=vmem, size = 0x4000, scoped, tag = 'input window, operand 1, single buffered']
    #allocation6 [shape = 's32[1]{0}', space=sflag, size = 0x4, scoped, tag = 'scoped memory for tpu_custom_call.1']
    #allocation7 [shape = 'u8[4096]{0}', space=vmem, size = 0x1000, scoped, tag = 'output window, operand 0, single buffered']
    #allocation8 [shape = 'u8[4096]{0}', space=vmem, size = 0x1000, scoped, tag = 'output window, operand 1, single buffered']
    #allocation9 [shape = 's32[1]{0}', space=sflag, size = 0x4, scoped, tag = 'scoped memory for tpu_custom_call.1']
    %10 = vsyncpa [#allocation3], 0
    %11 = vsyncpa [#allocation6], 0
    %12 = vsyncpa [#allocation4], 0
    %13 = vsyncpa [#allocation9], 0
    // Predicated region
    $region2: #{tpu_custom_call.1} parent=1 // pred_check
      _
    $region3: #{tpu_custom_call.1} parent=1 // pred_check_branch
      %15 = sbr.rel (0) target = $region5
    $region4: #{tpu_custom_call.1} parent=1 // pred_region
      %s17 = ssub.s32 1024, 1024
      %18 = vsyncadd [#allocation3], %s17
      %s19 = sshll.u32 [#allocation2], 4
      %s20 = int_to_ptr.vmem [resolvable:$true] %s19
      %25 = dma.hbm_to_vmem [thread:$0]  %s0, 1024, %s20, [#allocation3], 128, 128, 8
    $region5: #{tpu_custom_call.1} parent=1 // pred_fallthru
      _
    // Predicated region
    $region6: #{tpu_custom_call.1} parent=1 // pred_check
      _
    $region7: #{tpu_custom_call.1} parent=1 // pred_check_branch
      %27 = sbr.rel (0) target = $region9
    $region8: #{tpu_custom_call.1} parent=1 // pred_region
      %s29 = ssub.s32 512, 512
      %30 = vsyncadd [#allocation6], %s29
      %s31 = sshll.u32 [#allocation5], 4
      %s32 = int_to_ptr.vmem [resolvable:$true] %s31
      %37 = dma.hbm_to_vmem [thread:$0]  %s1, 512, %s32, [#allocation6], 128, 128, 8
    $region9: #{tpu_custom_call.1} parent=1 // pred_fallthru
      _
    // Predicated region
    $region10: #{tpu_custom_call.1} parent=1 // pred_check
      _
    $region11: #{tpu_custom_call.1} parent=1 // pred_check_branch
      %39 = sbr.rel (0) target = $region13
    $region12: #{tpu_custom_call.1} parent=1 // pred_region
      _
    $region13: #{tpu_custom_call.1} parent=1 // pred_fallthru
      _
    // Predicated region
    $region14: #{tpu_custom_call.1} parent=1 // pred_check
      _
    $region15: #{tpu_custom_call.1} parent=1 // pred_check_branch
      %41 = sbr.rel (0) target = $region17
    $region16: #{tpu_custom_call.1} parent=1 // pred_region
      %42 = dma.done [#allocation3], 1024
    $region17: #{tpu_custom_call.1} parent=1 // pred_fallthru
      _
    // Predicated region
    $region18: #{tpu_custom_call.1} parent=1 // pred_check
      _
    $region19: #{tpu_custom_call.1} parent=1 // pred_check_branch
      %44 = sbr.rel (0) target = $region21
    $region20: #{tpu_custom_call.1} parent=1 // pred_region
      %45 = dma.done [#allocation6], 512
    $region21: #{tpu_custom_call.1} parent=1 // pred_fallthru
      _
    %v46 = vld [vmem:[#allocation2] sm:$0xff]
    %v47 = vld [vmem:[#allocation2 + $0x8] sm:$0xff]
    %v48 = vld [vmem:[#allocation2 + $0x10] sm:$0xff]
    %v49 = vld [vmem:[#allocation2 + $0x18] sm:$0xff]
    %v50 = vld [vmem:[#allocation2 + $0x20] sm:$0xff]
    %v51 = vld [vmem:[#allocation2 + $0x28] sm:$0xff]
    %v52 = vld [vmem:[#allocation2 + $0x30] sm:$0xff]
    %v53 = vld [vmem:[#allocation2 + $0x38] sm:$0xff]
    %v54 = vld [vmem:[#allocation5] sm:$0xff]
    %v55 = vld [vmem:[#allocation5 + $0x8] sm:$0xff]
    %v56 = vld [vmem:[#allocation5 + $0x10] sm:$0xff]
    %v57 = vld [vmem:[#allocation5 + $0x18] sm:$0xff]
    %vm58 = vcmask 261120
    %v60 = vsel %vm58, %v46, 0
    %v63 = vsel %vm58, %v47, 0
    %v66 = vsel %vm58, %v48, 0
    %v69 = vsel %vm58, %v49, 0
    %v72 = vsel %vm58, %v50, 0
    %v75 = vsel %vm58, %v51, 0
    %v78 = vsel %vm58, %v52, 0
    %v81 = vsel %vm58, %v53, 0
    %v84 = vsel %vm58, %v54, 0
    %v87 = vsel %vm58, %v55, 0
    %v90 = vsel %vm58, %v56, 0
    %v93 = vsel %vm58, %v57, 0
    %95 = vmatprep.subr.mxu0 0.0
    %96 = vmatpush1.xpose.msra.mxu0 0.0
    %97 = vmatprep.subr.mxu0 0.0
    %98 = vmatpush1.xpose.msra.mxu0 0.0
    %99 = vmatprep.subr.mxu0 0.0
    %100 = vmatpush1.xpose.msra.mxu0 0.0
    %101 = vmatprep.subr.mxu0 0.0
    %102 = vmatpush1.xpose.msra.mxu0 0.0
    %103 = vmatprep.subr.mxu0 0.0
    %104 = vmatpush1.xpose.msra.mxu0 0.0
    %105 = vmatprep.subr.mxu0 0.0
    %106 = vmatpush1.xpose.msra.mxu0 0.0
    %107 = vmatprep.subr.mxu0 0.0
    %108 = vmatpush1.xpose.msra.mxu0 0.0
    %109 = vmatprep.subr.mxu0 0.0
    %110 = vmatpush1.xpose.msra.mxu0 0.0
    %111 = vmatprep.subr.mxu0 0.0
    %112 = vmatpush1.xpose.msra.mxu0 0.0
    %113 = vmatprep.subr.mxu0 0.0
    %114 = vmatpush1.xpose.msra.mxu0 0.0
    %115 = vmatprep.subr.mxu0 0.0
    %116 = vmatpush1.xpose.msra.mxu0 0.0
    %117 = vmatprep.subr.mxu0 0.0
    %118 = vmatpush1.xpose.msra.mxu0 0.0
    %119 = vmatprep.subr.mxu0 0.0
    %120 = vmatpush1.xpose.msra.mxu0 %v93
    %121 = vmatprep.subr.mxu0 0.0
    %122 = vmatpush1.xpose.msra.mxu0 %v90
    %123 = vmatprep.subr.mxu0 0.0
    %124 = vmatpush1.xpose.msra.mxu0 %v87
    %125 = vmatprep.subr.mxu0 0.0
    %126 = vmatpush1.xpose.msra.mxu0 %v84
    %127 = vmatprep.subr.mxu0 0.0
    %128 = vmatpush2.xpose.msra.mxu0 0.0
    %129 = vmatprep.subr.mxu0 0.0
    %130 = vmatpush2.xpose.msra.mxu0 0.0
    %131 = vmatprep.subr.mxu0 0.0
    %132 = vmatpush2.xpose.msra.mxu0 0.0
    %133 = vmatprep.subr.mxu0 0.0
    %134 = vmatpush2.xpose.msra.mxu0 0.0
    %135 = vmatprep.subr.mxu0 0.0
    %136 = vmatpush2.xpose.msra.mxu0 0.0
    %137 = vmatprep.subr.mxu0 0.0
    %138 = vmatpush2.xpose.msra.mxu0 0.0
    %139 = vmatprep.subr.mxu0 0.0
    %140 = vmatpush2.xpose.msra.mxu0 0.0
    %141 = vmatprep.subr.mxu0 0.0
    %142 = vmatpush2.xpose.msra.mxu0 0.0
    %143 = vmatprep.subr.mxu0 0.0
    %144 = vmatpush2.xpose.msra.mxu0 0.0
    %145 = vmatprep.subr.mxu0 0.0
    %146 = vmatpush2.xpose.msra.mxu0 0.0
    %147 = vmatprep.subr.mxu0 0.0
    %148 = vmatpush2.xpose.msra.mxu0 0.0
    %149 = vmatprep.subr.mxu0 0.0
    %150 = vmatpush2.xpose.msra.mxu0 0.0
    %151 = vmatprep.subr.mxu0 0.0
    %152 = vmatpush2.xpose.msra.mxu0 0.0
    %153 = vmatprep.subr.mxu0 0.0
    %154 = vmatpush2.xpose.msra.mxu0 0.0
    %155 = vmatprep.subr.mxu0 0.0
    %156 = vmatpush2.xpose.msra.mxu0 0.0
    %157 = vmatprep.subr.mxu0 0.0
    %158 = vmatpush2.xpose.msra.mxu0 0.0
    %159 = vmatprep.mubr.f32.mxu0 0.0
    %160 = vmatmul.mubr.f32.gmra.mxu0 %v60
    %v161 = vpop.f32.mrf.mxu0
    %v162 = vadd.f32 0.0, %v161
    %v163 = vpop.f32.mrf.mxu0
    %164 = vmatprep.mubr.f32.mxu0 0.0
    %165 = vmatmul.mubr.f32.gmra.mxu0 %v63
    %v166 = vpop.f32.mrf.mxu0
    %v167 = vadd.f32 0.0, %v166
    %v168 = vpop.f32.mrf.mxu0
    %169 = vmatprep.mubr.f32.mxu0 0.0
    %170 = vmatmul.mubr.f32.gmra.mxu0 %v66
    %v171 = vpop.f32.mrf.mxu0
    %v172 = vadd.f32 0.0, %v171
    %v173 = vpop.f32.mrf.mxu0
    %174 = vmatprep.mubr.f32.mxu0 0.0
    %175 = vmatmul.mubr.f32.gmra.mxu0 %v69
    %v176 = vpop.f32.mrf.mxu0
    %v177 = vadd.f32 0.0, %v176
    %v178 = vpop.f32.mrf.mxu0
    %179 = vmatprep.mubr.f32.mxu0 0.0
    %180 = vmatmul.mubr.f32.gmra.mxu0 %v72
    %v181 = vpop.f32.mrf.mxu0
    %v182 = vadd.f32 0.0, %v181
    %v183 = vpop.f32.mrf.mxu0
    %184 = vmatprep.mubr.f32.mxu0 0.0
    %185 = vmatmul.mubr.f32.gmra.mxu0 %v75
    %v186 = vpop.f32.mrf.mxu0
    %v187 = vadd.f32 0.0, %v186
    %v188 = vpop.f32.mrf.mxu0
    %189 = vmatprep.mubr.f32.mxu0 0.0
    %190 = vmatmul.mubr.f32.gmra.mxu0 %v78
    %v191 = vpop.f32.mrf.mxu0
    %v192 = vadd.f32 0.0, %v191
    %v193 = vpop.f32.mrf.mxu0
    %194 = vmatprep.mubr.f32.mxu0 0.0
    %195 = vmatmul.mubr.f32.gmra.mxu0 %v81
    %v196 = vpop.f32.mrf.mxu0
    %v197 = vadd.f32 0.0, %v196
    %v198 = vpop.f32.mrf.mxu0
    %199 = vdwg.mxu0
    %v200 = vtanh.pop %v162
    %v201 = vtanh.pop %v167
    %v202 = vtanh.pop %v172
    %v203 = vtanh.pop %v177
    %v204 = vtanh.pop %v182
    %v205 = vtanh.pop %v187
    %v206 = vtanh.pop %v192
    %v207 = vtanh.pop %v197
    %v208 = vld [vmem:[%s2] sm:$0x1]
    %v210 = vlaneseq
    %v211 = vshrl.u32 %v210, 7
    %v212 = vsub.s32 0, %v211
    %v213 = vrot.slane %v208, %v212
    %v215 = vmul.f32 %v200, %v213
    %v216 = vmul.f32 %v201, %v213
    %v217 = vmul.f32 %v202, %v213
    %v218 = vmul.f32 %v203, %v213
    %v219 = vmul.f32 %v204, %v213
    %v220 = vmul.f32 %v205, %v213
    %v221 = vmul.f32 %v206, %v213
    %v222 = vmul.f32 %v207, %v213
    %v223 = vsel %vm58, %v215, 0.0
    %224 = vadd.xlane.f32.xlu0 %v223
    %v225 = vpop.xlane.xlu0 %224
    %v226 = vsel %vm58, %v216, 0.0
    %227 = vadd.xlane.f32.xlu0 %v226
    %v228 = vpop.xlane.xlu0 %227
    %v229 = vsel %vm58, %v217, 0.0
    %230 = vadd.xlane.f32.xlu0 %v229
    %v231 = vpop.xlane.xlu0 %230
    %v232 = vsel %vm58, %v218, 0.0
    %233 = vadd.xlane.f32.xlu0 %v232
    %v234 = vpop.xlane.xlu0 %233
    %v235 = vsel %vm58, %v219, 0.0
    %236 = vadd.xlane.f32.xlu0 %v235
    %v237 = vpop.xlane.xlu0 %236
    %v238 = vsel %vm58, %v220, 0.0
    %239 = vadd.xlane.f32.xlu0 %v238
    %v240 = vpop.xlane.xlu0 %239
    %v241 = vsel %vm58, %v221, 0.0
    %242 = vadd.xlane.f32.xlu0 %v241
    %v243 = vpop.xlane.xlu0 %242
    %v244 = vsel %vm58, %v222, 0.0
    %245 = vadd.xlane.f32.xlu0 %v244
    %v246 = vpop.xlane.xlu0 %245
    %v255 = vlaneseq
    %v256 = vand.u32 %v255, 127
    %v257 = vlaneseq
    %v258 = vshrl.u32 %v257, 7
    %v259 = vsub.s32 %v256, %v258
    %v260 = vrot.slane %v225, %v259
    %v261 = vlaneseq
    %v262 = vshrl.u32 %v261, 7
    %v263 = vsub.s32 %v256, %v262
    %v264 = vrot.slane %v228, %v263
    %v265 = vlaneseq
    %v266 = vshrl.u32 %v265, 7
    %v267 = vsub.s32 %v256, %v266
    %v268 = vrot.slane %v231, %v267
    %v269 = vlaneseq
    %v270 = vshrl.u32 %v269, 7
    %v271 = vsub.s32 %v256, %v270
    %v272 = vrot.slane %v234, %v271
    %v273 = vlaneseq
    %v274 = vshrl.u32 %v273, 7
    %v275 = vsub.s32 %v256, %v274
    %v276 = vrot.slane %v237, %v275
    %v277 = vlaneseq
    %v278 = vshrl.u32 %v277, 7
    %v279 = vsub.s32 %v256, %v278
    %v280 = vrot.slane %v240, %v279
    %v281 = vlaneseq
    %v282 = vshrl.u32 %v281, 7
    %v283 = vsub.s32 %v256, %v282
    %v284 = vrot.slane %v243, %v283
    %v285 = vlaneseq
    %v286 = vshrl.u32 %v285, 7
    %v287 = vsub.s32 %v256, %v286
    %v288 = vrot.slane %v246, %v287
    %vm289 = vcmask 1041409
    %v290 = vsel %vm289, %v264, %v260
    %vm291 = vcmask 1042434
    %v292 = vsel %vm291, %v268, %v290
    %vm293 = vcmask 1043459
    %v294 = vsel %vm293, %v272, %v292
    %vm295 = vcmask 1044484
    %v296 = vsel %vm295, %v276, %v294
    %vm297 = vcmask 1045509
    %v298 = vsel %vm297, %v280, %v296
    %vm299 = vcmask 1046534
    %v300 = vsel %vm299, %v284, %v298
    %vm301 = vcmask 1047559
    %v302 = vsel %vm301, %v288, %v300
    %vm304 = vcmask 64512
    %v305 = vsel %vm304, %v302, -inf
    %306 = vmax.xlane.f32.xlu0 %v305
    %v307 = vpop.xlane.xlu0 %306
    %v309 = vlaneseq
    %v310 = vshrl.u32 %v309, 7
    %v311 = vsub.s32 0, %v310
    %v312 = vrot.slane %v307, %v311
    %v313 = vlaneseq
    %v314 = vshrl.u32 %v313, 7
    %v315 = vsub.s32 1, %v314
    %v316 = vrot.slane %v307, %v315
    %v317 = vlaneseq
    %v318 = vshrl.u32 %v317, 7
    %v319 = vsub.s32 2, %v318
    %v320 = vrot.slane %v307, %v319
    %v321 = vlaneseq
    %v322 = vshrl.u32 %v321, 7
    %v323 = vsub.s32 3, %v322
    %v324 = vrot.slane %v307, %v323
    %v325 = vlaneseq
    %v326 = vshrl.u32 %v325, 7
    %v327 = vsub.s32 4, %v326
    %v328 = vrot.slane %v307, %v327
    %v329 = vlaneseq
    %v330 = vshrl.u32 %v329, 7
    %v331 = vsub.s32 5, %v330
    %v332 = vrot.slane %v307, %v331
    %v333 = vlaneseq
    %v334 = vshrl.u32 %v333, 7
    %v335 = vsub.s32 6, %v334
    %v336 = vrot.slane %v307, %v335
    %v337 = vlaneseq
    %v338 = vshrl.u32 %v337, 7
    %v339 = vsub.s32 7, %v338
    %v340 = vrot.slane %v307, %v339
    %v349 = vsub.f32 %v225, %v312
    %v350 = vsub.f32 %v228, %v316
    %v351 = vsub.f32 %v231, %v320
    %v352 = vsub.f32 %v234, %v324
    %v353 = vsub.f32 %v237, %v328
    %v354 = vsub.f32 %v240, %v332
    %v355 = vsub.f32 %v243, %v336
    %v356 = vsub.f32 %v246, %v340
    %v357 = vmul.f32 %v349, 1.442695
    %v358 = vpow.pop %v357
    %v359 = vmul.f32 %v350, 1.442695
    %v360 = vpow.pop %v359
    %v361 = vmul.f32 %v351, 1.442695
    %v362 = vpow.pop %v361
    %v363 = vmul.f32 %v352, 1.442695
    %v364 = vpow.pop %v363
    %v365 = vmul.f32 %v353, 1.442695
    %v366 = vpow.pop %v365
    %v367 = vmul.f32 %v354, 1.442695
    %v368 = vpow.pop %v367
    %v369 = vmul.f32 %v355, 1.442695
    %v370 = vpow.pop %v369
    %v371 = vmul.f32 %v356, 1.442695
    %v372 = vpow.pop %v371
    %381 = vset.pattern.permute.xlu0 0
    %382 = vperm.xlu0 %381, %v358
    %v383 = vpop.permute.xlu0 %382
    %384 = vset.pattern.permute.xlu0 0
    %385 = vperm.xlu0 %384, %v360
    %v386 = vpop.permute.xlu0 %385
    %387 = vset.pattern.permute.xlu0 0
    %388 = vperm.xlu0 %387, %v362
    %v389 = vpop.permute.xlu0 %388
    %390 = vset.pattern.permute.xlu0 0
    %391 = vperm.xlu0 %390, %v364
    %v392 = vpop.permute.xlu0 %391
    %393 = vset.pattern.permute.xlu0 0
    %394 = vperm.xlu0 %393, %v366
    %v395 = vpop.permute.xlu0 %394
    %396 = vset.pattern.permute.xlu0 0
    %397 = vperm.xlu0 %396, %v368
    %v398 = vpop.permute.xlu0 %397
    %399 = vset.pattern.permute.xlu0 0
    %400 = vperm.xlu0 %399, %v370
    %v401 = vpop.permute.xlu0 %400
    %402 = vset.pattern.permute.xlu0 0
    %403 = vperm.xlu0 %402, %v372
    %v404 = vpop.permute.xlu0 %403
    %v405 = vlaneseq
    %v406 = vshrl.u32 %v405, 7
    %v407 = vsub.s32 %v256, %v406
    %v408 = vrot.slane %v383, %v407
    %v409 = vlaneseq
    %v410 = vshrl.u32 %v409, 7
    %v411 = vsub.s32 %v256, %v410
    %v412 = vrot.slane %v386, %v411
    %v413 = vlaneseq
    %v414 = vshrl.u32 %v413, 7
    %v415 = vsub.s32 %v256, %v414
    %v416 = vrot.slane %v389, %v415
    %v417 = vlaneseq
    %v418 = vshrl.u32 %v417, 7
    %v419 = vsub.s32 %v256, %v418
    %v420 = vrot.slane %v392, %v419
    %v421 = vlaneseq
    %v422 = vshrl.u32 %v421, 7
    %v423 = vsub.s32 %v256, %v422
    %v424 = vrot.slane %v395, %v423
    %v425 = vlaneseq
    %v426 = vshrl.u32 %v425, 7
    %v427 = vsub.s32 %v256, %v426
    %v428 = vrot.slane %v398, %v427
    %v429 = vlaneseq
    %v430 = vshrl.u32 %v429, 7
    %v431 = vsub.s32 %v256, %v430
    %v432 = vrot.slane %v401, %v431
    %v433 = vlaneseq
    %v434 = vshrl.u32 %v433, 7
    %v435 = vsub.s32 %v256, %v434
    %v436 = vrot.slane %v404, %v435
    %v437 = vsel %vm289, %v412, %v408
    %v438 = vsel %vm291, %v416, %v437
    %v439 = vsel %vm293, %v420, %v438
    %v440 = vsel %vm295, %v424, %v439
    %v441 = vsel %vm297, %v428, %v440
    %v442 = vsel %vm299, %v432, %v441
    %v443 = vsel %vm301, %v436, %v442
    %v445 = vsel %vm304, %v443, 0.0
    %446 = vadd.xlane.f32.xlu0 %v445
    %v447 = vpop.xlane.xlu0 %446
    %v449 = vlaneseq
    %v450 = vshrl.u32 %v449, 7
    %v451 = vsub.s32 0, %v450
    %v452 = vrot.slane %v447, %v451
    %v453 = vlaneseq
    %v454 = vshrl.u32 %v453, 7
    %v455 = vsub.s32 1, %v454
    %v456 = vrot.slane %v447, %v455
    %v457 = vlaneseq
    %v458 = vshrl.u32 %v457, 7
    %v459 = vsub.s32 2, %v458
    %v460 = vrot.slane %v447, %v459
    %v461 = vlaneseq
    %v462 = vshrl.u32 %v461, 7
    %v463 = vsub.s32 3, %v462
    %v464 = vrot.slane %v447, %v463
    %v465 = vlaneseq
    %v466 = vshrl.u32 %v465, 7
    %v467 = vsub.s32 4, %v466
    %v468 = vrot.slane %v447, %v467
    %v469 = vlaneseq
    %v470 = vshrl.u32 %v469, 7
    %v471 = vsub.s32 5, %v470
    %v472 = vrot.slane %v447, %v471
    %v473 = vlaneseq
    %v474 = vshrl.u32 %v473, 7
    %v475 = vsub.s32 6, %v474
    %v476 = vrot.slane %v447, %v475
    %v477 = vlaneseq
    %v478 = vshrl.u32 %v477, 7
    %v479 = vsub.s32 7, %v478
    %v480 = vrot.slane %v447, %v479
    %v489 = vrcp.pop %v452
    %v490 = vmul.f32 %v358, %v489
    %v491 = vrcp.pop %v456
    %v492 = vmul.f32 %v360, %v491
    %v493 = vrcp.pop %v460
    %v494 = vmul.f32 %v362, %v493
    %v495 = vrcp.pop %v464
    %v496 = vmul.f32 %v364, %v495
    %v497 = vrcp.pop %v468
    %v498 = vmul.f32 %v366, %v497
    %v499 = vrcp.pop %v472
    %v500 = vmul.f32 %v368, %v499
    %v501 = vrcp.pop %v476
    %v502 = vmul.f32 %v370, %v501
    %v503 = vrcp.pop %v480
    %v504 = vmul.f32 %v372, %v503
    %506 = vset.pattern.permute.xlu0 0
    %507 = vperm.xlu0 %506, %v490
    %v508 = vpop.permute.xlu0 %507
    %v509 = vlaneseq
    %v510 = vshrl.u32 %v509, 7
    %v511 = vsub.s32 %v256, %v510
    %v512 = vrot.slane %v508, %v511
    %v513 = vsel %vm304, %v512, 0
    %515 = vmatprep.subr.mxu0 0.0
    %516 = vmatpush1.msra.mxu0 0.0
    %517 = vmatprep.subr.mxu0 0.0
    %518 = vmatpush1.msra.mxu0 0.0
    %519 = vmatprep.subr.mxu0 0.0
    %520 = vmatpush1.msra.mxu0 0.0
    %521 = vmatprep.subr.mxu0 0.0
    %522 = vmatpush1.msra.mxu0 0.0
    %523 = vmatprep.subr.mxu0 0.0
    %524 = vmatpush1.msra.mxu0 0.0
    %525 = vmatprep.subr.mxu0 0.0
    %526 = vmatpush1.msra.mxu0 0.0
    %527 = vmatprep.subr.mxu0 0.0
    %528 = vmatpush1.msra.mxu0 0.0
    %529 = vmatprep.subr.mxu0 0.0
    %530 = vmatpush1.msra.mxu0 0.0
    %531 = vmatprep.subr.mxu0 0.0
    %532 = vmatpush1.msra.mxu0 0.0
    %533 = vmatprep.subr.mxu0 0.0
    %534 = vmatpush1.msra.mxu0 0.0
    %535 = vmatprep.subr.mxu0 0.0
    %536 = vmatpush1.msra.mxu0 0.0
    %537 = vmatprep.subr.mxu0 0.0
    %538 = vmatpush1.msra.mxu0 0.0
    %539 = vmatprep.subr.mxu0 0.0
    %540 = vmatpush1.msra.mxu0 0.0
    %541 = vmatprep.subr.mxu0 0.0
    %542 = vmatpush1.msra.mxu0 0.0
    %543 = vmatprep.subr.mxu0 0.0
    %544 = vmatpush1.msra.mxu0 0.0
    %545 = vmatprep.subr.mxu0 0.0
    %546 = vmatpush1.msra.mxu0 %v46
    %547 = vmatprep.subr.mxu0 0.0
    %548 = vmatpush2.msra.mxu0 0.0
    %549 = vmatprep.subr.mxu0 0.0
    %550 = vmatpush2.msra.mxu0 0.0
    %551 = vmatprep.subr.mxu0 0.0
    %552 = vmatpush2.msra.mxu0 0.0
    %553 = vmatprep.subr.mxu0 0.0
    %554 = vmatpush2.msra.mxu0 0.0
    %555 = vmatprep.subr.mxu0 0.0
    %556 = vmatpush2.msra.mxu0 0.0
    %557 = vmatprep.subr.mxu0 0.0
    %558 = vmatpush2.msra.mxu0 0.0
    %559 = vmatprep.subr.mxu0 0.0
    %560 = vmatpush2.msra.mxu0 0.0
    %561 = vmatprep.subr.mxu0 0.0
    %562 = vmatpush2.msra.mxu0 0.0
    %563 = vmatprep.subr.mxu0 0.0
    %564 = vmatpush2.msra.mxu0 0.0
    %565 = vmatprep.subr.mxu0 0.0
    %566 = vmatpush2.msra.mxu0 0.0
    %567 = vmatprep.subr.mxu0 0.0
    %568 = vmatpush2.msra.mxu0 0.0
    %569 = vmatprep.subr.mxu0 0.0
    %570 = vmatpush2.msra.mxu0 0.0
    %571 = vmatprep.subr.mxu0 0.0
    %572 = vmatpush2.msra.mxu0 0.0
    %573 = vmatprep.subr.mxu0 0.0
    %574 = vmatpush2.msra.mxu0 0.0
    %575 = vmatprep.subr.mxu0 0.0
    %576 = vmatpush2.msra.mxu0 0.0
    %577 = vmatprep.subr.mxu0 0.0
    %578 = vmatpush2.msra.mxu0 0.0
    %579 = vmatprep.mubr.f32.mxu0 0.0
    %580 = vmatmul.mubr.f32.gmra.mxu0 %v513
    %v581 = vpop.f32.mrf.mxu0
    %v582 = vadd.f32 0.0, %v581
    %v583 = vpop.f32.mrf.mxu0
    %584 = vdwg.mxu0
    %586 = vset.pattern.permute.xlu0 0
    %587 = vperm.xlu0 %586, %v492
    %v588 = vpop.permute.xlu0 %587
    %v589 = vlaneseq
    %v590 = vshrl.u32 %v589, 7
    %v591 = vsub.s32 %v256, %v590
    %v592 = vrot.slane %v588, %v591
    %v593 = vsel %vm304, %v592, 0
    %595 = vmatprep.subr.mxu0 0.0
    %596 = vmatpush1.msra.mxu0 0.0
    %597 = vmatprep.subr.mxu0 0.0
    %598 = vmatpush1.msra.mxu0 0.0
    %599 = vmatprep.subr.mxu0 0.0
    %600 = vmatpush1.msra.mxu0 0.0
    %601 = vmatprep.subr.mxu0 0.0
    %602 = vmatpush1.msra.mxu0 0.0
    %603 = vmatprep.subr.mxu0 0.0
    %604 = vmatpush1.msra.mxu0 0.0
    %605 = vmatprep.subr.mxu0 0.0
    %606 = vmatpush1.msra.mxu0 0.0
    %607 = vmatprep.subr.mxu0 0.0
    %608 = vmatpush1.msra.mxu0 0.0
    %609 = vmatprep.subr.mxu0 0.0
    %610 = vmatpush1.msra.mxu0 0.0
    %611 = vmatprep.subr.mxu0 0.0
    %612 = vmatpush1.msra.mxu0 0.0
    %613 = vmatprep.subr.mxu0 0.0
    %614 = vmatpush1.msra.mxu0 0.0
    %615 = vmatprep.subr.mxu0 0.0
    %616 = vmatpush1.msra.mxu0 0.0
    %617 = vmatprep.subr.mxu0 0.0
    %618 = vmatpush1.msra.mxu0 0.0
    %619 = vmatprep.subr.mxu0 0.0
    %620 = vmatpush1.msra.mxu0 0.0
    %621 = vmatprep.subr.mxu0 0.0
    %622 = vmatpush1.msra.mxu0 0.0
    %623 = vmatprep.subr.mxu0 0.0
    %624 = vmatpush1.msra.mxu0 0.0
    %625 = vmatprep.subr.mxu0 0.0
    %626 = vmatpush1.msra.mxu0 %v47
    %627 = vmatprep.subr.mxu0 0.0
    %628 = vmatpush2.msra.mxu0 0.0
    %629 = vmatprep.subr.mxu0 0.0
    %630 = vmatpush2.msra.mxu0 0.0
    %631 = vmatprep.subr.mxu0 0.0
    %632 = vmatpush2.msra.mxu0 0.0
    %633 = vmatprep.subr.mxu0 0.0
    %634 = vmatpush2.msra.mxu0 0.0
    %635 = vmatprep.subr.mxu0 0.0
    %636 = vmatpush2.msra.mxu0 0.0
    %637 = vmatprep.subr.mxu0 0.0
    %638 = vmatpush2.msra.mxu0 0.0
    %639 = vmatprep.subr.mxu0 0.0
    %640 = vmatpush2.msra.mxu0 0.0
    %641 = vmatprep.subr.mxu0 0.0
    %642 = vmatpush2.msra.mxu0 0.0
    %643 = vmatprep.subr.mxu0 0.0
    %644 = vmatpush2.msra.mxu0 0.0
    %645 = vmatprep.subr.mxu0 0.0
    %646 = vmatpush2.msra.mxu0 0.0
    %647 = vmatprep.subr.mxu0 0.0
    %648 = vmatpush2.msra.mxu0 0.0
    %649 = vmatprep.subr.mxu0 0.0
    %650 = vmatpush2.msra.mxu0 0.0
    %651 = vmatprep.subr.mxu0 0.0
    %652 = vmatpush2.msra.mxu0 0.0
    %653 = vmatprep.subr.mxu0 0.0
    %654 = vmatpush2.msra.mxu0 0.0
    %655 = vmatprep.subr.mxu0 0.0
    %656 = vmatpush2.msra.mxu0 0.0
    %657 = vmatprep.subr.mxu0 0.0
    %658 = vmatpush2.msra.mxu0 0.0
    %659 = vmatprep.mubr.f32.mxu0 0.0
    %660 = vmatmul.mubr.f32.gmra.mxu0 %v593
    %v661 = vpop.f32.mrf.mxu0
    %v662 = vadd.f32 0.0, %v661
    %v663 = vpop.f32.mrf.mxu0
    %664 = vdwg.mxu0
    %666 = vset.pattern.permute.xlu0 0
    %667 = vperm.xlu0 %666, %v494
    %v668 = vpop.permute.xlu0 %667
    %v669 = vlaneseq
    %v670 = vshrl.u32 %v669, 7
    %v671 = vsub.s32 %v256, %v670
    %v672 = vrot.slane %v668, %v671
    %v673 = vsel %vm304, %v672, 0
    %675 = vmatprep.subr.mxu0 0.0
    %676 = vmatpush1.msra.mxu0 0.0
    %677 = vmatprep.subr.mxu0 0.0
    %678 = vmatpush1.msra.mxu0 0.0
    %679 = vmatprep.subr.mxu0 0.0
    %680 = vmatpush1.msra.mxu0 0.0
    %681 = vmatprep.subr.mxu0 0.0
    %682 = vmatpush1.msra.mxu0 0.0
    %683 = vmatprep.subr.mxu0 0.0
    %684 = vmatpush1.msra.mxu0 0.0
    %685 = vmatprep.subr.mxu0 0.0
    %686 = vmatpush1.msra.mxu0 0.0
    %687 = vmatprep.subr.mxu0 0.0
    %688 = vmatpush1.msra.mxu0 0.0
    %689 = vmatprep.subr.mxu0 0.0
    %690 = vmatpush1.msra.mxu0 0.0
    %691 = vmatprep.subr.mxu0 0.0
    %692 = vmatpush1.msra.mxu0 0.0
    %693 = vmatprep.subr.mxu0 0.0
    %694 = vmatpush1.msra.mxu0 0.0
    %695 = vmatprep.subr.mxu0 0.0
    %696 = vmatpush1.msra.mxu0 0.0
    %697 = vmatprep.subr.mxu0 0.0
    %698 = vmatpush1.msra.mxu0 0.0
    %699 = vmatprep.subr.mxu0 0.0
    %700 = vmatpush1.msra.mxu0 0.0
    %701 = vmatprep.subr.mxu0 0.0
    %702 = vmatpush1.msra.mxu0 0.0
    %703 = vmatprep.subr.mxu0 0.0
    %704 = vmatpush1.msra.mxu0 0.0
    %705 = vmatprep.subr.mxu0 0.0
    %706 = vmatpush1.msra.mxu0 %v48
    %707 = vmatprep.subr.mxu0 0.0
    %708 = vmatpush2.msra.mxu0 0.0
    %709 = vmatprep.subr.mxu0 0.0
    %710 = vmatpush2.msra.mxu0 0.0
    %711 = vmatprep.subr.mxu0 0.0
    %712 = vmatpush2.msra.mxu0 0.0
    %713 = vmatprep.subr.mxu0 0.0
    %714 = vmatpush2.msra.mxu0 0.0
    %715 = vmatprep.subr.mxu0 0.0
    %716 = vmatpush2.msra.mxu0 0.0
    %717 = vmatprep.subr.mxu0 0.0
    %718 = vmatpush2.msra.mxu0 0.0
    %719 = vmatprep.subr.mxu0 0.0
    %720 = vmatpush2.msra.mxu0 0.0
    %721 = vmatprep.subr.mxu0 0.0
    %722 = vmatpush2.msra.mxu0 0.0
    %723 = vmatprep.subr.mxu0 0.0
    %724 = vmatpush2.msra.mxu0 0.0
    %725 = vmatprep.subr.mxu0 0.0
    %726 = vmatpush2.msra.mxu0 0.0
    %727 = vmatprep.subr.mxu0 0.0
    %728 = vmatpush2.msra.mxu0 0.0
    %729 = vmatprep.subr.mxu0 0.0
    %730 = vmatpush2.msra.mxu0 0.0
    %731 = vmatprep.subr.mxu0 0.0
    %732 = vmatpush2.msra.mxu0 0.0
    %733 = vmatprep.subr.mxu0 0.0
    %734 = vmatpush2.msra.mxu0 0.0
    %735 = vmatprep.subr.mxu0 0.0
    %736 = vmatpush2.msra.mxu0 0.0
    %737 = vmatprep.subr.mxu0 0.0
    %738 = vmatpush2.msra.mxu0 0.0
    %739 = vmatprep.mubr.f32.mxu0 0.0
    %740 = vmatmul.mubr.f32.gmra.mxu0 %v673
    %v741 = vpop.f32.mrf.mxu0
    %v742 = vadd.f32 0.0, %v741
    %v743 = vpop.f32.mrf.mxu0
    %744 = vdwg.mxu0
    %746 = vset.pattern.permute.xlu0 0
    %747 = vperm.xlu0 %746, %v496
    %v748 = vpop.permute.xlu0 %747
    %v749 = vlaneseq
    %v750 = vshrl.u32 %v749, 7
    %v751 = vsub.s32 %v256, %v750
    %v752 = vrot.slane %v748, %v751
    %v753 = vsel %vm304, %v752, 0
    %755 = vmatprep.subr.mxu0 0.0
    %756 = vmatpush1.msra.mxu0 0.0
    %757 = vmatprep.subr.mxu0 0.0
    %758 = vmatpush1.msra.mxu0 0.0
    %759 = vmatprep.subr.mxu0 0.0
    %760 = vmatpush1.msra.mxu0 0.0
    %761 = vmatprep.subr.mxu0 0.0
    %762 = vmatpush1.msra.mxu0 0.0
    %763 = vmatprep.subr.mxu0 0.0
    %764 = vmatpush1.msra.mxu0 0.0
    %765 = vmatprep.subr.mxu0 0.0
    %766 = vmatpush1.msra.mxu0 0.0
    %767 = vmatprep.subr.mxu0 0.0
    %768 = vmatpush1.msra.mxu0 0.0
    %769 = vmatprep.subr.mxu0 0.0
    %770 = vmatpush1.msra.mxu0 0.0
    %771 = vmatprep.subr.mxu0 0.0
    %772 = vmatpush1.msra.mxu0 0.0
    %773 = vmatprep.subr.mxu0 0.0
    %774 = vmatpush1.msra.mxu0 0.0
    %775 = vmatprep.subr.mxu0 0.0
    %776 = vmatpush1.msra.mxu0 0.0
    %777 = vmatprep.subr.mxu0 0.0
    %778 = vmatpush1.msra.mxu0 0.0
    %779 = vmatprep.subr.mxu0 0.0
    %780 = vmatpush1.msra.mxu0 0.0
    %781 = vmatprep.subr.mxu0 0.0
    %782 = vmatpush1.msra.mxu0 0.0
    %783 = vmatprep.subr.mxu0 0.0
    %784 = vmatpush1.msra.mxu0 0.0
    %785 = vmatprep.subr.mxu0 0.0
    %786 = vmatpush1.msra.mxu0 %v49
    %787 = vmatprep.subr.mxu0 0.0
    %788 = vmatpush2.msra.mxu0 0.0
    %789 = vmatprep.subr.mxu0 0.0
    %790 = vmatpush2.msra.mxu0 0.0
    %791 = vmatprep.subr.mxu0 0.0
    %792 = vmatpush2.msra.mxu0 0.0
    %793 = vmatprep.subr.mxu0 0.0
    %794 = vmatpush2.msra.mxu0 0.0
    %795 = vmatprep.subr.mxu0 0.0
    %796 = vmatpush2.msra.mxu0 0.0
    %797 = vmatprep.subr.mxu0 0.0
    %798 = vmatpush2.msra.mxu0 0.0
    %799 = vmatprep.subr.mxu0 0.0
    %800 = vmatpush2.msra.mxu0 0.0
    %801 = vmatprep.subr.mxu0 0.0
    %802 = vmatpush2.msra.mxu0 0.0
    %803 = vmatprep.subr.mxu0 0.0
    %804 = vmatpush2.msra.mxu0 0.0
    %805 = vmatprep.subr.mxu0 0.0
    %806 = vmatpush2.msra.mxu0 0.0
    %807 = vmatprep.subr.mxu0 0.0
    %808 = vmatpush2.msra.mxu0 0.0
    %809 = vmatprep.subr.mxu0 0.0
    %810 = vmatpush2.msra.mxu0 0.0
    %811 = vmatprep.subr.mxu0 0.0
    %812 = vmatpush2.msra.mxu0 0.0
    %813 = vmatprep.subr.mxu0 0.0
    %814 = vmatpush2.msra.mxu0 0.0
    %815 = vmatprep.subr.mxu0 0.0
    %816 = vmatpush2.msra.mxu0 0.0
    %817 = vmatprep.subr.mxu0 0.0
    %818 = vmatpush2.msra.mxu0 0.0
    %819 = vmatprep.mubr.f32.mxu0 0.0
    %820 = vmatmul.mubr.f32.gmra.mxu0 %v753
    %v821 = vpop.f32.mrf.mxu0
    %v822 = vadd.f32 0.0, %v821
    %v823 = vpop.f32.mrf.mxu0
    %824 = vdwg.mxu0
    %826 = vset.pattern.permute.xlu0 0
    %827 = vperm.xlu0 %826, %v498
    %v828 = vpop.permute.xlu0 %827
    %v829 = vlaneseq
    %v830 = vshrl.u32 %v829, 7
    %v831 = vsub.s32 %v256, %v830
    %v832 = vrot.slane %v828, %v831
    %v833 = vsel %vm304, %v832, 0
    %835 = vmatprep.subr.mxu0 0.0
    %836 = vmatpush1.msra.mxu0 0.0
    %837 = vmatprep.subr.mxu0 0.0
    %838 = vmatpush1.msra.mxu0 0.0
    %839 = vmatprep.subr.mxu0 0.0
    %840 = vmatpush1.msra.mxu0 0.0
    %841 = vmatprep.subr.mxu0 0.0
    %842 = vmatpush1.msra.mxu0 0.0
    %843 = vmatprep.subr.mxu0 0.0
    %844 = vmatpush1.msra.mxu0 0.0
    %845 = vmatprep.subr.mxu0 0.0
    %846 = vmatpush1.msra.mxu0 0.0
    %847 = vmatprep.subr.mxu0 0.0
    %848 = vmatpush1.msra.mxu0 0.0
    %849 = vmatprep.subr.mxu0 0.0
    %850 = vmatpush1.msra.mxu0 0.0
    %851 = vmatprep.subr.mxu0 0.0
    %852 = vmatpush1.msra.mxu0 0.0
    %853 = vmatprep.subr.mxu0 0.0
    %854 = vmatpush1.msra.mxu0 0.0
    %855 = vmatprep.subr.mxu0 0.0
    %856 = vmatpush1.msra.mxu0 0.0
    %857 = vmatprep.subr.mxu0 0.0
    %858 = vmatpush1.msra.mxu0 0.0
    %859 = vmatprep.subr.mxu0 0.0
    %860 = vmatpush1.msra.mxu0 0.0
    %861 = vmatprep.subr.mxu0 0.0
    %862 = vmatpush1.msra.mxu0 0.0
    %863 = vmatprep.subr.mxu0 0.0
    %864 = vmatpush1.msra.mxu0 0.0
    %865 = vmatprep.subr.mxu0 0.0
    %866 = vmatpush1.msra.mxu0 %v50
    %867 = vmatprep.subr.mxu0 0.0
    %868 = vmatpush2.msra.mxu0 0.0
    %869 = vmatprep.subr.mxu0 0.0
    %870 = vmatpush2.msra.mxu0 0.0
    %871 = vmatprep.subr.mxu0 0.0
    %872 = vmatpush2.msra.mxu0 0.0
    %873 = vmatprep.subr.mxu0 0.0
    %874 = vmatpush2.msra.mxu0 0.0
    %875 = vmatprep.subr.mxu0 0.0
    %876 = vmatpush2.msra.mxu0 0.0
    %877 = vmatprep.subr.mxu0 0.0
    %878 = vmatpush2.msra.mxu0 0.0
    %879 = vmatprep.subr.mxu0 0.0
    %880 = vmatpush2.msra.mxu0 0.0
    %881 = vmatprep.subr.mxu0 0.0
    %882 = vmatpush2.msra.mxu0 0.0
    %883 = vmatprep.subr.mxu0 0.0
    %884 = vmatpush2.msra.mxu0 0.0
    %885 = vmatprep.subr.mxu0 0.0
    %886 = vmatpush2.msra.mxu0 0.0
    %887 = vmatprep.subr.mxu0 0.0
    %888 = vmatpush2.msra.mxu0 0.0
    %889 = vmatprep.subr.mxu0 0.0
    %890 = vmatpush2.msra.mxu0 0.0
    %891 = vmatprep.subr.mxu0 0.0
    %892 = vmatpush2.msra.mxu0 0.0
    %893 = vmatprep.subr.mxu0 0.0
    %894 = vmatpush2.msra.mxu0 0.0
    %895 = vmatprep.subr.mxu0 0.0
    %896 = vmatpush2.msra.mxu0 0.0
    %897 = vmatprep.subr.mxu0 0.0
    %898 = vmatpush2.msra.mxu0 0.0
    %899 = vmatprep.mubr.f32.mxu0 0.0
    %900 = vmatmul.mubr.f32.gmra.mxu0 %v833
    %v901 = vpop.f32.mrf.mxu0
    %v902 = vadd.f32 0.0, %v901
    %v903 = vpop.f32.mrf.mxu0
    %904 = vdwg.mxu0
    %906 = vset.pattern.permute.xlu0 0
    %907 = vperm.xlu0 %906, %v500
    %v908 = vpop.permute.xlu0 %907
    %v909 = vlaneseq
    %v910 = vshrl.u32 %v909, 7
    %v911 = vsub.s32 %v256, %v910
    %v912 = vrot.slane %v908, %v911
    %v913 = vsel %vm304, %v912, 0
    %915 = vmatprep.subr.mxu0 0.0
    %916 = vmatpush1.msra.mxu0 0.0
    %917 = vmatprep.subr.mxu0 0.0
    %918 = vmatpush1.msra.mxu0 0.0
    %919 = vmatprep.subr.mxu0 0.0
    %920 = vmatpush1.msra.mxu0 0.0
    %921 = vmatprep.subr.mxu0 0.0
    %922 = vmatpush1.msra.mxu0 0.0
    %923 = vmatprep.subr.mxu0 0.0
    %924 = vmatpush1.msra.mxu0 0.0
    %925 = vmatprep.subr.mxu0 0.0
    %926 = vmatpush1.msra.mxu0 0.0
    %927 = vmatprep.subr.mxu0 0.0
    %928 = vmatpush1.msra.mxu0 0.0
    %929 = vmatprep.subr.mxu0 0.0
    %930 = vmatpush1.msra.mxu0 0.0
    %931 = vmatprep.subr.mxu0 0.0
    %932 = vmatpush1.msra.mxu0 0.0
    %933 = vmatprep.subr.mxu0 0.0
    %934 = vmatpush1.msra.mxu0 0.0
    %935 = vmatprep.subr.mxu0 0.0
    %936 = vmatpush1.msra.mxu0 0.0
    %937 = vmatprep.subr.mxu0 0.0
    %938 = vmatpush1.msra.mxu0 0.0
    %939 = vmatprep.subr.mxu0 0.0
    %940 = vmatpush1.msra.mxu0 0.0
    %941 = vmatprep.subr.mxu0 0.0
    %942 = vmatpush1.msra.mxu0 0.0
    %943 = vmatprep.subr.mxu0 0.0
    %944 = vmatpush1.msra.mxu0 0.0
    %945 = vmatprep.subr.mxu0 0.0
    %946 = vmatpush1.msra.mxu0 %v51
    %947 = vmatprep.subr.mxu0 0.0
    %948 = vmatpush2.msra.mxu0 0.0
    %949 = vmatprep.subr.mxu0 0.0
    %950 = vmatpush2.msra.mxu0 0.0
    %951 = vmatprep.subr.mxu0 0.0
    %952 = vmatpush2.msra.mxu0 0.0
    %953 = vmatprep.subr.mxu0 0.0
    %954 = vmatpush2.msra.mxu0 0.0
    %955 = vmatprep.subr.mxu0 0.0
    %956 = vmatpush2.msra.mxu0 0.0
    %957 = vmatprep.subr.mxu0 0.0
    %958 = vmatpush2.msra.mxu0 0.0
    %959 = vmatprep.subr.mxu0 0.0
    %960 = vmatpush2.msra.mxu0 0.0
    %961 = vmatprep.subr.mxu0 0.0
    %962 = vmatpush2.msra.mxu0 0.0
    %963 = vmatprep.subr.mxu0 0.0
    %964 = vmatpush2.msra.mxu0 0.0
    %965 = vmatprep.subr.mxu0 0.0
    %966 = vmatpush2.msra.mxu0 0.0
    %967 = vmatprep.subr.mxu0 0.0
    %968 = vmatpush2.msra.mxu0 0.0
    %969 = vmatprep.subr.mxu0 0.0
    %970 = vmatpush2.msra.mxu0 0.0
    %971 = vmatprep.subr.mxu0 0.0
    %972 = vmatpush2.msra.mxu0 0.0
    %973 = vmatprep.subr.mxu0 0.0
    %974 = vmatpush2.msra.mxu0 0.0
    %975 = vmatprep.subr.mxu0 0.0
    %976 = vmatpush2.msra.mxu0 0.0
    %977 = vmatprep.subr.mxu0 0.0
    %978 = vmatpush2.msra.mxu0 0.0
    %979 = vmatprep.mubr.f32.mxu0 0.0
    %980 = vmatmul.mubr.f32.gmra.mxu0 %v913
    %v981 = vpop.f32.mrf.mxu0
    %v982 = vadd.f32 0.0, %v981
    %v983 = vpop.f32.mrf.mxu0
    %984 = vdwg.mxu0
    %986 = vset.pattern.permute.xlu0 0
    %987 = vperm.xlu0 %986, %v502
    %v988 = vpop.permute.xlu0 %987
    %v989 = vlaneseq
    %v990 = vshrl.u32 %v989, 7
    %v991 = vsub.s32 %v256, %v990
    %v992 = vrot.slane %v988, %v991
    %v993 = vsel %vm304, %v992, 0
    %995 = vmatprep.subr.mxu0 0.0
    %996 = vmatpush1.msra.mxu0 0.0
    %997 = vmatprep.subr.mxu0 0.0
    %998 = vmatpush1.msra.mxu0 0.0
    %999 = vmatprep.subr.mxu0 0.0
    %1000 = vmatpush1.msra.mxu0 0.0
    %1001 = vmatprep.subr.mxu0 0.0
    %1002 = vmatpush1.msra.mxu0 0.0
    %1003 = vmatprep.subr.mxu0 0.0
    %1004 = vmatpush1.msra.mxu0 0.0
    %1005 = vmatprep.subr.mxu0 0.0
    %1006 = vmatpush1.msra.mxu0 0.0
    %1007 = vmatprep.subr.mxu0 0.0
    %1008 = vmatpush1.msra.mxu0 0.0
    %1009 = vmatprep.subr.mxu0 0.0
    %1010 = vmatpush1.msra.mxu0 0.0
    %1011 = vmatprep.subr.mxu0 0.0
    %1012 = vmatpush1.msra.mxu0 0.0
    %1013 = vmatprep.subr.mxu0 0.0
    %1014 = vmatpush1.msra.mxu0 0.0
    %1015 = vmatprep.subr.mxu0 0.0
    %1016 = vmatpush1.msra.mxu0 0.0
    %1017 = vmatprep.subr.mxu0 0.0
    %1018 = vmatpush1.msra.mxu0 0.0
    %1019 = vmatprep.subr.mxu0 0.0
    %1020 = vmatpush1.msra.mxu0 0.0
    %1021 = vmatprep.subr.mxu0 0.0
    %1022 = vmatpush1.msra.mxu0 0.0
    %1023 = vmatprep.subr.mxu0 0.0
    %1024 = vmatpush1.msra.mxu0 0.0
    %1025 = vmatprep.subr.mxu0 0.0
    %1026 = vmatpush1.msra.mxu0 %v52
    %1027 = vmatprep.subr.mxu0 0.0
    %1028 = vmatpush2.msra.mxu0 0.0
    %1029 = vmatprep.subr.mxu0 0.0
    %1030 = vmatpush2.msra.mxu0 0.0
    %1031 = vmatprep.subr.mxu0 0.0
    %1032 = vmatpush2.msra.mxu0 0.0
    %1033 = vmatprep.subr.mxu0 0.0
    %1034 = vmatpush2.msra.mxu0 0.0
    %1035 = vmatprep.subr.mxu0 0.0
    %1036 = vmatpush2.msra.mxu0 0.0
    %1037 = vmatprep.subr.mxu0 0.0
    %1038 = vmatpush2.msra.mxu0 0.0
    %1039 = vmatprep.subr.mxu0 0.0
    %1040 = vmatpush2.msra.mxu0 0.0
    %1041 = vmatprep.subr.mxu0 0.0
    %1042 = vmatpush2.msra.mxu0 0.0
    %1043 = vmatprep.subr.mxu0 0.0
    %1044 = vmatpush2.msra.mxu0 0.0
    %1045 = vmatprep.subr.mxu0 0.0
    %1046 = vmatpush2.msra.mxu0 0.0
    %1047 = vmatprep.subr.mxu0 0.0
    %1048 = vmatpush2.msra.mxu0 0.0
    %1049 = vmatprep.subr.mxu0 0.0
    %1050 = vmatpush2.msra.mxu0 0.0
    %1051 = vmatprep.subr.mxu0 0.0
    %1052 = vmatpush2.msra.mxu0 0.0
    %1053 = vmatprep.subr.mxu0 0.0
    %1054 = vmatpush2.msra.mxu0 0.0
    %1055 = vmatprep.subr.mxu0 0.0
    %1056 = vmatpush2.msra.mxu0 0.0
    %1057 = vmatprep.subr.mxu0 0.0
    %1058 = vmatpush2.msra.mxu0 0.0
    %1059 = vmatprep.mubr.f32.mxu0 0.0
    %1060 = vmatmul.mubr.f32.gmra.mxu0 %v993
    %v1061 = vpop.f32.mrf.mxu0
    %v1062 = vadd.f32 0.0, %v1061
    %v1063 = vpop.f32.mrf.mxu0
    %1064 = vdwg.mxu0
    %1066 = vset.pattern.permute.xlu0 0
    %1067 = vperm.xlu0 %1066, %v504
    %v1068 = vpop.permute.xlu0 %1067
    %v1069 = vlaneseq
    %v1070 = vshrl.u32 %v1069, 7
    %v1071 = vsub.s32 %v256, %v1070
    %v1072 = vrot.slane %v1068, %v1071
    %v1073 = vsel %vm304, %v1072, 0
    %1075 = vmatprep.subr.mxu0 0.0
    %1076 = vmatpush1.msra.mxu0 0.0
    %1077 = vmatprep.subr.mxu0 0.0
    %1078 = vmatpush1.msra.mxu0 0.0
    %1079 = vmatprep.subr.mxu0 0.0
    %1080 = vmatpush1.msra.mxu0 0.0
    %1081 = vmatprep.subr.mxu0 0.0
    %1082 = vmatpush1.msra.mxu0 0.0
    %1083 = vmatprep.subr.mxu0 0.0
    %1084 = vmatpush1.msra.mxu0 0.0
    %1085 = vmatprep.subr.mxu0 0.0
    %1086 = vmatpush1.msra.mxu0 0.0
    %1087 = vmatprep.subr.mxu0 0.0
    %1088 = vmatpush1.msra.mxu0 0.0
    %1089 = vmatprep.subr.mxu0 0.0
    %1090 = vmatpush1.msra.mxu0 0.0
    %1091 = vmatprep.subr.mxu0 0.0
    %1092 = vmatpush1.msra.mxu0 0.0
    %1093 = vmatprep.subr.mxu0 0.0
    %1094 = vmatpush1.msra.mxu0 0.0
    %1095 = vmatprep.subr.mxu0 0.0
    %1096 = vmatpush1.msra.mxu0 0.0
    %1097 = vmatprep.subr.mxu0 0.0
    %1098 = vmatpush1.msra.mxu0 0.0
    %1099 = vmatprep.subr.mxu0 0.0
    %1100 = vmatpush1.msra.mxu0 0.0
    %1101 = vmatprep.subr.mxu0 0.0
    %1102 = vmatpush1.msra.mxu0 0.0
    %1103 = vmatprep.subr.mxu0 0.0
    %1104 = vmatpush1.msra.mxu0 0.0
    %1105 = vmatprep.subr.mxu0 0.0
    %1106 = vmatpush1.msra.mxu0 %v53
    %1107 = vmatprep.subr.mxu0 0.0
    %1108 = vmatpush2.msra.mxu0 0.0
    %1109 = vmatprep.subr.mxu0 0.0
    %1110 = vmatpush2.msra.mxu0 0.0
    %1111 = vmatprep.subr.mxu0 0.0
    %1112 = vmatpush2.msra.mxu0 0.0
    %1113 = vmatprep.subr.mxu0 0.0
    %1114 = vmatpush2.msra.mxu0 0.0
    %1115 = vmatprep.subr.mxu0 0.0
    %1116 = vmatpush2.msra.mxu0 0.0
    %1117 = vmatprep.subr.mxu0 0.0
    %1118 = vmatpush2.msra.mxu0 0.0
    %1119 = vmatprep.subr.mxu0 0.0
    %1120 = vmatpush2.msra.mxu0 0.0
    %1121 = vmatprep.subr.mxu0 0.0
    %1122 = vmatpush2.msra.mxu0 0.0
    %1123 = vmatprep.subr.mxu0 0.0
    %1124 = vmatpush2.msra.mxu0 0.0
    %1125 = vmatprep.subr.mxu0 0.0
    %1126 = vmatpush2.msra.mxu0 0.0
    %1127 = vmatprep.subr.mxu0 0.0
    %1128 = vmatpush2.msra.mxu0 0.0
    %1129 = vmatprep.subr.mxu0 0.0
    %1130 = vmatpush2.msra.mxu0 0.0
    %1131 = vmatprep.subr.mxu0 0.0
    %1132 = vmatpush2.msra.mxu0 0.0
    %1133 = vmatprep.subr.mxu0 0.0
    %1134 = vmatpush2.msra.mxu0 0.0
    %1135 = vmatprep.subr.mxu0 0.0
    %1136 = vmatpush2.msra.mxu0 0.0
    %1137 = vmatprep.subr.mxu0 0.0
    %1138 = vmatpush2.msra.mxu0 0.0
    %1139 = vmatprep.mubr.f32.mxu0 0.0
    %1140 = vmatmul.mubr.f32.gmra.mxu0 %v1073
    %v1141 = vpop.f32.mrf.mxu0
    %v1142 = vadd.f32 0.0, %v1141
    %v1143 = vpop.f32.mrf.mxu0
    %1144 = vdwg.mxu0
    %v1153 = vrot.slane %v662, 7
    %v1154 = vsel %vm289, %v1153, %v582
    %v1155 = vrot.slane %v742, 6
    %v1156 = vsel %vm291, %v1155, %v1154
    %v1157 = vrot.slane %v822, 5
    %v1158 = vsel %vm293, %v1157, %v1156
    %v1159 = vrot.slane %v902, 4
    %v1160 = vsel %vm295, %v1159, %v1158
    %v1161 = vrot.slane %v982, 3
    %v1162 = vsel %vm297, %v1161, %v1160
    %v1163 = vrot.slane %v1062, 2
    %v1164 = vsel %vm299, %v1163, %v1162
    %v1165 = vrot.slane %v1142, 1
    %v1166 = vsel %vm301, %v1165, %v1164
    %1168 = vst.msk [vmem:[#allocation7] sm:$0xff] %vm58, %v1166
    %v1169 = vsel %vm289, %v592, %v512
    %v1170 = vsel %vm291, %v672, %v1169
    %v1171 = vsel %vm293, %v752, %v1170
    %v1172 = vsel %vm295, %v832, %v1171
    %v1173 = vsel %vm297, %v912, %v1172
    %v1174 = vsel %vm299, %v992, %v1173
    %v1175 = vsel %vm301, %v1072, %v1174
    %1177 = vst.msk [vmem:[#allocation8] sm:$0xff] %vm304, %v1175
    // Predicated region
    $region22: #{tpu_custom_call.1} parent=1 // pred_check
      _
    $region23: #{tpu_custom_call.1} parent=1 // pred_check_branch
      %1179 = sbr.rel (0) target = $region25
    $region24: #{tpu_custom_call.1} parent=1 // pred_region
      %s1181 = ssub.s32 128, 128
      %1182 = vsyncadd [#allocation4], %s1181
      %s1184 = sshll.u32 [#allocation7], 4
      %s1185 = int_to_ptr.vmem [resolvable:$true] %s1184
      %1187 = dma.vmem_to_hbm [thread:$0]  %s1185, 128, %s3, [#allocation4]
    $region25: #{tpu_custom_call.1} parent=1 // pred_fallthru
      _
    // Predicated region
    $region26: #{tpu_custom_call.1} parent=1 // pred_check
      _
    $region27: #{tpu_custom_call.1} parent=1 // pred_check_branch
      %1189 = sbr.rel (0) target = $region29
    $region28: #{tpu_custom_call.1} parent=1 // pred_region
      %s1191 = ssub.s32 128, 128
      %1192 = vsyncadd [#allocation9], %s1191
      %s1194 = sshll.u32 [#allocation8], 4
      %s1195 = int_to_ptr.vmem [resolvable:$true] %s1194
      %1197 = dma.vmem_to_hbm [thread:$0]  %s1195, 128, %s4, [#allocation9]
    $region29: #{tpu_custom_call.1} parent=1 // pred_fallthru
      _
    // Predicated region
    $region30: #{tpu_custom_call.1} parent=1 // pred_check
      _
    $region31: #{tpu_custom_call.1} parent=1 // pred_check_branch
      %1199 = sbr.rel (0) target = $region33
    $region32: #{tpu_custom_call.1} parent=1 // pred_region
      %1200 = dma.done [#allocation4], 128
    $region33: #{tpu_custom_call.1} parent=1 // pred_fallthru
      _
    // Predicated region
    $region34: #{tpu_custom_call.1} parent=1 // pred_check
      _
    $region35: #{tpu_custom_call.1} parent=1 // pred_check_branch
      %1202 = sbr.rel (0) target = $region37
    $region36: #{tpu_custom_call.1} parent=1 // pred_region
      %1203 = dma.done [#allocation9], 128
    $region37: #{tpu_custom_call.1} parent=1 // pred_fallthru
      _
    %1204 = vsyncpa [#allocation3], 1
    %1205 = vsyncpa [#allocation6], 1
    %1206 = vsyncpa [#allocation4], 1
    %1207 = vsyncpa [#allocation9], 1

// kernel: tpu_custom_call.1
$region0: #{tpu_custom_call.1}
  #allocation0 [shape = 'u32[]', space=smem, size = 0x4, offset = 0x4, fixed_abs, tag = 'smem constant byte address 0x4 - core index']
  #allocation1 [shape = 'u32[144,128]{1,0:T(1,128)}', space=vmem, size = 0x12000, scoped, tag = 'internal scratch']
  %s0 = inlined_call_operand.hbm [shape: f32[8,8,32], index: 0, kind: input, shape index: {}]
  %s1 = inlined_call_operand.hbm [shape: f32[32,32], index: 1, kind: input, shape index: {}]
  %s2 = inlined_call_operand.vmem [shape: f32[1,32], index: 2, kind: input, shape index: {}]
  %s3 = inlined_call_operand.hbm [shape: f32[8,32], index: 3, kind: output, shape index: {0}]
  %s4 = inlined_call_operand.hbm [shape: f32[8,8], index: 4, kind: output, shape index: {1}]
  %5 = xla_tuple %s3, %s4
  %s6 = sld [smem:[#allocation0]]
  $region38: #{tpu_custom_call.1} parent=0
    _
  %s8 = ssub.s32 1, %s6
  %s9 = scalar_select 0, %s8, %s6
  $region1: #{tpu_custom_call.1} parent=0
    #allocation2 [shape = 'u8[32768]{0}', space=vmem, size = 0x8000, scoped, tag = 'input window, operand 0, single buffered']
    #allocation3 [shape = 's32[1]{0}', space=sflag, size = 0x4, scoped, tag = 'scoped memory for tpu_custom_call.1']
    #allocation4 [shape = 's32[1]{0}', space=sflag, size = 0x4, scoped, tag = 'scoped memory for tpu_custom_call.1']
    #allocation5 [shape = 'u8[16384]{0}', space=vmem, size = 0x4000, scoped, tag = 'input window, operand 1, single buffered']
    #allocation6 [shape = 's32[1]{0}', space=sflag, size = 0x4, scoped, tag = 'scoped memory for tpu_custom_call.1']
    #allocation7 [shape = 'u8[4096]{0}', space=vmem, size = 0x1000, scoped, tag = 'output window, operand 0, single buffered']
    #allocation8 [shape = 'u8[4096]{0}', space=vmem, size = 0x1000, scoped, tag = 'output window, operand 1, single buffered']
    #allocation9 [shape = 's32[1]{0}', space=sflag, size = 0x4, scoped, tag = 'scoped memory for tpu_custom_call.1']
    %10 = vsyncpa [#allocation3], 0
    %11 = vsyncpa [#allocation6], 0
    %12 = vsyncpa [#allocation4], 0
    %13 = vsyncpa [#allocation9], 0
    // Predicated region
    $region2: #{tpu_custom_call.1} parent=1 // pred_check
      _
    $region3: #{tpu_custom_call.1} parent=1 // pred_check_branch
      %15 = sbr.rel (0) target = $region5
    $region4: #{tpu_custom_call.1} parent=1 // pred_region
      %s17 = ssub.s32 1024, 1024
      %18 = vsyncadd [#allocation3], %s17
      %s19 = sshll.u32 [#allocation2], 4
      %s20 = int_to_ptr.vmem [resolvable:$true] %s19
      %25 = dma.hbm_to_vmem [thread:$0]  %s0, 1024, %s20, [#allocation3], 128, 128, 8
    $region5: #{tpu_custom_call.1} parent=1 // pred_fallthru
      _
    // Predicated region
    $region6: #{tpu_custom_call.1} parent=1 // pred_check
      _
    $region7: #{tpu_custom_call.1} parent=1 // pred_check_branch
      %27 = sbr.rel (0) target = $region9
    $region8: #{tpu_custom_call.1} parent=1 // pred_region
      %s29 = ssub.s32 512, 512
      %30 = vsyncadd [#allocation6], %s29
      %s31 = sshll.u32 [#allocation5], 4
      %s32 = int_to_ptr.vmem [resolvable:$true] %s31
      %37 = dma.hbm_to_vmem [thread:$0]  %s1, 512, %s32, [#allocation6], 128, 128, 8
    $region9: #{tpu_custom_call.1} parent=1 // pred_fallthru
      _
    // Predicated region
    $region10: #{tpu_custom_call.1} parent=1 // pred_check
      _
    $region11: #{tpu_custom_call.1} parent=1 // pred_check_branch
      %39 = sbr.rel (0) target = $region13
    $region12: #{tpu_custom_call.1} parent=1 // pred_region
      _
    $region13: #{tpu_custom_call.1} parent=1 // pred_fallthru
      _
    // Predicated region
    $region14: #{tpu_custom_call.1} parent=1 // pred_check
      _
    $region15: #{tpu_custom_call.1} parent=1 // pred_check_branch
      %41 = sbr.rel (0) target = $region17
    $region16: #{tpu_custom_call.1} parent=1 // pred_region
      %42 = dma.done [#allocation3], 1024
    $region17: #{tpu_custom_call.1} parent=1 // pred_fallthru
      _
    // Predicated region
    $region18: #{tpu_custom_call.1} parent=1 // pred_check
      _
    $region19: #{tpu_custom_call.1} parent=1 // pred_check_branch
      %44 = sbr.rel (0) target = $region21
    $region20: #{tpu_custom_call.1} parent=1 // pred_region
      %45 = dma.done [#allocation6], 512
    $region21: #{tpu_custom_call.1} parent=1 // pred_fallthru
      _
    %v46 = vld [vmem:[#allocation2] sm:$0xff]
    %v47 = vld [vmem:[#allocation2 + $0x8] sm:$0xff]
    %v48 = vld [vmem:[#allocation2 + $0x10] sm:$0xff]
    %v49 = vld [vmem:[#allocation2 + $0x18] sm:$0xff]
    %v50 = vld [vmem:[#allocation2 + $0x20] sm:$0xff]
    %v51 = vld [vmem:[#allocation2 + $0x28] sm:$0xff]
    %v52 = vld [vmem:[#allocation2 + $0x30] sm:$0xff]
    %v53 = vld [vmem:[#allocation2 + $0x38] sm:$0xff]
    %v54 = vld [vmem:[#allocation5] sm:$0xff]
    %v55 = vld [vmem:[#allocation5 + $0x8] sm:$0xff]
    %v56 = vld [vmem:[#allocation5 + $0x10] sm:$0xff]
    %v57 = vld [vmem:[#allocation5 + $0x18] sm:$0xff]
    %vm58 = vcmask 261120
    %v60 = vsel %vm58, %v46, 0
    %v63 = vsel %vm58, %v47, 0
    %v66 = vsel %vm58, %v48, 0
    %v69 = vsel %vm58, %v49, 0
    %v72 = vsel %vm58, %v50, 0
    %v75 = vsel %vm58, %v51, 0
    %v78 = vsel %vm58, %v52, 0
    %v81 = vsel %vm58, %v53, 0
    %v84 = vsel %vm58, %v54, 0
    %v87 = vsel %vm58, %v55, 0
    %v90 = vsel %vm58, %v56, 0
    %v93 = vsel %vm58, %v57, 0
    %95 = vmatprep.subr.mxu0 0.0
    %96 = vmatpush1.xpose.msra.mxu0 0.0
    %97 = vmatprep.subr.mxu0 0.0
    %98 = vmatpush1.xpose.msra.mxu0 0.0
    %99 = vmatprep.subr.mxu0 0.0
    %100 = vmatpush1.xpose.msra.mxu0 0.0
    %101 = vmatprep.subr.mxu0 0.0
    %102 = vmatpush1.xpose.msra.mxu0 0.0
    %103 = vmatprep.subr.mxu0 0.0
    %104 = vmatpush1.xpose.msra.mxu0 0.0
    %105 = vmatprep.subr.mxu0 0.0
    %106 = vmatpush1.xpose.msra.mxu0 0.0
    %107 = vmatprep.subr.mxu0 0.0
    %108 = vmatpush1.xpose.msra.mxu0 0.0
    %109 = vmatprep.subr.mxu0 0.0
    %110 = vmatpush1.xpose.msra.mxu0 0.0
    %111 = vmatprep.subr.mxu0 0.0
    %112 = vmatpush1.xpose.msra.mxu0 0.0
    %113 = vmatprep.subr.mxu0 0.0
    %114 = vmatpush1.xpose.msra.mxu0 0.0
    %115 = vmatprep.subr.mxu0 0.0
    %116 = vmatpush1.xpose.msra.mxu0 0.0
    %117 = vmatprep.subr.mxu0 0.0
    %118 = vmatpush1.xpose.msra.mxu0 0.0
    %119 = vmatprep.subr.mxu0 0.0
    %120 = vmatpush1.xpose.msra.mxu0 %v93
    %121 = vmatprep.subr.mxu0 0.0
    %122 = vmatpush1.xpose.msra.mxu0 %v90
    %123 = vmatprep.subr.mxu0 0.0
    %124 = vmatpush1.xpose.msra.mxu0 %v87
    %125 = vmatprep.subr.mxu0 0.0
    %126 = vmatpush1.xpose.msra.mxu0 %v84
    %127 = vmatprep.subr.mxu0 0.0
    %128 = vmatpush2.xpose.msra.mxu0 0.0
    %129 = vmatprep.subr.mxu0 0.0
    %130 = vmatpush2.xpose.msra.mxu0 0.0
    %131 = vmatprep.subr.mxu0 0.0
    %132 = vmatpush2.xpose.msra.mxu0 0.0
    %133 = vmatprep.subr.mxu0 0.0
    %134 = vmatpush2.xpose.msra.mxu0 0.0
    %135 = vmatprep.subr.mxu0 0.0
    %136 = vmatpush2.xpose.msra.mxu0 0.0
    %137 = vmatprep.subr.mxu0 0.0
    %138 = vmatpush2.xpose.msra.mxu0 0.0
    %139 = vmatprep.subr.mxu0 0.0
    %140 = vmatpush2.xpose.msra.mxu0 0.0
    %141 = vmatprep.subr.mxu0 0.0
    %142 = vmatpush2.xpose.msra.mxu0 0.0
    %143 = vmatprep.subr.mxu0 0.0
    %144 = vmatpush2.xpose.msra.mxu0 0.0
    %145 = vmatprep.subr.mxu0 0.0
    %146 = vmatpush2.xpose.msra.mxu0 0.0
    %147 = vmatprep.subr.mxu0 0.0
    %148 = vmatpush2.xpose.msra.mxu0 0.0
    %149 = vmatprep.subr.mxu0 0.0
    %150 = vmatpush2.xpose.msra.mxu0 0.0
    %151 = vmatprep.subr.mxu0 0.0
    %152 = vmatpush2.xpose.msra.mxu0 0.0
    %153 = vmatprep.subr.mxu0 0.0
    %154 = vmatpush2.xpose.msra.mxu0 0.0
    %155 = vmatprep.subr.mxu0 0.0
    %156 = vmatpush2.xpose.msra.mxu0 0.0
    %157 = vmatprep.subr.mxu0 0.0
    %158 = vmatpush2.xpose.msra.mxu0 0.0
    %159 = vmatprep.mubr.f32.mxu0 0.0
    %160 = vmatmul.mubr.f32.gmra.mxu0 %v60
    %v161 = vpop.f32.mrf.mxu0
    %v162 = vadd.f32 0.0, %v161
    %v163 = vpop.f32.mrf.mxu0
    %164 = vmatprep.mubr.f32.mxu0 0.0
    %165 = vmatmul.mubr.f32.gmra.mxu0 %v63
    %v166 = vpop.f32.mrf.mxu0
    %v167 = vadd.f32 0.0, %v166
    %v168 = vpop.f32.mrf.mxu0
    %169 = vmatprep.mubr.f32.mxu0 0.0
    %170 = vmatmul.mubr.f32.gmra.mxu0 %v66
    %v171 = vpop.f32.mrf.mxu0
    %v172 = vadd.f32 0.0, %v171
    %v173 = vpop.f32.mrf.mxu0
    %174 = vmatprep.mubr.f32.mxu0 0.0
    %175 = vmatmul.mubr.f32.gmra.mxu0 %v69
    %v176 = vpop.f32.mrf.mxu0
    %v177 = vadd.f32 0.0, %v176
    %v178 = vpop.f32.mrf.mxu0
    %179 = vmatprep.mubr.f32.mxu0 0.0
    %180 = vmatmul.mubr.f32.gmra.mxu0 %v72
    %v181 = vpop.f32.mrf.mxu0
    %v182 = vadd.f32 0.0, %v181
    %v183 = vpop.f32.mrf.mxu0
    %184 = vmatprep.mubr.f32.mxu0 0.0
    %185 = vmatmul.mubr.f32.gmra.mxu0 %v75
    %v186 = vpop.f32.mrf.mxu0
    %v187 = vadd.f32 0.0, %v186
    %v188 = vpop.f32.mrf.mxu0
    %189 = vmatprep.mubr.f32.mxu0 0.0
    %190 = vmatmul.mubr.f32.gmra.mxu0 %v78
    %v191 = vpop.f32.mrf.mxu0
    %v192 = vadd.f32 0.0, %v191
    %v193 = vpop.f32.mrf.mxu0
    %194 = vmatprep.mubr.f32.mxu0 0.0
    %195 = vmatmul.mubr.f32.gmra.mxu0 %v81
    %v196 = vpop.f32.mrf.mxu0
    %v197 = vadd.f32 0.0, %v196
    %v198 = vpop.f32.mrf.mxu0
    %199 = vdwg.mxu0
    %v200 = vtanh.pop %v162
    %v201 = vtanh.pop %v167
    %v202 = vtanh.pop %v172
    %v203 = vtanh.pop %v177
    %v204 = vtanh.pop %v182
    %v205 = vtanh.pop %v187
    %v206 = vtanh.pop %v192
    %v207 = vtanh.pop %v197
    %v208 = vld [vmem:[%s2] sm:$0x1]
    %v210 = vlaneseq
    %v211 = vshrl.u32 %v210, 7
    %v212 = vsub.s32 0, %v211
    %v213 = vrot.slane %v208, %v212
    %v215 = vmul.f32 %v200, %v213
    %v216 = vmul.f32 %v201, %v213
    %v217 = vmul.f32 %v202, %v213
    %v218 = vmul.f32 %v203, %v213
    %v219 = vmul.f32 %v204, %v213
    %v220 = vmul.f32 %v205, %v213
    %v221 = vmul.f32 %v206, %v213
    %v222 = vmul.f32 %v207, %v213
    %v223 = vsel %vm58, %v215, 0.0
    %224 = vadd.xlane.f32.xlu0 %v223
    %v225 = vpop.xlane.xlu0 %224
    %v226 = vsel %vm58, %v216, 0.0
    %227 = vadd.xlane.f32.xlu0 %v226
    %v228 = vpop.xlane.xlu0 %227
    %v229 = vsel %vm58, %v217, 0.0
    %230 = vadd.xlane.f32.xlu0 %v229
    %v231 = vpop.xlane.xlu0 %230
    %v232 = vsel %vm58, %v218, 0.0
    %233 = vadd.xlane.f32.xlu0 %v232
    %v234 = vpop.xlane.xlu0 %233
    %v235 = vsel %vm58, %v219, 0.0
    %236 = vadd.xlane.f32.xlu0 %v235
    %v237 = vpop.xlane.xlu0 %236
    %v238 = vsel %vm58, %v220, 0.0
    %239 = vadd.xlane.f32.xlu0 %v238
    %v240 = vpop.xlane.xlu0 %239
    %v241 = vsel %vm58, %v221, 0.0
    %242 = vadd.xlane.f32.xlu0 %v241
    %v243 = vpop.xlane.xlu0 %242
    %v244 = vsel %vm58, %v222, 0.0
    %245 = vadd.xlane.f32.xlu0 %v244
    %v246 = vpop.xlane.xlu0 %245
    %v255 = vlaneseq
    %v256 = vand.u32 %v255, 127
    %v257 = vlaneseq
    %v258 = vshrl.u32 %v257, 7
    %v259 = vsub.s32 %v256, %v258
    %v260 = vrot.slane %v225, %v259
    %v261 = vlaneseq
    %v262 = vshrl.u32 %v261, 7
    %v263 = vsub.s32 %v256, %v262
    %v264 = vrot.slane %v228, %v263
    %v265 = vlaneseq
    %v266 = vshrl.u32 %v265, 7
    %v267 = vsub.s32 %v256, %v266
    %v268 = vrot.slane %v231, %v267
    %v269 = vlaneseq
    %v270 = vshrl.u32 %v269, 7
    %v271 = vsub.s32 %v256, %v270
    %v272 = vrot.slane %v234, %v271
    %v273 = vlaneseq
    %v274 = vshrl.u32 %v273, 7
    %v275 = vsub.s32 %v256, %v274
    %v276 = vrot.slane %v237, %v275
    %v277 = vlaneseq
    %v278 = vshrl.u32 %v277, 7
    %v279 = vsub.s32 %v256, %v278
    %v280 = vrot.slane %v240, %v279
    %v281 = vlaneseq
    %v282 = vshrl.u32 %v281, 7
    %v283 = vsub.s32 %v256, %v282
    %v284 = vrot.slane %v243, %v283
    %v285 = vlaneseq
    %v286 = vshrl.u32 %v285, 7
    %v287 = vsub.s32 %v256, %v286
    %v288 = vrot.slane %v246, %v287
    %vm289 = vcmask 1041409
    %v290 = vsel %vm289, %v264, %v260
    %vm291 = vcmask 1042434
    %v292 = vsel %vm291, %v268, %v290
    %vm293 = vcmask 1043459
    %v294 = vsel %vm293, %v272, %v292
    %vm295 = vcmask 1044484
    %v296 = vsel %vm295, %v276, %v294
    %vm297 = vcmask 1045509
    %v298 = vsel %vm297, %v280, %v296
    %vm299 = vcmask 1046534
    %v300 = vsel %vm299, %v284, %v298
    %vm301 = vcmask 1047559
    %v302 = vsel %vm301, %v288, %v300
    %vm304 = vcmask 64512
    %v305 = vsel %vm304, %v302, -inf
    %306 = vmax.xlane.f32.xlu0 %v305
    %v307 = vpop.xlane.xlu0 %306
    %v309 = vlaneseq
    %v310 = vshrl.u32 %v309, 7
    %v311 = vsub.s32 0, %v310
    %v312 = vrot.slane %v307, %v311
    %v313 = vlaneseq
    %v314 = vshrl.u32 %v313, 7
    %v315 = vsub.s32 1, %v314
    %v316 = vrot.slane %v307, %v315
    %v317 = vlaneseq
    %v318 = vshrl.u32 %v317, 7
    %v319 = vsub.s32 2, %v318
    %v320 = vrot.slane %v307, %v319
    %v321 = vlaneseq
    %v322 = vshrl.u32 %v321, 7
    %v323 = vsub.s32 3, %v322
    %v324 = vrot.slane %v307, %v323
    %v325 = vlaneseq
    %v326 = vshrl.u32 %v325, 7
    %v327 = vsub.s32 4, %v326
    %v328 = vrot.slane %v307, %v327
    %v329 = vlaneseq
    %v330 = vshrl.u32 %v329, 7
    %v331 = vsub.s32 5, %v330
    %v332 = vrot.slane %v307, %v331
    %v333 = vlaneseq
    %v334 = vshrl.u32 %v333, 7
    %v335 = vsub.s32 6, %v334
    %v336 = vrot.slane %v307, %v335
    %v337 = vlaneseq
    %v338 = vshrl.u32 %v337, 7
    %v339 = vsub.s32 7, %v338
    %v340 = vrot.slane %v307, %v339
    %v349 = vsub.f32 %v225, %v312
    %v350 = vsub.f32 %v228, %v316
    %v351 = vsub.f32 %v231, %v320
    %v352 = vsub.f32 %v234, %v324
    %v353 = vsub.f32 %v237, %v328
    %v354 = vsub.f32 %v240, %v332
    %v355 = vsub.f32 %v243, %v336
    %v356 = vsub.f32 %v246, %v340
    %v357 = vmul.f32 %v349, 1.442695
    %v358 = vpow.pop %v357
    %v359 = vmul.f32 %v350, 1.442695
    %v360 = vpow.pop %v359
    %v361 = vmul.f32 %v351, 1.442695
    %v362 = vpow.pop %v361
    %v363 = vmul.f32 %v352, 1.442695
    %v364 = vpow.pop %v363
    %v365 = vmul.f32 %v353, 1.442695
    %v366 = vpow.pop %v365
    %v367 = vmul.f32 %v354, 1.442695
    %v368 = vpow.pop %v367
    %v369 = vmul.f32 %v355, 1.442695
    %v370 = vpow.pop %v369
    %v371 = vmul.f32 %v356, 1.442695
    %v372 = vpow.pop %v371
    %381 = vset.pattern.permute.xlu0 0
    %382 = vperm.xlu0 %381, %v358
    %v383 = vpop.permute.xlu0 %382
    %384 = vset.pattern.permute.xlu0 0
    %385 = vperm.xlu0 %384, %v360
    %v386 = vpop.permute.xlu0 %385
    %387 = vset.pattern.permute.xlu0 0
    %388 = vperm.xlu0 %387, %v362
    %v389 = vpop.permute.xlu0 %388
    %390 = vset.pattern.permute.xlu0 0
    %391 = vperm.xlu0 %390, %v364
    %v392 = vpop.permute.xlu0 %391
    %393 = vset.pattern.permute.xlu0 0
    %394 = vperm.xlu0 %393, %v366
    %v395 = vpop.permute.xlu0 %394
    %396 = vset.pattern.permute.xlu0 0
    %397 = vperm.xlu0 %396, %v368
    %v398 = vpop.permute.xlu0 %397
    %399 = vset.pattern.permute.xlu0 0
    %400 = vperm.xlu0 %399, %v370
    %v401 = vpop.permute.xlu0 %400
    %402 = vset.pattern.permute.xlu0 0
    %403 = vperm.xlu0 %402, %v372
    %v404 = vpop.permute.xlu0 %403
    %v405 = vlaneseq
    %v406 = vshrl.u32 %v405, 7
    %v407 = vsub.s32 %v256, %v406
    %v408 = vrot.slane %v383, %v407
    %v409 = vlaneseq
    %v410 = vshrl.u32 %v409, 7
    %v411 = vsub.s32 %v256, %v410
    %v412 = vrot.slane %v386, %v411
    %v413 = vlaneseq
    %v414 = vshrl.u32 %v413, 7
    %v415 = vsub.s32 %v256, %v414
    %v416 = vrot.slane %v389, %v415
    %v417 = vlaneseq
    %v418 = vshrl.u32 %v417, 7
    %v419 = vsub.s32 %v256, %v418
    %v420 = vrot.slane %v392, %v419
    %v421 = vlaneseq
    %v422 = vshrl.u32 %v421, 7
    %v423 = vsub.s32 %v256, %v422
    %v424 = vrot.slane %v395, %v423
    %v425 = vlaneseq
    %v426 = vshrl.u32 %v425, 7
    %v427 = vsub.s32 %v256, %v426
    %v428 = vrot.slane %v398, %v427
    %v429 = vlaneseq
    %v430 = vshrl.u32 %v429, 7
    %v431 = vsub.s32 %v256, %v430
    %v432 = vrot.slane %v401, %v431
    %v433 = vlaneseq
    %v434 = vshrl.u32 %v433, 7
    %v435 = vsub.s32 %v256, %v434
    %v436 = vrot.slane %v404, %v435
    %v437 = vsel %vm289, %v412, %v408
    %v438 = vsel %vm291, %v416, %v437
    %v439 = vsel %vm293, %v420, %v438
    %v440 = vsel %vm295, %v424, %v439
    %v441 = vsel %vm297, %v428, %v440
    %v442 = vsel %vm299, %v432, %v441
    %v443 = vsel %vm301, %v436, %v442
    %v445 = vsel %vm304, %v443, 0.0
    %446 = vadd.xlane.f32.xlu0 %v445
    %v447 = vpop.xlane.xlu0 %446
    %v449 = vlaneseq
    %v450 = vshrl.u32 %v449, 7
    %v451 = vsub.s32 0, %v450
    %v452 = vrot.slane %v447, %v451
    %v453 = vlaneseq
    %v454 = vshrl.u32 %v453, 7
    %v455 = vsub.s32 1, %v454
    %v456 = vrot.slane %v447, %v455
    %v457 = vlaneseq
    %v458 = vshrl.u32 %v457, 7
    %v459 = vsub.s32 2, %v458
    %v460 = vrot.slane %v447, %v459
    %v461 = vlaneseq
    %v462 = vshrl.u32 %v461, 7
    %v463 = vsub.s32 3, %v462
    %v464 = vrot.slane %v447, %v463
    %v465 = vlaneseq
    %v466 = vshrl.u32 %v465, 7
    %v467 = vsub.s32 4, %v466
    %v468 = vrot.slane %v447, %v467
    %v469 = vlaneseq
    %v470 = vshrl.u32 %v469, 7
    %v471 = vsub.s32 5, %v470
    %v472 = vrot.slane %v447, %v471
    %v473 = vlaneseq
    %v474 = vshrl.u32 %v473, 7
    %v475 = vsub.s32 6, %v474
    %v476 = vrot.slane %v447, %v475
    %v477 = vlaneseq
    %v478 = vshrl.u32 %v477, 7
    %v479 = vsub.s32 7, %v478
    %v480 = vrot.slane %v447, %v479
    %v489 = vrcp.pop %v452
    %v490 = vmul.f32 %v358, %v489
    %v491 = vrcp.pop %v456
    %v492 = vmul.f32 %v360, %v491
    %v493 = vrcp.pop %v460
    %v494 = vmul.f32 %v362, %v493
    %v495 = vrcp.pop %v464
    %v496 = vmul.f32 %v364, %v495
    %v497 = vrcp.pop %v468
    %v498 = vmul.f32 %v366, %v497
    %v499 = vrcp.pop %v472
    %v500 = vmul.f32 %v368, %v499
    %v501 = vrcp.pop %v476
    %v502 = vmul.f32 %v370, %v501
    %v503 = vrcp.pop %v480
    %v504 = vmul.f32 %v372, %v503
    %506 = vset.pattern.permute.xlu0 0
    %507 = vperm.xlu0 %506, %v490
    %v508 = vpop.permute.xlu0 %507
    %v509 = vlaneseq
    %v510 = vshrl.u32 %v509, 7
    %v511 = vsub.s32 %v256, %v510
    %v512 = vrot.slane %v508, %v511
    %v513 = vsel %vm304, %v512, 0
    %515 = vmatprep.subr.mxu0 0.0
    %516 = vmatpush1.msra.mxu0 0.0
    %517 = vmatprep.subr.mxu0 0.0
    %518 = vmatpush1.msra.mxu0 0.0
    %519 = vmatprep.subr.mxu0 0.0
    %520 = vmatpush1.msra.mxu0 0.0
    %521 = vmatprep.subr.mxu0 0.0
    %522 = vmatpush1.msra.mxu0 0.0
    %523 = vmatprep.subr.mxu0 0.0
    %524 = vmatpush1.msra.mxu0 0.0
    %525 = vmatprep.subr.mxu0 0.0
    %526 = vmatpush1.msra.mxu0 0.0
    %527 = vmatprep.subr.mxu0 0.0
    %528 = vmatpush1.msra.mxu0 0.0
    %529 = vmatprep.subr.mxu0 0.0
    %530 = vmatpush1.msra.mxu0 0.0
    %531 = vmatprep.subr.mxu0 0.0
    %532 = vmatpush1.msra.mxu0 0.0
    %533 = vmatprep.subr.mxu0 0.0
    %534 = vmatpush1.msra.mxu0 0.0
    %535 = vmatprep.subr.mxu0 0.0
    %536 = vmatpush1.msra.mxu0 0.0
    %537 = vmatprep.subr.mxu0 0.0
    %538 = vmatpush1.msra.mxu0 0.0
    %539 = vmatprep.subr.mxu0 0.0
    %540 = vmatpush1.msra.mxu0 0.0
    %541 = vmatprep.subr.mxu0 0.0
    %542 = vmatpush1.msra.mxu0 0.0
    %543 = vmatprep.subr.mxu0 0.0
    %544 = vmatpush1.msra.mxu0 0.0
    %545 = vmatprep.subr.mxu0 0.0
    %546 = vmatpush1.msra.mxu0 %v46
    %547 = vmatprep.subr.mxu0 0.0
    %548 = vmatpush2.msra.mxu0 0.0
    %549 = vmatprep.subr.mxu0 0.0
    %550 = vmatpush2.msra.mxu0 0.0
    %551 = vmatprep.subr.mxu0 0.0
    %552 = vmatpush2.msra.mxu0 0.0
    %553 = vmatprep.subr.mxu0 0.0
    %554 = vmatpush2.msra.mxu0 0.0
    %555 = vmatprep.subr.mxu0 0.0
    %556 = vmatpush2.msra.mxu0 0.0
    %557 = vmatprep.subr.mxu0 0.0
    %558 = vmatpush2.msra.mxu0 0.0
    %559 = vmatprep.subr.mxu0 0.0
    %560 = vmatpush2.msra.mxu0 0.0
    %561 = vmatprep.subr.mxu0 0.0
    %562 = vmatpush2.msra.mxu0 0.0
    %563 = vmatprep.subr.mxu0 0.0
    %564 = vmatpush2.msra.mxu0 0.0
    %565 = vmatprep.subr.mxu0 0.0
    %566 = vmatpush2.msra.mxu0 0.0
    %567 = vmatprep.subr.mxu0 0.0
    %568 = vmatpush2.msra.mxu0 0.0
    %569 = vmatprep.subr.mxu0 0.0
    %570 = vmatpush2.msra.mxu0 0.0
    %571 = vmatprep.subr.mxu0 0.0
    %572 = vmatpush2.msra.mxu0 0.0
    %573 = vmatprep.subr.mxu0 0.0
    %574 = vmatpush2.msra.mxu0 0.0
    %575 = vmatprep.subr.mxu0 0.0
    %576 = vmatpush2.msra.mxu0 0.0
    %577 = vmatprep.subr.mxu0 0.0
    %578 = vmatpush2.msra.mxu0 0.0
    %579 = vmatprep.mubr.f32.mxu0 0.0
    %580 = vmatmul.mubr.f32.gmra.mxu0 %v513
    %v581 = vpop.f32.mrf.mxu0
    %v582 = vadd.f32 0.0, %v581
    %v583 = vpop.f32.mrf.mxu0
    %584 = vdwg.mxu0
    %586 = vset.pattern.permute.xlu0 0
    %587 = vperm.xlu0 %586, %v492
    %v588 = vpop.permute.xlu0 %587
    %v589 = vlaneseq
    %v590 = vshrl.u32 %v589, 7
    %v591 = vsub.s32 %v256, %v590
    %v592 = vrot.slane %v588, %v591
    %v593 = vsel %vm304, %v592, 0
    %595 = vmatprep.subr.mxu0 0.0
    %596 = vmatpush1.msra.mxu0 0.0
    %597 = vmatprep.subr.mxu0 0.0
    %598 = vmatpush1.msra.mxu0 0.0
    %599 = vmatprep.subr.mxu0 0.0
    %600 = vmatpush1.msra.mxu0 0.0
    %601 = vmatprep.subr.mxu0 0.0
    %602 = vmatpush1.msra.mxu0 0.0
    %603 = vmatprep.subr.mxu0 0.0
    %604 = vmatpush1.msra.mxu0 0.0
    %605 = vmatprep.subr.mxu0 0.0
    %606 = vmatpush1.msra.mxu0 0.0
    %607 = vmatprep.subr.mxu0 0.0
    %608 = vmatpush1.msra.mxu0 0.0
    %609 = vmatprep.subr.mxu0 0.0
    %610 = vmatpush1.msra.mxu0 0.0
    %611 = vmatprep.subr.mxu0 0.0
    %612 = vmatpush1.msra.mxu0 0.0
    %613 = vmatprep.subr.mxu0 0.0
    %614 = vmatpush1.msra.mxu0 0.0
    %615 = vmatprep.subr.mxu0 0.0
    %616 = vmatpush1.msra.mxu0 0.0
    %617 = vmatprep.subr.mxu0 0.0
    %618 = vmatpush1.msra.mxu0 0.0
    %619 = vmatprep.subr.mxu0 0.0
    %620 = vmatpush1.msra.mxu0 0.0
    %621 = vmatprep.subr.mxu0 0.0
    %622 = vmatpush1.msra.mxu0 0.0
    %623 = vmatprep.subr.mxu0 0.0
    %624 = vmatpush1.msra.mxu0 0.0
    %625 = vmatprep.subr.mxu0 0.0
    %626 = vmatpush1.msra.mxu0 %v47
    %627 = vmatprep.subr.mxu0 0.0
    %628 = vmatpush2.msra.mxu0 0.0
    %629 = vmatprep.subr.mxu0 0.0
    %630 = vmatpush2.msra.mxu0 0.0
    %631 = vmatprep.subr.mxu0 0.0
    %632 = vmatpush2.msra.mxu0 0.0
    %633 = vmatprep.subr.mxu0 0.0
    %634 = vmatpush2.msra.mxu0 0.0
    %635 = vmatprep.subr.mxu0 0.0
    %636 = vmatpush2.msra.mxu0 0.0
    %637 = vmatprep.subr.mxu0 0.0
    %638 = vmatpush2.msra.mxu0 0.0
    %639 = vmatprep.subr.mxu0 0.0
    %640 = vmatpush2.msra.mxu0 0.0
    %641 = vmatprep.subr.mxu0 0.0
    %642 = vmatpush2.msra.mxu0 0.0
    %643 = vmatprep.subr.mxu0 0.0
    %644 = vmatpush2.msra.mxu0 0.0
    %645 = vmatprep.subr.mxu0 0.0
    %646 = vmatpush2.msra.mxu0 0.0
    %647 = vmatprep.subr.mxu0 0.0
    %648 = vmatpush2.msra.mxu0 0.0
    %649 = vmatprep.subr.mxu0 0.0
    %650 = vmatpush2.msra.mxu0 0.0
    %651 = vmatprep.subr.mxu0 0.0
    %652 = vmatpush2.msra.mxu0 0.0
    %653 = vmatprep.subr.mxu0 0.0
    %654 = vmatpush2.msra.mxu0 0.0
    %655 = vmatprep.subr.mxu0 0.0
    %656 = vmatpush2.msra.mxu0 0.0
    %657 = vmatprep.subr.mxu0 0.0
    %658 = vmatpush2.msra.mxu0 0.0
    %659 = vmatprep.mubr.f32.mxu0 0.0
    %660 = vmatmul.mubr.f32.gmra.mxu0 %v593
    %v661 = vpop.f32.mrf.mxu0
    %v662 = vadd.f32 0.0, %v661
    %v663 = vpop.f32.mrf.mxu0
    %664 = vdwg.mxu0
    %666 = vset.pattern.permute.xlu0 0
    %667 = vperm.xlu0 %666, %v494
    %v668 = vpop.permute.xlu0 %667
    %v669 = vlaneseq
    %v670 = vshrl.u32 %v669, 7
    %v671 = vsub.s32 %v256, %v670
    %v672 = vrot.slane %v668, %v671
    %v673 = vsel %vm304, %v672, 0
    %675 = vmatprep.subr.mxu0 0.0
    %676 = vmatpush1.msra.mxu0 0.0
    %677 = vmatprep.subr.mxu0 0.0
    %678 = vmatpush1.msra.mxu0 0.0
    %679 = vmatprep.subr.mxu0 0.0
    %680 = vmatpush1.msra.mxu0 0.0
    %681 = vmatprep.subr.mxu0 0.0
    %682 = vmatpush1.msra.mxu0 0.0
    %683 = vmatprep.subr.mxu0 0.0
    %684 = vmatpush1.msra.mxu0 0.0
    %685 = vmatprep.subr.mxu0 0.0
    %686 = vmatpush1.msra.mxu0 0.0
    %687 = vmatprep.subr.mxu0 0.0
    %688 = vmatpush1.msra.mxu0 0.0
    %689 = vmatprep.subr.mxu0 0.0
    %690 = vmatpush1.msra.mxu0 0.0
    %691 = vmatprep.subr.mxu0 0.0
    %692 = vmatpush1.msra.mxu0 0.0
    %693 = vmatprep.subr.mxu0 0.0
    %694 = vmatpush1.msra.mxu0 0.0
    %695 = vmatprep.subr.mxu0 0.0
    %696 = vmatpush1.msra.mxu0 0.0
    %697 = vmatprep.subr.mxu0 0.0
    %698 = vmatpush1.msra.mxu0 0.0
    %699 = vmatprep.subr.mxu0 0.0
    %700 = vmatpush1.msra.mxu0 0.0
    %701 = vmatprep.subr.mxu0 0.0
    %702 = vmatpush1.msra.mxu0 0.0
    %703 = vmatprep.subr.mxu0 0.0
    %704 = vmatpush1.msra.mxu0 0.0
    %705 = vmatprep.subr.mxu0 0.0
    %706 = vmatpush1.msra.mxu0 %v48
    %707 = vmatprep.subr.mxu0 0.0
    %708 = vmatpush2.msra.mxu0 0.0
    %709 = vmatprep.subr.mxu0 0.0
    %710 = vmatpush2.msra.mxu0 0.0
    %711 = vmatprep.subr.mxu0 0.0
    %712 = vmatpush2.msra.mxu0 0.0
    %713 = vmatprep.subr.mxu0 0.0
    %714 = vmatpush2.msra.mxu0 0.0
    %715 = vmatprep.subr.mxu0 0.0
    %716 = vmatpush2.msra.mxu0 0.0
    %717 = vmatprep.subr.mxu0 0.0
    %718 = vmatpush2.msra.mxu0 0.0
    %719 = vmatprep.subr.mxu0 0.0
    %720 = vmatpush2.msra.mxu0 0.0
    %721 = vmatprep.subr.mxu0 0.0
    %722 = vmatpush2.msra.mxu0 0.0
    %723 = vmatprep.subr.mxu0 0.0
    %724 = vmatpush2.msra.mxu0 0.0
    %725 = vmatprep.subr.mxu0 0.0
    %726 = vmatpush2.msra.mxu0 0.0
    %727 = vmatprep.subr.mxu0 0.0
    %728 = vmatpush2.msra.mxu0 0.0
    %729 = vmatprep.subr.mxu0 0.0
    %730 = vmatpush2.msra.mxu0 0.0
    %731 = vmatprep.subr.mxu0 0.0
    %732 = vmatpush2.msra.mxu0 0.0
    %733 = vmatprep.subr.mxu0 0.0
    %734 = vmatpush2.msra.mxu0 0.0
    %735 = vmatprep.subr.mxu0 0.0
    %736 = vmatpush2.msra.mxu0 0.0
    %737 = vmatprep.subr.mxu0 0.0
    %738 = vmatpush2.msra.mxu0 0.0
    %739 = vmatprep.mubr.f32.mxu0 0.0
    %740 = vmatmul.mubr.f32.gmra.mxu0 %v673
    %v741 = vpop.f32.mrf.mxu0
    %v742 = vadd.f32 0.0, %v741
    %v743 = vpop.f32.mrf.mxu0
    %744 = vdwg.mxu0
    %746 = vset.pattern.permute.xlu0 0
    %747 = vperm.xlu0 %746, %v496
    %v748 = vpop.permute.xlu0 %747
    %v749 = vlaneseq
    %v750 = vshrl.u32 %v749, 7
    %v751 = vsub.s32 %v256, %v750
    %v752 = vrot.slane %v748, %v751
    %v753 = vsel %vm304, %v752, 0
    %755 = vmatprep.subr.mxu0 0.0
    %756 = vmatpush1.msra.mxu0 0.0
    %757 = vmatprep.subr.mxu0 0.0
    %758 = vmatpush1.msra.mxu0 0.0
    %759 = vmatprep.subr.mxu0 0.0
    %760 = vmatpush1.msra.mxu0 0.0
    %761 = vmatprep.subr.mxu0 0.0
    %762 = vmatpush1.msra.mxu0 0.0
    %763 = vmatprep.subr.mxu0 0.0
    %764 = vmatpush1.msra.mxu0 0.0
    %765 = vmatprep.subr.mxu0 0.0
    %766 = vmatpush1.msra.mxu0 0.0
    %767 = vmatprep.subr.mxu0 0.0
    %768 = vmatpush1.msra.mxu0 0.0
    %769 = vmatprep.subr.mxu0 0.0
    %770 = vmatpush1.msra.mxu0 0.0
    %771 = vmatprep.subr.mxu0 0.0
    %772 = vmatpush1.msra.mxu0 0.0
    %773 = vmatprep.subr.mxu0 0.0
    %774 = vmatpush1.msra.mxu0 0.0
    %775 = vmatprep.subr.mxu0 0.0
    %776 = vmatpush1.msra.mxu0 0.0
    %777 = vmatprep.subr.mxu0 0.0
    %778 = vmatpush1.msra.mxu0 0.0
    %779 = vmatprep.subr.mxu0 0.0
    %780 = vmatpush1.msra.mxu0 0.0
    %781 = vmatprep.subr.mxu0 0.0
    %782 = vmatpush1.msra.mxu0 0.0
    %783 = vmatprep.subr.mxu0 0.0
    %784 = vmatpush1.msra.mxu0 0.0
    %785 = vmatprep.subr.mxu0 0.0
    %786 = vmatpush1.msra.mxu0 %v49
    %787 = vmatprep.subr.mxu0 0.0
    %788 = vmatpush2.msra.mxu0 0.0
    %789 = vmatprep.subr.mxu0 0.0
    %790 = vmatpush2.msra.mxu0 0.0
    %791 = vmatprep.subr.mxu0 0.0
    %792 = vmatpush2.msra.mxu0 0.0
    %793 = vmatprep.subr.mxu0 0.0
    %794 = vmatpush2.msra.mxu0 0.0
    %795 = vmatprep.subr.mxu0 0.0
    %796 = vmatpush2.msra.mxu0 0.0
    %797 = vmatprep.subr.mxu0 0.0
    %798 = vmatpush2.msra.mxu0 0.0
    %799 = vmatprep.subr.mxu0 0.0
    %800 = vmatpush2.msra.mxu0 0.0
    %801 = vmatprep.subr.mxu0 0.0
    %802 = vmatpush2.msra.mxu0 0.0
    %803 = vmatprep.subr.mxu0 0.0
    %804 = vmatpush2.msra.mxu0 0.0
    %805 = vmatprep.subr.mxu0 0.0
    %806 = vmatpush2.msra.mxu0 0.0
    %807 = vmatprep.subr.mxu0 0.0
    %808 = vmatpush2.msra.mxu0 0.0
    %809 = vmatprep.subr.mxu0 0.0
    %810 = vmatpush2.msra.mxu0 0.0
    %811 = vmatprep.subr.mxu0 0.0
    %812 = vmatpush2.msra.mxu0 0.0
    %813 = vmatprep.subr.mxu0 0.0
    %814 = vmatpush2.msra.mxu0 0.0
    %815 = vmatprep.subr.mxu0 0.0
    %816 = vmatpush2.msra.mxu0 0.0
    %817 = vmatprep.subr.mxu0 0.0
    %818 = vmatpush2.msra.mxu0 0.0
    %819 = vmatprep.mubr.f32.mxu0 0.0
    %820 = vmatmul.mubr.f32.gmra.mxu0 %v753
    %v821 = vpop.f32.mrf.mxu0
    %v822 = vadd.f32 0.0, %v821
    %v823 = vpop.f32.mrf.mxu0
    %824 = vdwg.mxu0
    %826 = vset.pattern.permute.xlu0 0
    %827 = vperm.xlu0 %826, %v498
    %v828 = vpop.permute.xlu0 %827
    %v829 = vlaneseq
    %v830 = vshrl.u32 %v829, 7
    %v831 = vsub.s32 %v256, %v830
    %v832 = vrot.slane %v828, %v831
    %v833 = vsel %vm304, %v832, 0
    %835 = vmatprep.subr.mxu0 0.0
    %836 = vmatpush1.msra.mxu0 0.0
    %837 = vmatprep.subr.mxu0 0.0
    %838 = vmatpush1.msra.mxu0 0.0
    %839 = vmatprep.subr.mxu0 0.0
    %840 = vmatpush1.msra.mxu0 0.0
    %841 = vmatprep.subr.mxu0 0.0
    %842 = vmatpush1.msra.mxu0 0.0
    %843 = vmatprep.subr.mxu0 0.0
    %844 = vmatpush1.msra.mxu0 0.0
    %845 = vmatprep.subr.mxu0 0.0
    %846 = vmatpush1.msra.mxu0 0.0
    %847 = vmatprep.subr.mxu0 0.0
    %848 = vmatpush1.msra.mxu0 0.0
    %849 = vmatprep.subr.mxu0 0.0
    %850 = vmatpush1.msra.mxu0 0.0
    %851 = vmatprep.subr.mxu0 0.0
    %852 = vmatpush1.msra.mxu0 0.0
    %853 = vmatprep.subr.mxu0 0.0
    %854 = vmatpush1.msra.mxu0 0.0
    %855 = vmatprep.subr.mxu0 0.0
    %856 = vmatpush1.msra.mxu0 0.0
    %857 = vmatprep.subr.mxu0 0.0
    %858 = vmatpush1.msra.mxu0 0.0
    %859 = vmatprep.subr.mxu0 0.0
    %860 = vmatpush1.msra.mxu0 0.0
    %861 = vmatprep.subr.mxu0 0.0
    %862 = vmatpush1.msra.mxu0 0.0
    %863 = vmatprep.subr.mxu0 0.0
    %864 = vmatpush1.msra.mxu0 0.0
    %865 = vmatprep.subr.mxu0 0.0
    %866 = vmatpush1.msra.mxu0 %v50
    %867 = vmatprep.subr.mxu0 0.0
    %868 = vmatpush2.msra.mxu0 0.0
    %869 = vmatprep.subr.mxu0 0.0
    %870 = vmatpush2.msra.mxu0 0.0
    %871 = vmatprep.subr.mxu0 0.0
    %872 = vmatpush2.msra.mxu0 0.0
    %873 = vmatprep.subr.mxu0 0.0
    %874 = vmatpush2.msra.mxu0 0.0
    %875 = vmatprep.subr.mxu0 0.0
    %876 = vmatpush2.msra.mxu0 0.0
    %877 = vmatprep.subr.mxu0 0.0
    %878 = vmatpush2.msra.mxu0 0.0
    %879 = vmatprep.subr.mxu0 0.0
    %880 = vmatpush2.msra.mxu0 0.0
    %881 = vmatprep.subr.mxu0 0.0
    %882 = vmatpush2.msra.mxu0 0.0
    %883 = vmatprep.subr.mxu0 0.0
    %884 = vmatpush2.msra.mxu0 0.0
    %885 = vmatprep.subr.mxu0 0.0
    %886 = vmatpush2.msra.mxu0 0.0
    %887 = vmatprep.subr.mxu0 0.0
    %888 = vmatpush2.msra.mxu0 0.0
    %889 = vmatprep.subr.mxu0 0.0
    %890 = vmatpush2.msra.mxu0 0.0
    %891 = vmatprep.subr.mxu0 0.0
    %892 = vmatpush2.msra.mxu0 0.0
    %893 = vmatprep.subr.mxu0 0.0
    %894 = vmatpush2.msra.mxu0 0.0
    %895 = vmatprep.subr.mxu0 0.0
    %896 = vmatpush2.msra.mxu0 0.0
    %897 = vmatprep.subr.mxu0 0.0
    %898 = vmatpush2.msra.mxu0 0.0
    %899 = vmatprep.mubr.f32.mxu0 0.0
    %900 = vmatmul.mubr.f32.gmra.mxu0 %v833
    %v901 = vpop.f32.mrf.mxu0
    %v902 = vadd.f32 0.0, %v901
    %v903 = vpop.f32.mrf.mxu0
    %904 = vdwg.mxu0
    %906 = vset.pattern.permute.xlu0 0
    %907 = vperm.xlu0 %906, %v500
    %v908 = vpop.permute.xlu0 %907
    %v909 = vlaneseq
    %v910 = vshrl.u32 %v909, 7
    %v911 = vsub.s32 %v256, %v910
    %v912 = vrot.slane %v908, %v911
    %v913 = vsel %vm304, %v912, 0
    %915 = vmatprep.subr.mxu0 0.0
    %916 = vmatpush1.msra.mxu0 0.0
    %917 = vmatprep.subr.mxu0 0.0
    %918 = vmatpush1.msra.mxu0 0.0
    %919 = vmatprep.subr.mxu0 0.0
    %920 = vmatpush1.msra.mxu0 0.0
    %921 = vmatprep.subr.mxu0 0.0
    %922 = vmatpush1.msra.mxu0 0.0
    %923 = vmatprep.subr.mxu0 0.0
    %924 = vmatpush1.msra.mxu0 0.0
    %925 = vmatprep.subr.mxu0 0.0
    %926 = vmatpush1.msra.mxu0 0.0
    %927 = vmatprep.subr.mxu0 0.0
    %928 = vmatpush1.msra.mxu0 0.0
    %929 = vmatprep.subr.mxu0 0.0
    %930 = vmatpush1.msra.mxu0 0.0
    %931 = vmatprep.subr.mxu0 0.0
    %932 = vmatpush1.msra.mxu0 0.0
    %933 = vmatprep.subr.mxu0 0.0
    %934 = vmatpush1.msra.mxu0 0.0
    %935 = vmatprep.subr.mxu0 0.0
    %936 = vmatpush1.msra.mxu0 0.0
    %937 = vmatprep.subr.mxu0 0.0
    %938 = vmatpush1.msra.mxu0 0.0
    %939 = vmatprep.subr.mxu0 0.0
    %940 = vmatpush1.msra.mxu0 0.0
    %941 = vmatprep.subr.mxu0 0.0
    %942 = vmatpush1.msra.mxu0 0.0
    %943 = vmatprep.subr.mxu0 0.0
    %944 = vmatpush1.msra.mxu0 0.0
    %945 = vmatprep.subr.mxu0 0.0
    %946 = vmatpush1.msra.mxu0 %v51
    %947 = vmatprep.subr.mxu0 0.0
    %948 = vmatpush2.msra.mxu0 0.0
    %949 = vmatprep.subr.mxu0 0.0
    %950 = vmatpush2.msra.mxu0 0.0
    %951 = vmatprep.subr.mxu0 0.0
    %952 = vmatpush2.msra.mxu0 0.0
    %953 = vmatprep.subr.mxu0 0.0
    %954 = vmatpush2.msra.mxu0 0.0
    %955 = vmatprep.subr.mxu0 0.0
    %956 = vmatpush2.msra.mxu0 0.0
    %957 = vmatprep.subr.mxu0 0.0
    %958 = vmatpush2.msra.mxu0 0.0
    %959 = vmatprep.subr.mxu0 0.0
    %960 = vmatpush2.msra.mxu0 0.0
    %961 = vmatprep.subr.mxu0 0.0
    %962 = vmatpush2.msra.mxu0 0.0
    %963 = vmatprep.subr.mxu0 0.0
    %964 = vmatpush2.msra.mxu0 0.0
    %965 = vmatprep.subr.mxu0 0.0
    %966 = vmatpush2.msra.mxu0 0.0
    %967 = vmatprep.subr.mxu0 0.0
    %968 = vmatpush2.msra.mxu0 0.0
    %969 = vmatprep.subr.mxu0 0.0
    %970 = vmatpush2.msra.mxu0 0.0
    %971 = vmatprep.subr.mxu0 0.0
    %972 = vmatpush2.msra.mxu0 0.0
    %973 = vmatprep.subr.mxu0 0.0
    %974 = vmatpush2.msra.mxu0 0.0
    %975 = vmatprep.subr.mxu0 0.0
    %976 = vmatpush2.msra.mxu0 0.0
    %977 = vmatprep.subr.mxu0 0.0
    %978 = vmatpush2.msra.mxu0 0.0
    %979 = vmatprep.mubr.f32.mxu0 0.0
    %980 = vmatmul.mubr.f32.gmra.mxu0 %v913
    %v981 = vpop.f32.mrf.mxu0
    %v982 = vadd.f32 0.0, %v981
    %v983 = vpop.f32.mrf.mxu0
    %984 = vdwg.mxu0
    %986 = vset.pattern.permute.xlu0 0
    %987 = vperm.xlu0 %986, %v502
    %v988 = vpop.permute.xlu0 %987
    %v989 = vlaneseq
    %v990 = vshrl.u32 %v989, 7
    %v991 = vsub.s32 %v256, %v990
    %v992 = vrot.slane %v988, %v991
    %v993 = vsel %vm304, %v992, 0
    %995 = vmatprep.subr.mxu0 0.0
    %996 = vmatpush1.msra.mxu0 0.0
    %997 = vmatprep.subr.mxu0 0.0
    %998 = vmatpush1.msra.mxu0 0.0
    %999 = vmatprep.subr.mxu0 0.0
    %1000 = vmatpush1.msra.mxu0 0.0
    %1001 = vmatprep.subr.mxu0 0.0
    %1002 = vmatpush1.msra.mxu0 0.0
    %1003 = vmatprep.subr.mxu0 0.0
    %1004 = vmatpush1.msra.mxu0 0.0
    %1005 = vmatprep.subr.mxu0 0.0
    %1006 = vmatpush1.msra.mxu0 0.0
    %1007 = vmatprep.subr.mxu0 0.0
    %1008 = vmatpush1.msra.mxu0 0.0
    %1009 = vmatprep.subr.mxu0 0.0
    %1010 = vmatpush1.msra.mxu0 0.0
    %1011 = vmatprep.subr.mxu0 0.0
    %1012 = vmatpush1.msra.mxu0 0.0
    %1013 = vmatprep.subr.mxu0 0.0
    %1014 = vmatpush1.msra.mxu0 0.0
    %1015 = vmatprep.subr.mxu0 0.0
    %1016 = vmatpush1.msra.mxu0 0.0
    %1017 = vmatprep.subr.mxu0 0.0
    %1018 = vmatpush1.msra.mxu0 0.0
    %1019 = vmatprep.subr.mxu0 0.0
    %1020 = vmatpush1.msra.mxu0 0.0
    %1021 = vmatprep.subr.mxu0 0.0
    %1022 = vmatpush1.msra.mxu0 0.0
    %1023 = vmatprep.subr.mxu0 0.0
    %1024 = vmatpush1.msra.mxu0 0.0
    %1025 = vmatprep.subr.mxu0 0.0
    %1026 = vmatpush1.msra.mxu0 %v52
    %1027 = vmatprep.subr.mxu0 0.0
    %1028 = vmatpush2.msra.mxu0 0.0
    %1029 = vmatprep.subr.mxu0 0.0
    %1030 = vmatpush2.msra.mxu0 0.0
    %1031 = vmatprep.subr.mxu0 0.0
    %1032 = vmatpush2.msra.mxu0 0.0
    %1033 = vmatprep.subr.mxu0 0.0
    %1034 = vmatpush2.msra.mxu0 0.0
    %1035 = vmatprep.subr.mxu0 0.0
    %1036 = vmatpush2.msra.mxu0 0.0
    %1037 = vmatprep.subr.mxu0 0.0
    %1038 = vmatpush2.msra.mxu0 0.0
    %1039 = vmatprep.subr.mxu0 0.0
    %1040 = vmatpush2.msra.mxu0 0.0
    %1041 = vmatprep.subr.mxu0 0.0
    %1042 = vmatpush2.msra.mxu0 0.0
    %1043 = vmatprep.subr.mxu0 0.0
    %1044 = vmatpush2.msra.mxu0 0.0
    %1045 = vmatprep.subr.mxu0 0.0
    %1046 = vmatpush2.msra.mxu0 0.0
    %1047 = vmatprep.subr.mxu0 0.0
    %1048 = vmatpush2.msra.mxu0 0.0
    %1049 = vmatprep.subr.mxu0 0.0
    %1050 = vmatpush2.msra.mxu0 0.0
    %1051 = vmatprep.subr.mxu0 0.0
    %1052 = vmatpush2.msra.mxu0 0.0
    %1053 = vmatprep.subr.mxu0 0.0
    %1054 = vmatpush2.msra.mxu0 0.0
    %1055 = vmatprep.subr.mxu0 0.0
    %1056 = vmatpush2.msra.mxu0 0.0
    %1057 = vmatprep.subr.mxu0 0.0
    %1058 = vmatpush2.msra.mxu0 0.0
    %1059 = vmatprep.mubr.f32.mxu0 0.0
    %1060 = vmatmul.mubr.f32.gmra.mxu0 %v993
    %v1061 = vpop.f32.mrf.mxu0
    %v1062 = vadd.f32 0.0, %v1061
    %v1063 = vpop.f32.mrf.mxu0
    %1064 = vdwg.mxu0
    %1066 = vset.pattern.permute.xlu0 0
    %1067 = vperm.xlu0 %1066, %v504
    %v1068 = vpop.permute.xlu0 %1067
    %v1069 = vlaneseq
    %v1070 = vshrl.u32 %v1069, 7
    %v1071 = vsub.s32 %v256, %v1070
    %v1072 = vrot.slane %v1068, %v1071
    %v1073 = vsel %vm304, %v1072, 0
    %1075 = vmatprep.subr.mxu0 0.0
    %1076 = vmatpush1.msra.mxu0 0.0
    %1077 = vmatprep.subr.mxu0 0.0
    %1078 = vmatpush1.msra.mxu0 0.0
    %1079 = vmatprep.subr.mxu0 0.0
    %1080 = vmatpush1.msra.mxu0 0.0
    %1081 = vmatprep.subr.mxu0 0.0
    %1082 = vmatpush1.msra.mxu0 0.0
    %1083 = vmatprep.subr.mxu0 0.0
    %1084 = vmatpush1.msra.mxu0 0.0
    %1085 = vmatprep.subr.mxu0 0.0
    %1086 = vmatpush1.msra.mxu0 0.0
    %1087 = vmatprep.subr.mxu0 0.0
    %1088 = vmatpush1.msra.mxu0 0.0
    %1089 = vmatprep.subr.mxu0 0.0
    %1090 = vmatpush1.msra.mxu0 0.0
    %1091 = vmatprep.subr.mxu0 0.0
    %1092 = vmatpush1.msra.mxu0 0.0
    %1093 = vmatprep.subr.mxu0 0.0
    %1094 = vmatpush1.msra.mxu0 0.0
    %1095 = vmatprep.subr.mxu0 0.0
    %1096 = vmatpush1.msra.mxu0 0.0
    %1097 = vmatprep.subr.mxu0 0.0
    %1098 = vmatpush1.msra.mxu0 0.0
    %1099 = vmatprep.subr.mxu0 0.0
    %1100 = vmatpush1.msra.mxu0 0.0
    %1101 = vmatprep.subr.mxu0 0.0
    %1102 = vmatpush1.msra.mxu0 0.0
    %1103 = vmatprep.subr.mxu0 0.0
    %1104 = vmatpush1.msra.mxu0 0.0
    %1105 = vmatprep.subr.mxu0 0.0
    %1106 = vmatpush1.msra.mxu0 %v53
    %1107 = vmatprep.subr.mxu0 0.0
    %1108 = vmatpush2.msra.mxu0 0.0
    %1109 = vmatprep.subr.mxu0 0.0
    %1110 = vmatpush2.msra.mxu0 0.0
    %1111 = vmatprep.subr.mxu0 0.0
    %1112 = vmatpush2.msra.mxu0 0.0
    %1113 = vmatprep.subr.mxu0 0.0
    %1114 = vmatpush2.msra.mxu0 0.0
    %1115 = vmatprep.subr.mxu0 0.0
    %1116 = vmatpush2.msra.mxu0 0.0
    %1117 = vmatprep.subr.mxu0 0.0
    %1118 = vmatpush2.msra.mxu0 0.0
    %1119 = vmatprep.subr.mxu0 0.0
    %1120 = vmatpush2.msra.mxu0 0.0
    %1121 = vmatprep.subr.mxu0 0.0
    %1122 = vmatpush2.msra.mxu0 0.0
    %1123 = vmatprep.subr.mxu0 0.0
    %1124 = vmatpush2.msra.mxu0 0.0
    %1125 = vmatprep.subr.mxu0 0.0
    %1126 = vmatpush2.msra.mxu0 0.0
    %1127 = vmatprep.subr.mxu0 0.0
    %1128 = vmatpush2.msra.mxu0 0.0
    %1129 = vmatprep.subr.mxu0 0.0
    %1130 = vmatpush2.msra.mxu0 0.0
    %1131 = vmatprep.subr.mxu0 0.0
    %1132 = vmatpush2.msra.mxu0 0.0
    %1133 = vmatprep.subr.mxu0 0.0
    %1134 = vmatpush2.msra.mxu0 0.0
    %1135 = vmatprep.subr.mxu0 0.0
    %1136 = vmatpush2.msra.mxu0 0.0
    %1137 = vmatprep.subr.mxu0 0.0
    %1138 = vmatpush2.msra.mxu0 0.0
    %1139 = vmatprep.mubr.f32.mxu0 0.0
    %1140 = vmatmul.mubr.f32.gmra.mxu0 %v1073
    %v1141 = vpop.f32.mrf.mxu0
    %v1142 = vadd.f32 0.0, %v1141
    %v1143 = vpop.f32.mrf.mxu0
    %1144 = vdwg.mxu0
    %v1153 = vrot.slane %v662, 7
    %v1154 = vsel %vm289, %v1153, %v582
    %v1155 = vrot.slane %v742, 6
    %v1156 = vsel %vm291, %v1155, %v1154
    %v1157 = vrot.slane %v822, 5
    %v1158 = vsel %vm293, %v1157, %v1156
    %v1159 = vrot.slane %v902, 4
    %v1160 = vsel %vm295, %v1159, %v1158
    %v1161 = vrot.slane %v982, 3
    %v1162 = vsel %vm297, %v1161, %v1160
    %v1163 = vrot.slane %v1062, 2
    %v1164 = vsel %vm299, %v1163, %v1162
    %v1165 = vrot.slane %v1142, 1
    %v1166 = vsel %vm301, %v1165, %v1164
    %1168 = vst.msk [vmem:[#allocation7] sm:$0xff] %vm58, %v1166
    %v1169 = vsel %vm289, %v592, %v512
    %v1170 = vsel %vm291, %v672, %v1169
    %v1171 = vsel %vm293, %v752, %v1170
    %v1172 = vsel %vm295, %v832, %v1171
    %v1173 = vsel %vm297, %v912, %v1172
    %v1174 = vsel %vm299, %v992, %v1173
    %v1175 = vsel %vm301, %v1072, %v1174
    %1177 = vst.msk [vmem:[#allocation8] sm:$0xff] %vm304, %v1175
    // Predicated region
    $region22: #{tpu_custom_call.1} parent=1 // pred_check
      _
    $region23: #{tpu_custom_call.1} parent=1 // pred_check_branch
      %1179 = sbr.rel (0) target = $region25
    $region24: #{tpu_custom_call.1} parent=1 // pred_region
      %s1181 = ssub.s32 128, 128
      %1182 = vsyncadd [#allocation4], %s1181
      %s1184 = sshll.u32 [#allocation7], 4
      %s1185 = int_to_ptr.vmem [resolvable:$true] %s1184
      %1187 = dma.vmem_to_hbm [thread:$0]  %s1185, 128, %s3, [#allocation4]
    $region25: #{tpu_custom_call.1} parent=1 // pred_fallthru
      _
    // Predicated region
    $region26: #{tpu_custom_call.1} parent=1 // pred_check
      _
    $region27: #{tpu_custom_call.1} parent=1 // pred_check_branch
      %1189 = sbr.rel (0) target = $region29
    $region28: #{tpu_custom_call.1} parent=1 // pred_region
      %s1191 = ssub.s32 128, 128
      %1192 = vsyncadd [#allocation9], %s1191
      %s1194 = sshll.u32 [#allocation8], 4
      %s1195 = int_to_ptr.vmem [resolvable:$true] %s1194
      %1197 = dma.vmem_to_hbm [thread:$0]  %s1195, 128, %s4, [#allocation9]
    $region29: #{tpu_custom_call.1} parent=1 // pred_fallthru
      _
    // Predicated region
    $region30: #{tpu_custom_call.1} parent=1 // pred_check
      _
    $region31: #{tpu_custom_call.1} parent=1 // pred_check_branch
      %1199 = sbr.rel (0) target = $region33
    $region32: #{tpu_custom_call.1} parent=1 // pred_region
      %1200 = dma.done [#allocation4], 128
    $region33: #{tpu_custom_call.1} parent=1 // pred_fallthru
      _
    // Predicated region
    $region34: #{tpu_custom_call.1} parent=1 // pred_check
      _
    $region35: #{tpu_custom_call.1} parent=1 // pred_check_branch
      %1202 = sbr.rel (0) target = $region37
    $region36: #{tpu_custom_call.1} parent=1 // pred_region
      %1203 = dma.done [#allocation9], 128
    $region37: #{tpu_custom_call.1} parent=1 // pred_fallthru
      _
    %1204 = vsyncpa [#allocation3], 1
    %1205 = vsyncpa [#allocation6], 1
    %1206 = vsyncpa [#allocation4], 1
    %1207 = vsyncpa [#allocation9], 1

// kernel: tpu_custom_call.1
$region0: #{tpu_custom_call.1}
  #allocation0 [shape = 'u32[]', space=smem, size = 0x4, offset = 0x4, fixed_abs, tag = 'smem constant byte address 0x4 - core index']
  #allocation1 [shape = 'u32[144,128]{1,0:T(1,128)}', space=vmem, size = 0x12000, scoped, tag = 'internal scratch']
  %s0 = inlined_call_operand.hbm [shape: f32[8,8,32], index: 0, kind: input, shape index: {}]
  %s1 = inlined_call_operand.hbm [shape: f32[32,32], index: 1, kind: input, shape index: {}]
  %s2 = inlined_call_operand.vmem [shape: f32[1,32], index: 2, kind: input, shape index: {}]
  %s3 = inlined_call_operand.hbm [shape: f32[8,32], index: 3, kind: output, shape index: {0}]
  %s4 = inlined_call_operand.hbm [shape: f32[8,8], index: 4, kind: output, shape index: {1}]
  %5 = xla_tuple %s3, %s4
  %s6 = sld [smem:[#allocation0]]
  $region38: #{tpu_custom_call.1} parent=0
    _
  %s8 = ssub.s32 1, %s6
  %s9 = scalar_select 0, %s8, %s6
  $region1: #{tpu_custom_call.1} parent=0
    #allocation2 [shape = 'u8[32768]{0}', space=vmem, size = 0x8000, scoped, tag = 'input window, operand 0, single buffered']
    #allocation3 [shape = 's32[1]{0}', space=sflag, size = 0x4, scoped, tag = 'scoped memory for tpu_custom_call.1']
    #allocation4 [shape = 's32[1]{0}', space=sflag, size = 0x4, scoped, tag = 'scoped memory for tpu_custom_call.1']
    #allocation5 [shape = 'u8[16384]{0}', space=vmem, size = 0x4000, scoped, tag = 'input window, operand 1, single buffered']
    #allocation6 [shape = 's32[1]{0}', space=sflag, size = 0x4, scoped, tag = 'scoped memory for tpu_custom_call.1']
    #allocation7 [shape = 'u8[4096]{0}', space=vmem, size = 0x1000, scoped, tag = 'output window, operand 0, single buffered']
    #allocation8 [shape = 'u8[4096]{0}', space=vmem, size = 0x1000, scoped, tag = 'output window, operand 1, single buffered']
    #allocation9 [shape = 's32[1]{0}', space=sflag, size = 0x4, scoped, tag = 'scoped memory for tpu_custom_call.1']
    %10 = vsyncpa [#allocation3], 0
    %11 = vsyncpa [#allocation6], 0
    %12 = vsyncpa [#allocation4], 0
    %13 = vsyncpa [#allocation9], 0
    // Predicated region
    $region2: #{tpu_custom_call.1} parent=1 // pred_check
      _
    $region3: #{tpu_custom_call.1} parent=1 // pred_check_branch
      %15 = sbr.rel (0) target = $region5
    $region4: #{tpu_custom_call.1} parent=1 // pred_region
      %s17 = ssub.s32 1024, 1024
      %18 = vsyncadd [#allocation3], %s17
      %s19 = sshll.u32 [#allocation2], 4
      %s20 = int_to_ptr.vmem [resolvable:$true] %s19
      %25 = dma.hbm_to_vmem [thread:$0]  %s0, 1024, %s20, [#allocation3], 128, 128, 8
    $region5: #{tpu_custom_call.1} parent=1 // pred_fallthru
      _
    // Predicated region
    $region6: #{tpu_custom_call.1} parent=1 // pred_check
      _
    $region7: #{tpu_custom_call.1} parent=1 // pred_check_branch
      %27 = sbr.rel (0) target = $region9
    $region8: #{tpu_custom_call.1} parent=1 // pred_region
      %s29 = ssub.s32 512, 512
      %30 = vsyncadd [#allocation6], %s29
      %s31 = sshll.u32 [#allocation5], 4
      %s32 = int_to_ptr.vmem [resolvable:$true] %s31
      %37 = dma.hbm_to_vmem [thread:$0]  %s1, 512, %s32, [#allocation6], 128, 128, 8
    $region9: #{tpu_custom_call.1} parent=1 // pred_fallthru
      _
    // Predicated region
    $region10: #{tpu_custom_call.1} parent=1 // pred_check
      _
    $region11: #{tpu_custom_call.1} parent=1 // pred_check_branch
      %39 = sbr.rel (0) target = $region13
    $region12: #{tpu_custom_call.1} parent=1 // pred_region
      _
    $region13: #{tpu_custom_call.1} parent=1 // pred_fallthru
      _
    // Predicated region
    $region14: #{tpu_custom_call.1} parent=1 // pred_check
      _
    $region15: #{tpu_custom_call.1} parent=1 // pred_check_branch
      %41 = sbr.rel (0) target = $region17
    $region16: #{tpu_custom_call.1} parent=1 // pred_region
      %42 = dma.done [#allocation3], 1024
    $region17: #{tpu_custom_call.1} parent=1 // pred_fallthru
      _
    // Predicated region
    $region18: #{tpu_custom_call.1} parent=1 // pred_check
      _
    $region19: #{tpu_custom_call.1} parent=1 // pred_check_branch
      %44 = sbr.rel (0) target = $region21
    $region20: #{tpu_custom_call.1} parent=1 // pred_region
      %45 = dma.done [#allocation6], 512
    $region21: #{tpu_custom_call.1} parent=1 // pred_fallthru
      _
    %v46 = vld [vmem:[#allocation2] sm:$0xff]
    %v47 = vld [vmem:[#allocation2 + $0x8] sm:$0xff]
    %v48 = vld [vmem:[#allocation2 + $0x10] sm:$0xff]
    %v49 = vld [vmem:[#allocation2 + $0x18] sm:$0xff]
    %v50 = vld [vmem:[#allocation2 + $0x20] sm:$0xff]
    %v51 = vld [vmem:[#allocation2 + $0x28] sm:$0xff]
    %v52 = vld [vmem:[#allocation2 + $0x30] sm:$0xff]
    %v53 = vld [vmem:[#allocation2 + $0x38] sm:$0xff]
    %v54 = vld [vmem:[#allocation5] sm:$0xff]
    %v55 = vld [vmem:[#allocation5 + $0x8] sm:$0xff]
    %v56 = vld [vmem:[#allocation5 + $0x10] sm:$0xff]
    %v57 = vld [vmem:[#allocation5 + $0x18] sm:$0xff]
    %vm58 = vcmask 261120
    %v60 = vsel %vm58, %v46, 0
    %v63 = vsel %vm58, %v47, 0
    %v66 = vsel %vm58, %v48, 0
    %v69 = vsel %vm58, %v49, 0
    %v72 = vsel %vm58, %v50, 0
    %v75 = vsel %vm58, %v51, 0
    %v78 = vsel %vm58, %v52, 0
    %v81 = vsel %vm58, %v53, 0
    %v84 = vsel %vm58, %v54, 0
    %v87 = vsel %vm58, %v55, 0
    %v90 = vsel %vm58, %v56, 0
    %v93 = vsel %vm58, %v57, 0
    %95 = vmatprep.subr.mxu0 0.0
    %96 = vmatpush1.xpose.msra.mxu0 0.0
    %97 = vmatprep.subr.mxu0 0.0
    %98 = vmatpush1.xpose.msra.mxu0 0.0
    %99 = vmatprep.subr.mxu0 0.0
    %100 = vmatpush1.xpose.msra.mxu0 0.0
    %101 = vmatprep.subr.mxu0 0.0
    %102 = vmatpush1.xpose.msra.mxu0 0.0
    %103 = vmatprep.subr.mxu0 0.0
    %104 = vmatpush1.xpose.msra.mxu0 0.0
    %105 = vmatprep.subr.mxu0 0.0
    %106 = vmatpush1.xpose.msra.mxu0 0.0
    %107 = vmatprep.subr.mxu0 0.0
    %108 = vmatpush1.xpose.msra.mxu0 0.0
    %109 = vmatprep.subr.mxu0 0.0
    %110 = vmatpush1.xpose.msra.mxu0 0.0
    %111 = vmatprep.subr.mxu0 0.0
    %112 = vmatpush1.xpose.msra.mxu0 0.0
    %113 = vmatprep.subr.mxu0 0.0
    %114 = vmatpush1.xpose.msra.mxu0 0.0
    %115 = vmatprep.subr.mxu0 0.0
    %116 = vmatpush1.xpose.msra.mxu0 0.0
    %117 = vmatprep.subr.mxu0 0.0
    %118 = vmatpush1.xpose.msra.mxu0 0.0
    %119 = vmatprep.subr.mxu0 0.0
    %120 = vmatpush1.xpose.msra.mxu0 %v93
    %121 = vmatprep.subr.mxu0 0.0
    %122 = vmatpush1.xpose.msra.mxu0 %v90
    %123 = vmatprep.subr.mxu0 0.0
    %124 = vmatpush1.xpose.msra.mxu0 %v87
    %125 = vmatprep.subr.mxu0 0.0
    %126 = vmatpush1.xpose.msra.mxu0 %v84
    %127 = vmatprep.subr.mxu0 0.0
    %128 = vmatpush2.xpose.msra.mxu0 0.0
    %129 = vmatprep.subr.mxu0 0.0
    %130 = vmatpush2.xpose.msra.mxu0 0.0
    %131 = vmatprep.subr.mxu0 0.0
    %132 = vmatpush2.xpose.msra.mxu0 0.0
    %133 = vmatprep.subr.mxu0 0.0
    %134 = vmatpush2.xpose.msra.mxu0 0.0
    %135 = vmatprep.subr.mxu0 0.0
    %136 = vmatpush2.xpose.msra.mxu0 0.0
    %137 = vmatprep.subr.mxu0 0.0
    %138 = vmatpush2.xpose.msra.mxu0 0.0
    %139 = vmatprep.subr.mxu0 0.0
    %140 = vmatpush2.xpose.msra.mxu0 0.0
    %141 = vmatprep.subr.mxu0 0.0
    %142 = vmatpush2.xpose.msra.mxu0 0.0
    %143 = vmatprep.subr.mxu0 0.0
    %144 = vmatpush2.xpose.msra.mxu0 0.0
    %145 = vmatprep.subr.mxu0 0.0
    %146 = vmatpush2.xpose.msra.mxu0 0.0
    %147 = vmatprep.subr.mxu0 0.0
    %148 = vmatpush2.xpose.msra.mxu0 0.0
    %149 = vmatprep.subr.mxu0 0.0
    %150 = vmatpush2.xpose.msra.mxu0 0.0
    %151 = vmatprep.subr.mxu0 0.0
    %152 = vmatpush2.xpose.msra.mxu0 0.0
    %153 = vmatprep.subr.mxu0 0.0
    %154 = vmatpush2.xpose.msra.mxu0 0.0
    %155 = vmatprep.subr.mxu0 0.0
    %156 = vmatpush2.xpose.msra.mxu0 0.0
    %157 = vmatprep.subr.mxu0 0.0
    %158 = vmatpush2.xpose.msra.mxu0 0.0
    %159 = vmatprep.mubr.f32.mxu0 0.0
    %160 = vmatmul.mubr.f32.gmra.mxu0 %v60
    %v161 = vpop.f32.mrf.mxu0
    %v162 = vadd.f32 0.0, %v161
    %v163 = vpop.f32.mrf.mxu0
    %164 = vmatprep.mubr.f32.mxu0 0.0
    %165 = vmatmul.mubr.f32.gmra.mxu0 %v63
    %v166 = vpop.f32.mrf.mxu0
    %v167 = vadd.f32 0.0, %v166
    %v168 = vpop.f32.mrf.mxu0
    %169 = vmatprep.mubr.f32.mxu0 0.0
    %170 = vmatmul.mubr.f32.gmra.mxu0 %v66
    %v171 = vpop.f32.mrf.mxu0
    %v172 = vadd.f32 0.0, %v171
    %v173 = vpop.f32.mrf.mxu0
    %174 = vmatprep.mubr.f32.mxu0 0.0
    %175 = vmatmul.mubr.f32.gmra.mxu0 %v69
    %v176 = vpop.f32.mrf.mxu0
    %v177 = vadd.f32 0.0, %v176
    %v178 = vpop.f32.mrf.mxu0
    %179 = vmatprep.mubr.f32.mxu0 0.0
    %180 = vmatmul.mubr.f32.gmra.mxu0 %v72
    %v181 = vpop.f32.mrf.mxu0
    %v182 = vadd.f32 0.0, %v181
    %v183 = vpop.f32.mrf.mxu0
    %184 = vmatprep.mubr.f32.mxu0 0.0
    %185 = vmatmul.mubr.f32.gmra.mxu0 %v75
    %v186 = vpop.f32.mrf.mxu0
    %v187 = vadd.f32 0.0, %v186
    %v188 = vpop.f32.mrf.mxu0
    %189 = vmatprep.mubr.f32.mxu0 0.0
    %190 = vmatmul.mubr.f32.gmra.mxu0 %v78
    %v191 = vpop.f32.mrf.mxu0
    %v192 = vadd.f32 0.0, %v191
    %v193 = vpop.f32.mrf.mxu0
    %194 = vmatprep.mubr.f32.mxu0 0.0
    %195 = vmatmul.mubr.f32.gmra.mxu0 %v81
    %v196 = vpop.f32.mrf.mxu0
    %v197 = vadd.f32 0.0, %v196
    %v198 = vpop.f32.mrf.mxu0
    %199 = vdwg.mxu0
    %v200 = vtanh.pop %v162
    %v201 = vtanh.pop %v167
    %v202 = vtanh.pop %v172
    %v203 = vtanh.pop %v177
    %v204 = vtanh.pop %v182
    %v205 = vtanh.pop %v187
    %v206 = vtanh.pop %v192
    %v207 = vtanh.pop %v197
    %v208 = vld [vmem:[%s2] sm:$0x1]
    %v210 = vlaneseq
    %v211 = vshrl.u32 %v210, 7
    %v212 = vsub.s32 0, %v211
    %v213 = vrot.slane %v208, %v212
    %v215 = vmul.f32 %v200, %v213
    %v216 = vmul.f32 %v201, %v213
    %v217 = vmul.f32 %v202, %v213
    %v218 = vmul.f32 %v203, %v213
    %v219 = vmul.f32 %v204, %v213
    %v220 = vmul.f32 %v205, %v213
    %v221 = vmul.f32 %v206, %v213
    %v222 = vmul.f32 %v207, %v213
    %v223 = vsel %vm58, %v215, 0.0
    %224 = vadd.xlane.f32.xlu0 %v223
    %v225 = vpop.xlane.xlu0 %224
    %v226 = vsel %vm58, %v216, 0.0
    %227 = vadd.xlane.f32.xlu0 %v226
    %v228 = vpop.xlane.xlu0 %227
    %v229 = vsel %vm58, %v217, 0.0
    %230 = vadd.xlane.f32.xlu0 %v229
    %v231 = vpop.xlane.xlu0 %230
    %v232 = vsel %vm58, %v218, 0.0
    %233 = vadd.xlane.f32.xlu0 %v232
    %v234 = vpop.xlane.xlu0 %233
    %v235 = vsel %vm58, %v219, 0.0
    %236 = vadd.xlane.f32.xlu0 %v235
    %v237 = vpop.xlane.xlu0 %236
    %v238 = vsel %vm58, %v220, 0.0
    %239 = vadd.xlane.f32.xlu0 %v238
    %v240 = vpop.xlane.xlu0 %239
    %v241 = vsel %vm58, %v221, 0.0
    %242 = vadd.xlane.f32.xlu0 %v241
    %v243 = vpop.xlane.xlu0 %242
    %v244 = vsel %vm58, %v222, 0.0
    %245 = vadd.xlane.f32.xlu0 %v244
    %v246 = vpop.xlane.xlu0 %245
    %v255 = vlaneseq
    %v256 = vand.u32 %v255, 127
    %v257 = vlaneseq
    %v258 = vshrl.u32 %v257, 7
    %v259 = vsub.s32 %v256, %v258
    %v260 = vrot.slane %v225, %v259
    %v261 = vlaneseq
    %v262 = vshrl.u32 %v261, 7
    %v263 = vsub.s32 %v256, %v262
    %v264 = vrot.slane %v228, %v263
    %v265 = vlaneseq
    %v266 = vshrl.u32 %v265, 7
    %v267 = vsub.s32 %v256, %v266
    %v268 = vrot.slane %v231, %v267
    %v269 = vlaneseq
    %v270 = vshrl.u32 %v269, 7
    %v271 = vsub.s32 %v256, %v270
    %v272 = vrot.slane %v234, %v271
    %v273 = vlaneseq
    %v274 = vshrl.u32 %v273, 7
    %v275 = vsub.s32 %v256, %v274
    %v276 = vrot.slane %v237, %v275
    %v277 = vlaneseq
    %v278 = vshrl.u32 %v277, 7
    %v279 = vsub.s32 %v256, %v278
    %v280 = vrot.slane %v240, %v279
    %v281 = vlaneseq
    %v282 = vshrl.u32 %v281, 7
    %v283 = vsub.s32 %v256, %v282
    %v284 = vrot.slane %v243, %v283
    %v285 = vlaneseq
    %v286 = vshrl.u32 %v285, 7
    %v287 = vsub.s32 %v256, %v286
    %v288 = vrot.slane %v246, %v287
    %vm289 = vcmask 1041409
    %v290 = vsel %vm289, %v264, %v260
    %vm291 = vcmask 1042434
    %v292 = vsel %vm291, %v268, %v290
    %vm293 = vcmask 1043459
    %v294 = vsel %vm293, %v272, %v292
    %vm295 = vcmask 1044484
    %v296 = vsel %vm295, %v276, %v294
    %vm297 = vcmask 1045509
    %v298 = vsel %vm297, %v280, %v296
    %vm299 = vcmask 1046534
    %v300 = vsel %vm299, %v284, %v298
    %vm301 = vcmask 1047559
    %v302 = vsel %vm301, %v288, %v300
    %vm304 = vcmask 64512
    %v305 = vsel %vm304, %v302, -inf
    %306 = vmax.xlane.f32.xlu0 %v305
    %v307 = vpop.xlane.xlu0 %306
    %v309 = vlaneseq
    %v310 = vshrl.u32 %v309, 7
    %v311 = vsub.s32 0, %v310
    %v312 = vrot.slane %v307, %v311
    %v313 = vlaneseq
    %v314 = vshrl.u32 %v313, 7
    %v315 = vsub.s32 1, %v314
    %v316 = vrot.slane %v307, %v315
    %v317 = vlaneseq
    %v318 = vshrl.u32 %v317, 7
    %v319 = vsub.s32 2, %v318
    %v320 = vrot.slane %v307, %v319
    %v321 = vlaneseq
    %v322 = vshrl.u32 %v321, 7
    %v323 = vsub.s32 3, %v322
    %v324 = vrot.slane %v307, %v323
    %v325 = vlaneseq
    %v326 = vshrl.u32 %v325, 7
    %v327 = vsub.s32 4, %v326
    %v328 = vrot.slane %v307, %v327
    %v329 = vlaneseq
    %v330 = vshrl.u32 %v329, 7
    %v331 = vsub.s32 5, %v330
    %v332 = vrot.slane %v307, %v331
    %v333 = vlaneseq
    %v334 = vshrl.u32 %v333, 7
    %v335 = vsub.s32 6, %v334
    %v336 = vrot.slane %v307, %v335
    %v337 = vlaneseq
    %v338 = vshrl.u32 %v337, 7
    %v339 = vsub.s32 7, %v338
    %v340 = vrot.slane %v307, %v339
    %v349 = vsub.f32 %v225, %v312
    %v350 = vsub.f32 %v228, %v316
    %v351 = vsub.f32 %v231, %v320
    %v352 = vsub.f32 %v234, %v324
    %v353 = vsub.f32 %v237, %v328
    %v354 = vsub.f32 %v240, %v332
    %v355 = vsub.f32 %v243, %v336
    %v356 = vsub.f32 %v246, %v340
    %v357 = vmul.f32 %v349, 1.442695
    %v358 = vpow.pop %v357
    %v359 = vmul.f32 %v350, 1.442695
    %v360 = vpow.pop %v359
    %v361 = vmul.f32 %v351, 1.442695
    %v362 = vpow.pop %v361
    %v363 = vmul.f32 %v352, 1.442695
    %v364 = vpow.pop %v363
    %v365 = vmul.f32 %v353, 1.442695
    %v366 = vpow.pop %v365
    %v367 = vmul.f32 %v354, 1.442695
    %v368 = vpow.pop %v367
    %v369 = vmul.f32 %v355, 1.442695
    %v370 = vpow.pop %v369
    %v371 = vmul.f32 %v356, 1.442695
    %v372 = vpow.pop %v371
    %381 = vset.pattern.permute.xlu0 0
    %382 = vperm.xlu0 %381, %v358
    %v383 = vpop.permute.xlu0 %382
    %384 = vset.pattern.permute.xlu0 0
    %385 = vperm.xlu0 %384, %v360
    %v386 = vpop.permute.xlu0 %385
    %387 = vset.pattern.permute.xlu0 0
    %388 = vperm.xlu0 %387, %v362
    %v389 = vpop.permute.xlu0 %388
    %390 = vset.pattern.permute.xlu0 0
    %391 = vperm.xlu0 %390, %v364
    %v392 = vpop.permute.xlu0 %391
    %393 = vset.pattern.permute.xlu0 0
    %394 = vperm.xlu0 %393, %v366
    %v395 = vpop.permute.xlu0 %394
    %396 = vset.pattern.permute.xlu0 0
    %397 = vperm.xlu0 %396, %v368
    %v398 = vpop.permute.xlu0 %397
    %399 = vset.pattern.permute.xlu0 0
    %400 = vperm.xlu0 %399, %v370
    %v401 = vpop.permute.xlu0 %400
    %402 = vset.pattern.permute.xlu0 0
    %403 = vperm.xlu0 %402, %v372
    %v404 = vpop.permute.xlu0 %403
    %v405 = vlaneseq
    %v406 = vshrl.u32 %v405, 7
    %v407 = vsub.s32 %v256, %v406
    %v408 = vrot.slane %v383, %v407
    %v409 = vlaneseq
    %v410 = vshrl.u32 %v409, 7
    %v411 = vsub.s32 %v256, %v410
    %v412 = vrot.slane %v386, %v411
    %v413 = vlaneseq
    %v414 = vshrl.u32 %v413, 7
    %v415 = vsub.s32 %v256, %v414
    %v416 = vrot.slane %v389, %v415
    %v417 = vlaneseq
    %v418 = vshrl.u32 %v417, 7
    %v419 = vsub.s32 %v256, %v418
    %v420 = vrot.slane %v392, %v419
    %v421 = vlaneseq
    %v422 = vshrl.u32 %v421, 7
    %v423 = vsub.s32 %v256, %v422
    %v424 = vrot.slane %v395, %v423
    %v425 = vlaneseq
    %v426 = vshrl.u32 %v425, 7
    %v427 = vsub.s32 %v256, %v426
    %v428 = vrot.slane %v398, %v427
    %v429 = vlaneseq
    %v430 = vshrl.u32 %v429, 7
    %v431 = vsub.s32 %v256, %v430
    %v432 = vrot.slane %v401, %v431
    %v433 = vlaneseq
    %v434 = vshrl.u32 %v433, 7
    %v435 = vsub.s32 %v256, %v434
    %v436 = vrot.slane %v404, %v435
    %v437 = vsel %vm289, %v412, %v408
    %v438 = vsel %vm291, %v416, %v437
    %v439 = vsel %vm293, %v420, %v438
    %v440 = vsel %vm295, %v424, %v439
    %v441 = vsel %vm297, %v428, %v440
    %v442 = vsel %vm299, %v432, %v441
    %v443 = vsel %vm301, %v436, %v442
    %v445 = vsel %vm304, %v443, 0.0
    %446 = vadd.xlane.f32.xlu0 %v445
    %v447 = vpop.xlane.xlu0 %446
    %v449 = vlaneseq
    %v450 = vshrl.u32 %v449, 7
    %v451 = vsub.s32 0, %v450
    %v452 = vrot.slane %v447, %v451
    %v453 = vlaneseq
    %v454 = vshrl.u32 %v453, 7
    %v455 = vsub.s32 1, %v454
    %v456 = vrot.slane %v447, %v455
    %v457 = vlaneseq
    %v458 = vshrl.u32 %v457, 7
    %v459 = vsub.s32 2, %v458
    %v460 = vrot.slane %v447, %v459
    %v461 = vlaneseq
    %v462 = vshrl.u32 %v461, 7
    %v463 = vsub.s32 3, %v462
    %v464 = vrot.slane %v447, %v463
    %v465 = vlaneseq
    %v466 = vshrl.u32 %v465, 7
    %v467 = vsub.s32 4, %v466
    %v468 = vrot.slane %v447, %v467
    %v469 = vlaneseq
    %v470 = vshrl.u32 %v469, 7
    %v471 = vsub.s32 5, %v470
    %v472 = vrot.slane %v447, %v471
    %v473 = vlaneseq
    %v474 = vshrl.u32 %v473, 7
    %v475 = vsub.s32 6, %v474
    %v476 = vrot.slane %v447, %v475
    %v477 = vlaneseq
    %v478 = vshrl.u32 %v477, 7
    %v479 = vsub.s32 7, %v478
    %v480 = vrot.slane %v447, %v479
    %v489 = vrcp.pop %v452
    %v490 = vmul.f32 %v358, %v489
    %v491 = vrcp.pop %v456
    %v492 = vmul.f32 %v360, %v491
    %v493 = vrcp.pop %v460
    %v494 = vmul.f32 %v362, %v493
    %v495 = vrcp.pop %v464
    %v496 = vmul.f32 %v364, %v495
    %v497 = vrcp.pop %v468
    %v498 = vmul.f32 %v366, %v497
    %v499 = vrcp.pop %v472
    %v500 = vmul.f32 %v368, %v499
    %v501 = vrcp.pop %v476
    %v502 = vmul.f32 %v370, %v501
    %v503 = vrcp.pop %v480
    %v504 = vmul.f32 %v372, %v503
    %506 = vset.pattern.permute.xlu0 0
    %507 = vperm.xlu0 %506, %v490
    %v508 = vpop.permute.xlu0 %507
    %511 = vset.pattern.permute.xlu0 0
    %512 = vperm.xlu0 %511, %v492
    %v513 = vpop.permute.xlu0 %512
    %516 = vset.pattern.permute.xlu0 0
    %517 = vperm.xlu0 %516, %v494
    %v518 = vpop.permute.xlu0 %517
    %521 = vset.pattern.permute.xlu0 0
    %522 = vperm.xlu0 %521, %v496
    %v523 = vpop.permute.xlu0 %522
    %526 = vset.pattern.permute.xlu0 0
    %527 = vperm.xlu0 %526, %v498
    %v528 = vpop.permute.xlu0 %527
    %531 = vset.pattern.permute.xlu0 0
    %532 = vperm.xlu0 %531, %v500
    %v533 = vpop.permute.xlu0 %532
    %536 = vset.pattern.permute.xlu0 0
    %537 = vperm.xlu0 %536, %v502
    %v538 = vpop.permute.xlu0 %537
    %541 = vset.pattern.permute.xlu0 0
    %542 = vperm.xlu0 %541, %v504
    %v543 = vpop.permute.xlu0 %542
    %v545 = vmul.f32 %v508, %v46
    %v546 = vmul.f32 %v513, %v47
    %v547 = vmul.f32 %v518, %v48
    %v548 = vmul.f32 %v523, %v49
    %v549 = vmul.f32 %v528, %v50
    %v550 = vmul.f32 %v533, %v51
    %v551 = vmul.f32 %v538, %v52
    %v552 = vmul.f32 %v543, %v53
    %v553 = vsel %vm58, %v545, 0.0
    %v554 = vrot.slane %v553, 4
    %v555 = vadd.f32 %v553, %v554
    %v556 = vrot.slane %v555, 2
    %v557 = vadd.f32 %v555, %v556
    %v558 = vrot.slane %v557, 1
    %v559 = vadd.f32 %v557, %v558
    %v560 = vsel %vm58, %v546, 0.0
    %v561 = vrot.slane %v560, 4
    %v562 = vadd.f32 %v560, %v561
    %v563 = vrot.slane %v562, 2
    %v564 = vadd.f32 %v562, %v563
    %v565 = vrot.slane %v564, 1
    %v566 = vadd.f32 %v564, %v565
    %v567 = vsel %vm58, %v547, 0.0
    %v568 = vrot.slane %v567, 4
    %v569 = vadd.f32 %v567, %v568
    %v570 = vrot.slane %v569, 2
    %v571 = vadd.f32 %v569, %v570
    %v572 = vrot.slane %v571, 1
    %v573 = vadd.f32 %v571, %v572
    %v574 = vsel %vm58, %v548, 0.0
    %v575 = vrot.slane %v574, 4
    %v576 = vadd.f32 %v574, %v575
    %v577 = vrot.slane %v576, 2
    %v578 = vadd.f32 %v576, %v577
    %v579 = vrot.slane %v578, 1
    %v580 = vadd.f32 %v578, %v579
    %v581 = vsel %vm58, %v549, 0.0
    %v582 = vrot.slane %v581, 4
    %v583 = vadd.f32 %v581, %v582
    %v584 = vrot.slane %v583, 2
    %v585 = vadd.f32 %v583, %v584
    %v586 = vrot.slane %v585, 1
    %v587 = vadd.f32 %v585, %v586
    %v588 = vsel %vm58, %v550, 0.0
    %v589 = vrot.slane %v588, 4
    %v590 = vadd.f32 %v588, %v589
    %v591 = vrot.slane %v590, 2
    %v592 = vadd.f32 %v590, %v591
    %v593 = vrot.slane %v592, 1
    %v594 = vadd.f32 %v592, %v593
    %v595 = vsel %vm58, %v551, 0.0
    %v596 = vrot.slane %v595, 4
    %v597 = vadd.f32 %v595, %v596
    %v598 = vrot.slane %v597, 2
    %v599 = vadd.f32 %v597, %v598
    %v600 = vrot.slane %v599, 1
    %v601 = vadd.f32 %v599, %v600
    %v602 = vsel %vm58, %v552, 0.0
    %v603 = vrot.slane %v602, 4
    %v604 = vadd.f32 %v602, %v603
    %v605 = vrot.slane %v604, 2
    %v606 = vadd.f32 %v604, %v605
    %v607 = vrot.slane %v606, 1
    %v608 = vadd.f32 %v606, %v607
    %v617 = vsel %vm289, %v566, %v559
    %v618 = vsel %vm291, %v573, %v617
    %v619 = vsel %vm293, %v580, %v618
    %v620 = vsel %vm295, %v587, %v619
    %v621 = vsel %vm297, %v594, %v620
    %v622 = vsel %vm299, %v601, %v621
    %v623 = vsel %vm301, %v608, %v622
    %625 = vst.msk [vmem:[#allocation7] sm:$0xff] %vm58, %v623
    %v626 = vlaneseq
    %v627 = vshrl.u32 %v626, 7
    %v628 = vsub.s32 %v256, %v627
    %v629 = vrot.slane %v508, %v628
    %v630 = vlaneseq
    %v631 = vshrl.u32 %v630, 7
    %v632 = vsub.s32 %v256, %v631
    %v633 = vrot.slane %v513, %v632
    %v634 = vlaneseq
    %v635 = vshrl.u32 %v634, 7
    %v636 = vsub.s32 %v256, %v635
    %v637 = vrot.slane %v518, %v636
    %v638 = vlaneseq
    %v639 = vshrl.u32 %v638, 7
    %v640 = vsub.s32 %v256, %v639
    %v641 = vrot.slane %v523, %v640
    %v642 = vlaneseq
    %v643 = vshrl.u32 %v642, 7
    %v644 = vsub.s32 %v256, %v643
    %v645 = vrot.slane %v528, %v644
    %v646 = vlaneseq
    %v647 = vshrl.u32 %v646, 7
    %v648 = vsub.s32 %v256, %v647
    %v649 = vrot.slane %v533, %v648
    %v650 = vlaneseq
    %v651 = vshrl.u32 %v650, 7
    %v652 = vsub.s32 %v256, %v651
    %v653 = vrot.slane %v538, %v652
    %v654 = vlaneseq
    %v655 = vshrl.u32 %v654, 7
    %v656 = vsub.s32 %v256, %v655
    %v657 = vrot.slane %v543, %v656
    %v658 = vsel %vm289, %v633, %v629
    %v659 = vsel %vm291, %v637, %v658
    %v660 = vsel %vm293, %v641, %v659
    %v661 = vsel %vm295, %v645, %v660
    %v662 = vsel %vm297, %v649, %v661
    %v663 = vsel %vm299, %v653, %v662
    %v664 = vsel %vm301, %v657, %v663
    %666 = vst.msk [vmem:[#allocation8] sm:$0xff] %vm304, %v664
    // Predicated region
    $region22: #{tpu_custom_call.1} parent=1 // pred_check
      _
    $region23: #{tpu_custom_call.1} parent=1 // pred_check_branch
      %668 = sbr.rel (0) target = $region25
    $region24: #{tpu_custom_call.1} parent=1 // pred_region
      %s670 = ssub.s32 128, 128
      %671 = vsyncadd [#allocation4], %s670
      %s673 = sshll.u32 [#allocation7], 4
      %s674 = int_to_ptr.vmem [resolvable:$true] %s673
      %676 = dma.vmem_to_hbm [thread:$0]  %s674, 128, %s3, [#allocation4]
    $region25: #{tpu_custom_call.1} parent=1 // pred_fallthru
      _
    // Predicated region
    $region26: #{tpu_custom_call.1} parent=1 // pred_check
      _
    $region27: #{tpu_custom_call.1} parent=1 // pred_check_branch
      %678 = sbr.rel (0) target = $region29
    $region28: #{tpu_custom_call.1} parent=1 // pred_region
      %s680 = ssub.s32 128, 128
      %681 = vsyncadd [#allocation9], %s680
      %s683 = sshll.u32 [#allocation8], 4
      %s684 = int_to_ptr.vmem [resolvable:$true] %s683
      %686 = dma.vmem_to_hbm [thread:$0]  %s684, 128, %s4, [#allocation9]
    $region29: #{tpu_custom_call.1} parent=1 // pred_fallthru
      _
    // Predicated region
    $region30: #{tpu_custom_call.1} parent=1 // pred_check
      _
    $region31: #{tpu_custom_call.1} parent=1 // pred_check_branch
      %688 = sbr.rel (0) target = $region33
    $region32: #{tpu_custom_call.1} parent=1 // pred_region
      %689 = dma.done [#allocation4], 128
    $region33: #{tpu_custom_call.1} parent=1 // pred_fallthru
      _
    // Predicated region
    $region34: #{tpu_custom_call.1} parent=1 // pred_check
      _
    $region35: #{tpu_custom_call.1} parent=1 // pred_check_branch
      %691 = sbr.rel (0) target = $region37
    $region36: #{tpu_custom_call.1} parent=1 // pred_region
      %692 = dma.done [#allocation9], 128
    $region37: #{tpu_custom_call.1} parent=1 // pred_fallthru
      _
    %693 = vsyncpa [#allocation3], 1
    %694 = vsyncpa [#allocation6], 1
    %695 = vsyncpa [#allocation4], 1
    %696 = vsyncpa [#allocation9], 1

// kernel: tpu_custom_call.1
$region0: #{tpu_custom_call.1}
  #allocation0 [shape = 'u32[]', space=smem, size = 0x4, offset = 0x4, fixed_abs, tag = 'smem constant byte address 0x4 - core index']
  #allocation1 [shape = 'u32[144,128]{1,0:T(1,128)}', space=vmem, size = 0x12000, scoped, tag = 'internal scratch']
  %s0 = inlined_call_operand.hbm [shape: f32[8,8,32], index: 0, kind: input, shape index: {}]
  %s1 = inlined_call_operand.hbm [shape: f32[32,32], index: 1, kind: input, shape index: {}]
  %s2 = inlined_call_operand.vmem [shape: f32[1,32], index: 2, kind: input, shape index: {}]
  %s3 = inlined_call_operand.hbm [shape: f32[8,32], index: 3, kind: output, shape index: {0}]
  %s4 = inlined_call_operand.hbm [shape: f32[8,8], index: 4, kind: output, shape index: {1}]
  %5 = xla_tuple %s3, %s4
  %s6 = sld [smem:[#allocation0]]
  $region38: #{tpu_custom_call.1} parent=0
    _
  %s8 = ssub.s32 1, %s6
  %s9 = scalar_select 0, %s8, %s6
  $region1: #{tpu_custom_call.1} parent=0
    #allocation2 [shape = 'u8[32768]{0}', space=vmem, size = 0x8000, scoped, tag = 'input window, operand 0, single buffered']
    #allocation3 [shape = 's32[1]{0}', space=sflag, size = 0x4, scoped, tag = 'scoped memory for tpu_custom_call.1']
    #allocation4 [shape = 's32[1]{0}', space=sflag, size = 0x4, scoped, tag = 'scoped memory for tpu_custom_call.1']
    #allocation5 [shape = 'u8[16384]{0}', space=vmem, size = 0x4000, scoped, tag = 'input window, operand 1, single buffered']
    #allocation6 [shape = 's32[1]{0}', space=sflag, size = 0x4, scoped, tag = 'scoped memory for tpu_custom_call.1']
    #allocation7 [shape = 'u8[4096]{0}', space=vmem, size = 0x1000, scoped, tag = 'output window, operand 0, single buffered']
    #allocation8 [shape = 'u8[4096]{0}', space=vmem, size = 0x1000, scoped, tag = 'output window, operand 1, single buffered']
    #allocation9 [shape = 's32[1]{0}', space=sflag, size = 0x4, scoped, tag = 'scoped memory for tpu_custom_call.1']
    %10 = vsyncpa [#allocation3], 0
    %11 = vsyncpa [#allocation6], 0
    %12 = vsyncpa [#allocation4], 0
    %13 = vsyncpa [#allocation9], 0
    // Predicated region
    $region2: #{tpu_custom_call.1} parent=1 // pred_check
      _
    $region3: #{tpu_custom_call.1} parent=1 // pred_check_branch
      %15 = sbr.rel (0) target = $region5
    $region4: #{tpu_custom_call.1} parent=1 // pred_region
      %s17 = ssub.s32 1024, 1024
      %18 = vsyncadd [#allocation3], %s17
      %s19 = sshll.u32 [#allocation2], 4
      %s20 = int_to_ptr.vmem [resolvable:$true] %s19
      %25 = dma.hbm_to_vmem [thread:$0]  %s0, 1024, %s20, [#allocation3], 128, 128, 8
    $region5: #{tpu_custom_call.1} parent=1 // pred_fallthru
      _
    // Predicated region
    $region6: #{tpu_custom_call.1} parent=1 // pred_check
      _
    $region7: #{tpu_custom_call.1} parent=1 // pred_check_branch
      %27 = sbr.rel (0) target = $region9
    $region8: #{tpu_custom_call.1} parent=1 // pred_region
      %s29 = ssub.s32 512, 512
      %30 = vsyncadd [#allocation6], %s29
      %s31 = sshll.u32 [#allocation5], 4
      %s32 = int_to_ptr.vmem [resolvable:$true] %s31
      %37 = dma.hbm_to_vmem [thread:$0]  %s1, 512, %s32, [#allocation6], 128, 128, 8
    $region9: #{tpu_custom_call.1} parent=1 // pred_fallthru
      _
    // Predicated region
    $region10: #{tpu_custom_call.1} parent=1 // pred_check
      _
    $region11: #{tpu_custom_call.1} parent=1 // pred_check_branch
      %39 = sbr.rel (0) target = $region13
    $region12: #{tpu_custom_call.1} parent=1 // pred_region
      _
    $region13: #{tpu_custom_call.1} parent=1 // pred_fallthru
      _
    // Predicated region
    $region14: #{tpu_custom_call.1} parent=1 // pred_check
      _
    $region15: #{tpu_custom_call.1} parent=1 // pred_check_branch
      %41 = sbr.rel (0) target = $region17
    $region16: #{tpu_custom_call.1} parent=1 // pred_region
      %42 = dma.done [#allocation3], 1024
    $region17: #{tpu_custom_call.1} parent=1 // pred_fallthru
      _
    // Predicated region
    $region18: #{tpu_custom_call.1} parent=1 // pred_check
      _
    $region19: #{tpu_custom_call.1} parent=1 // pred_check_branch
      %44 = sbr.rel (0) target = $region21
    $region20: #{tpu_custom_call.1} parent=1 // pred_region
      %45 = dma.done [#allocation6], 512
    $region21: #{tpu_custom_call.1} parent=1 // pred_fallthru
      _
    %v46 = vld [vmem:[#allocation2] sm:$0xff]
    %v47 = vld [vmem:[#allocation2 + $0x8] sm:$0xff]
    %v48 = vld [vmem:[#allocation2 + $0x10] sm:$0xff]
    %v49 = vld [vmem:[#allocation2 + $0x18] sm:$0xff]
    %v50 = vld [vmem:[#allocation2 + $0x20] sm:$0xff]
    %v51 = vld [vmem:[#allocation2 + $0x28] sm:$0xff]
    %v52 = vld [vmem:[#allocation2 + $0x30] sm:$0xff]
    %v53 = vld [vmem:[#allocation2 + $0x38] sm:$0xff]
    %v54 = vld [vmem:[#allocation5] sm:$0xff]
    %v55 = vld [vmem:[#allocation5 + $0x8] sm:$0xff]
    %v56 = vld [vmem:[#allocation5 + $0x10] sm:$0xff]
    %v57 = vld [vmem:[#allocation5 + $0x18] sm:$0xff]
    %vm58 = vcmask 261120
    %v60 = vsel %vm58, %v46, 0
    %v63 = vsel %vm58, %v47, 0
    %v66 = vsel %vm58, %v48, 0
    %v69 = vsel %vm58, %v49, 0
    %v72 = vsel %vm58, %v50, 0
    %v75 = vsel %vm58, %v51, 0
    %v78 = vsel %vm58, %v52, 0
    %v81 = vsel %vm58, %v53, 0
    %v84 = vsel %vm58, %v54, 0
    %v87 = vsel %vm58, %v55, 0
    %v90 = vsel %vm58, %v56, 0
    %v93 = vsel %vm58, %v57, 0
    %95 = vmatprep.subr.mxu0 0.0
    %96 = vmatpush1.xpose.msra.mxu0 0.0
    %97 = vmatprep.subr.mxu0 0.0
    %98 = vmatpush1.xpose.msra.mxu0 0.0
    %99 = vmatprep.subr.mxu0 0.0
    %100 = vmatpush1.xpose.msra.mxu0 0.0
    %101 = vmatprep.subr.mxu0 0.0
    %102 = vmatpush1.xpose.msra.mxu0 0.0
    %103 = vmatprep.subr.mxu0 0.0
    %104 = vmatpush1.xpose.msra.mxu0 0.0
    %105 = vmatprep.subr.mxu0 0.0
    %106 = vmatpush1.xpose.msra.mxu0 0.0
    %107 = vmatprep.subr.mxu0 0.0
    %108 = vmatpush1.xpose.msra.mxu0 0.0
    %109 = vmatprep.subr.mxu0 0.0
    %110 = vmatpush1.xpose.msra.mxu0 0.0
    %111 = vmatprep.subr.mxu0 0.0
    %112 = vmatpush1.xpose.msra.mxu0 0.0
    %113 = vmatprep.subr.mxu0 0.0
    %114 = vmatpush1.xpose.msra.mxu0 0.0
    %115 = vmatprep.subr.mxu0 0.0
    %116 = vmatpush1.xpose.msra.mxu0 0.0
    %117 = vmatprep.subr.mxu0 0.0
    %118 = vmatpush1.xpose.msra.mxu0 0.0
    %119 = vmatprep.subr.mxu0 0.0
    %120 = vmatpush1.xpose.msra.mxu0 %v93
    %121 = vmatprep.subr.mxu0 0.0
    %122 = vmatpush1.xpose.msra.mxu0 %v90
    %123 = vmatprep.subr.mxu0 0.0
    %124 = vmatpush1.xpose.msra.mxu0 %v87
    %125 = vmatprep.subr.mxu0 0.0
    %126 = vmatpush1.xpose.msra.mxu0 %v84
    %127 = vmatprep.subr.mxu0 0.0
    %128 = vmatpush2.xpose.msra.mxu0 0.0
    %129 = vmatprep.subr.mxu0 0.0
    %130 = vmatpush2.xpose.msra.mxu0 0.0
    %131 = vmatprep.subr.mxu0 0.0
    %132 = vmatpush2.xpose.msra.mxu0 0.0
    %133 = vmatprep.subr.mxu0 0.0
    %134 = vmatpush2.xpose.msra.mxu0 0.0
    %135 = vmatprep.subr.mxu0 0.0
    %136 = vmatpush2.xpose.msra.mxu0 0.0
    %137 = vmatprep.subr.mxu0 0.0
    %138 = vmatpush2.xpose.msra.mxu0 0.0
    %139 = vmatprep.subr.mxu0 0.0
    %140 = vmatpush2.xpose.msra.mxu0 0.0
    %141 = vmatprep.subr.mxu0 0.0
    %142 = vmatpush2.xpose.msra.mxu0 0.0
    %143 = vmatprep.subr.mxu0 0.0
    %144 = vmatpush2.xpose.msra.mxu0 0.0
    %145 = vmatprep.subr.mxu0 0.0
    %146 = vmatpush2.xpose.msra.mxu0 0.0
    %147 = vmatprep.subr.mxu0 0.0
    %148 = vmatpush2.xpose.msra.mxu0 0.0
    %149 = vmatprep.subr.mxu0 0.0
    %150 = vmatpush2.xpose.msra.mxu0 0.0
    %151 = vmatprep.subr.mxu0 0.0
    %152 = vmatpush2.xpose.msra.mxu0 0.0
    %153 = vmatprep.subr.mxu0 0.0
    %154 = vmatpush2.xpose.msra.mxu0 0.0
    %155 = vmatprep.subr.mxu0 0.0
    %156 = vmatpush2.xpose.msra.mxu0 0.0
    %157 = vmatprep.subr.mxu0 0.0
    %158 = vmatpush2.xpose.msra.mxu0 0.0
    %159 = vmatprep.mubr.f32.mxu0 0.0
    %160 = vmatmul.mubr.f32.gmra.mxu0 %v60
    %v161 = vpop.f32.mrf.mxu0
    %v162 = vadd.f32 0.0, %v161
    %v163 = vpop.f32.mrf.mxu0
    %164 = vmatprep.mubr.f32.mxu0 0.0
    %165 = vmatmul.mubr.f32.gmra.mxu0 %v63
    %v166 = vpop.f32.mrf.mxu0
    %v167 = vadd.f32 0.0, %v166
    %v168 = vpop.f32.mrf.mxu0
    %169 = vmatprep.mubr.f32.mxu0 0.0
    %170 = vmatmul.mubr.f32.gmra.mxu0 %v66
    %v171 = vpop.f32.mrf.mxu0
    %v172 = vadd.f32 0.0, %v171
    %v173 = vpop.f32.mrf.mxu0
    %174 = vmatprep.mubr.f32.mxu0 0.0
    %175 = vmatmul.mubr.f32.gmra.mxu0 %v69
    %v176 = vpop.f32.mrf.mxu0
    %v177 = vadd.f32 0.0, %v176
    %v178 = vpop.f32.mrf.mxu0
    %179 = vmatprep.mubr.f32.mxu0 0.0
    %180 = vmatmul.mubr.f32.gmra.mxu0 %v72
    %v181 = vpop.f32.mrf.mxu0
    %v182 = vadd.f32 0.0, %v181
    %v183 = vpop.f32.mrf.mxu0
    %184 = vmatprep.mubr.f32.mxu0 0.0
    %185 = vmatmul.mubr.f32.gmra.mxu0 %v75
    %v186 = vpop.f32.mrf.mxu0
    %v187 = vadd.f32 0.0, %v186
    %v188 = vpop.f32.mrf.mxu0
    %189 = vmatprep.mubr.f32.mxu0 0.0
    %190 = vmatmul.mubr.f32.gmra.mxu0 %v78
    %v191 = vpop.f32.mrf.mxu0
    %v192 = vadd.f32 0.0, %v191
    %v193 = vpop.f32.mrf.mxu0
    %194 = vmatprep.mubr.f32.mxu0 0.0
    %195 = vmatmul.mubr.f32.gmra.mxu0 %v81
    %v196 = vpop.f32.mrf.mxu0
    %v197 = vadd.f32 0.0, %v196
    %v198 = vpop.f32.mrf.mxu0
    %199 = vdwg.mxu0
    %v200 = vtanh.pop %v162
    %v201 = vtanh.pop %v167
    %v202 = vtanh.pop %v172
    %v203 = vtanh.pop %v177
    %v204 = vtanh.pop %v182
    %v205 = vtanh.pop %v187
    %v206 = vtanh.pop %v192
    %v207 = vtanh.pop %v197
    %v208 = vld [vmem:[%s2] sm:$0x1]
    %v210 = vlaneseq
    %v211 = vshrl.u32 %v210, 7
    %v212 = vsub.s32 0, %v211
    %v213 = vrot.slane %v208, %v212
    %v215 = vmul.f32 %v200, %v213
    %v216 = vmul.f32 %v201, %v213
    %v217 = vmul.f32 %v202, %v213
    %v218 = vmul.f32 %v203, %v213
    %v219 = vmul.f32 %v204, %v213
    %v220 = vmul.f32 %v205, %v213
    %v221 = vmul.f32 %v206, %v213
    %v222 = vmul.f32 %v207, %v213
    %v223 = vsel %vm58, %v215, 0.0
    %224 = vadd.xlane.f32.xlu0 %v223
    %v225 = vpop.xlane.xlu0 %224
    %v226 = vsel %vm58, %v216, 0.0
    %227 = vadd.xlane.f32.xlu0 %v226
    %v228 = vpop.xlane.xlu0 %227
    %v229 = vsel %vm58, %v217, 0.0
    %230 = vadd.xlane.f32.xlu0 %v229
    %v231 = vpop.xlane.xlu0 %230
    %v232 = vsel %vm58, %v218, 0.0
    %233 = vadd.xlane.f32.xlu0 %v232
    %v234 = vpop.xlane.xlu0 %233
    %v235 = vsel %vm58, %v219, 0.0
    %236 = vadd.xlane.f32.xlu0 %v235
    %v237 = vpop.xlane.xlu0 %236
    %v238 = vsel %vm58, %v220, 0.0
    %239 = vadd.xlane.f32.xlu0 %v238
    %v240 = vpop.xlane.xlu0 %239
    %v241 = vsel %vm58, %v221, 0.0
    %242 = vadd.xlane.f32.xlu0 %v241
    %v243 = vpop.xlane.xlu0 %242
    %v244 = vsel %vm58, %v222, 0.0
    %245 = vadd.xlane.f32.xlu0 %v244
    %v246 = vpop.xlane.xlu0 %245
    %v255 = vlaneseq
    %v256 = vand.u32 %v255, 127
    %v257 = vlaneseq
    %v258 = vshrl.u32 %v257, 7
    %v259 = vsub.s32 %v256, %v258
    %v260 = vrot.slane %v225, %v259
    %v261 = vlaneseq
    %v262 = vshrl.u32 %v261, 7
    %v263 = vsub.s32 %v256, %v262
    %v264 = vrot.slane %v228, %v263
    %v265 = vlaneseq
    %v266 = vshrl.u32 %v265, 7
    %v267 = vsub.s32 %v256, %v266
    %v268 = vrot.slane %v231, %v267
    %v269 = vlaneseq
    %v270 = vshrl.u32 %v269, 7
    %v271 = vsub.s32 %v256, %v270
    %v272 = vrot.slane %v234, %v271
    %v273 = vlaneseq
    %v274 = vshrl.u32 %v273, 7
    %v275 = vsub.s32 %v256, %v274
    %v276 = vrot.slane %v237, %v275
    %v277 = vlaneseq
    %v278 = vshrl.u32 %v277, 7
    %v279 = vsub.s32 %v256, %v278
    %v280 = vrot.slane %v240, %v279
    %v281 = vlaneseq
    %v282 = vshrl.u32 %v281, 7
    %v283 = vsub.s32 %v256, %v282
    %v284 = vrot.slane %v243, %v283
    %v285 = vlaneseq
    %v286 = vshrl.u32 %v285, 7
    %v287 = vsub.s32 %v256, %v286
    %v288 = vrot.slane %v246, %v287
    %vm289 = vcmask 1041409
    %v290 = vsel %vm289, %v264, %v260
    %vm291 = vcmask 1042434
    %v292 = vsel %vm291, %v268, %v290
    %vm293 = vcmask 1043459
    %v294 = vsel %vm293, %v272, %v292
    %vm295 = vcmask 1044484
    %v296 = vsel %vm295, %v276, %v294
    %vm297 = vcmask 1045509
    %v298 = vsel %vm297, %v280, %v296
    %vm299 = vcmask 1046534
    %v300 = vsel %vm299, %v284, %v298
    %vm301 = vcmask 1047559
    %v302 = vsel %vm301, %v288, %v300
    %vm304 = vcmask 64512
    %v305 = vsel %vm304, %v302, -inf
    %306 = vmax.xlane.f32.xlu0 %v305
    %v307 = vpop.xlane.xlu0 %306
    %v309 = vlaneseq
    %v310 = vshrl.u32 %v309, 7
    %v311 = vsub.s32 0, %v310
    %v312 = vrot.slane %v307, %v311
    %v313 = vlaneseq
    %v314 = vshrl.u32 %v313, 7
    %v315 = vsub.s32 1, %v314
    %v316 = vrot.slane %v307, %v315
    %v317 = vlaneseq
    %v318 = vshrl.u32 %v317, 7
    %v319 = vsub.s32 2, %v318
    %v320 = vrot.slane %v307, %v319
    %v321 = vlaneseq
    %v322 = vshrl.u32 %v321, 7
    %v323 = vsub.s32 3, %v322
    %v324 = vrot.slane %v307, %v323
    %v325 = vlaneseq
    %v326 = vshrl.u32 %v325, 7
    %v327 = vsub.s32 4, %v326
    %v328 = vrot.slane %v307, %v327
    %v329 = vlaneseq
    %v330 = vshrl.u32 %v329, 7
    %v331 = vsub.s32 5, %v330
    %v332 = vrot.slane %v307, %v331
    %v333 = vlaneseq
    %v334 = vshrl.u32 %v333, 7
    %v335 = vsub.s32 6, %v334
    %v336 = vrot.slane %v307, %v335
    %v337 = vlaneseq
    %v338 = vshrl.u32 %v337, 7
    %v339 = vsub.s32 7, %v338
    %v340 = vrot.slane %v307, %v339
    %v349 = vsub.f32 %v225, %v312
    %v350 = vsub.f32 %v228, %v316
    %v351 = vsub.f32 %v231, %v320
    %v352 = vsub.f32 %v234, %v324
    %v353 = vsub.f32 %v237, %v328
    %v354 = vsub.f32 %v240, %v332
    %v355 = vsub.f32 %v243, %v336
    %v356 = vsub.f32 %v246, %v340
    %v357 = vmul.f32 %v349, 1.442695
    %v358 = vpow.pop %v357
    %v359 = vmul.f32 %v350, 1.442695
    %v360 = vpow.pop %v359
    %v361 = vmul.f32 %v351, 1.442695
    %v362 = vpow.pop %v361
    %v363 = vmul.f32 %v352, 1.442695
    %v364 = vpow.pop %v363
    %v365 = vmul.f32 %v353, 1.442695
    %v366 = vpow.pop %v365
    %v367 = vmul.f32 %v354, 1.442695
    %v368 = vpow.pop %v367
    %v369 = vmul.f32 %v355, 1.442695
    %v370 = vpow.pop %v369
    %v371 = vmul.f32 %v356, 1.442695
    %v372 = vpow.pop %v371
    %381 = vset.pattern.permute.xlu0 0
    %382 = vperm.xlu0 %381, %v358
    %v383 = vpop.permute.xlu0 %382
    %384 = vset.pattern.permute.xlu0 0
    %385 = vperm.xlu0 %384, %v360
    %v386 = vpop.permute.xlu0 %385
    %387 = vset.pattern.permute.xlu0 0
    %388 = vperm.xlu0 %387, %v362
    %v389 = vpop.permute.xlu0 %388
    %390 = vset.pattern.permute.xlu0 0
    %391 = vperm.xlu0 %390, %v364
    %v392 = vpop.permute.xlu0 %391
    %393 = vset.pattern.permute.xlu0 0
    %394 = vperm.xlu0 %393, %v366
    %v395 = vpop.permute.xlu0 %394
    %396 = vset.pattern.permute.xlu0 0
    %397 = vperm.xlu0 %396, %v368
    %v398 = vpop.permute.xlu0 %397
    %399 = vset.pattern.permute.xlu0 0
    %400 = vperm.xlu0 %399, %v370
    %v401 = vpop.permute.xlu0 %400
    %402 = vset.pattern.permute.xlu0 0
    %403 = vperm.xlu0 %402, %v372
    %v404 = vpop.permute.xlu0 %403
    %v405 = vlaneseq
    %v406 = vshrl.u32 %v405, 7
    %v407 = vsub.s32 %v256, %v406
    %v408 = vrot.slane %v383, %v407
    %v409 = vlaneseq
    %v410 = vshrl.u32 %v409, 7
    %v411 = vsub.s32 %v256, %v410
    %v412 = vrot.slane %v386, %v411
    %v413 = vlaneseq
    %v414 = vshrl.u32 %v413, 7
    %v415 = vsub.s32 %v256, %v414
    %v416 = vrot.slane %v389, %v415
    %v417 = vlaneseq
    %v418 = vshrl.u32 %v417, 7
    %v419 = vsub.s32 %v256, %v418
    %v420 = vrot.slane %v392, %v419
    %v421 = vlaneseq
    %v422 = vshrl.u32 %v421, 7
    %v423 = vsub.s32 %v256, %v422
    %v424 = vrot.slane %v395, %v423
    %v425 = vlaneseq
    %v426 = vshrl.u32 %v425, 7
    %v427 = vsub.s32 %v256, %v426
    %v428 = vrot.slane %v398, %v427
    %v429 = vlaneseq
    %v430 = vshrl.u32 %v429, 7
    %v431 = vsub.s32 %v256, %v430
    %v432 = vrot.slane %v401, %v431
    %v433 = vlaneseq
    %v434 = vshrl.u32 %v433, 7
    %v435 = vsub.s32 %v256, %v434
    %v436 = vrot.slane %v404, %v435
    %v437 = vsel %vm289, %v412, %v408
    %v438 = vsel %vm291, %v416, %v437
    %v439 = vsel %vm293, %v420, %v438
    %v440 = vsel %vm295, %v424, %v439
    %v441 = vsel %vm297, %v428, %v440
    %v442 = vsel %vm299, %v432, %v441
    %v443 = vsel %vm301, %v436, %v442
    %v445 = vsel %vm304, %v443, 0.0
    %446 = vadd.xlane.f32.xlu0 %v445
    %v447 = vpop.xlane.xlu0 %446
    %v449 = vlaneseq
    %v450 = vshrl.u32 %v449, 7
    %v451 = vsub.s32 0, %v450
    %v452 = vrot.slane %v447, %v451
    %v453 = vlaneseq
    %v454 = vshrl.u32 %v453, 7
    %v455 = vsub.s32 1, %v454
    %v456 = vrot.slane %v447, %v455
    %v457 = vlaneseq
    %v458 = vshrl.u32 %v457, 7
    %v459 = vsub.s32 2, %v458
    %v460 = vrot.slane %v447, %v459
    %v461 = vlaneseq
    %v462 = vshrl.u32 %v461, 7
    %v463 = vsub.s32 3, %v462
    %v464 = vrot.slane %v447, %v463
    %v465 = vlaneseq
    %v466 = vshrl.u32 %v465, 7
    %v467 = vsub.s32 4, %v466
    %v468 = vrot.slane %v447, %v467
    %v469 = vlaneseq
    %v470 = vshrl.u32 %v469, 7
    %v471 = vsub.s32 5, %v470
    %v472 = vrot.slane %v447, %v471
    %v473 = vlaneseq
    %v474 = vshrl.u32 %v473, 7
    %v475 = vsub.s32 6, %v474
    %v476 = vrot.slane %v447, %v475
    %v477 = vlaneseq
    %v478 = vshrl.u32 %v477, 7
    %v479 = vsub.s32 7, %v478
    %v480 = vrot.slane %v447, %v479
    %v489 = vrcp.pop %v452
    %v490 = vmul.f32 %v358, %v489
    %v491 = vrcp.pop %v456
    %v492 = vmul.f32 %v360, %v491
    %v493 = vrcp.pop %v460
    %v494 = vmul.f32 %v362, %v493
    %v495 = vrcp.pop %v464
    %v496 = vmul.f32 %v364, %v495
    %v497 = vrcp.pop %v468
    %v498 = vmul.f32 %v366, %v497
    %v499 = vrcp.pop %v472
    %v500 = vmul.f32 %v368, %v499
    %v501 = vrcp.pop %v476
    %v502 = vmul.f32 %v370, %v501
    %v503 = vrcp.pop %v480
    %v504 = vmul.f32 %v372, %v503
    %506 = vset.pattern.permute.xlu0 0
    %507 = vperm.xlu0 %506, %v490
    %v508 = vpop.permute.xlu0 %507
    %511 = vset.pattern.permute.xlu0 0
    %512 = vperm.xlu0 %511, %v492
    %v513 = vpop.permute.xlu0 %512
    %516 = vset.pattern.permute.xlu0 0
    %517 = vperm.xlu0 %516, %v494
    %v518 = vpop.permute.xlu0 %517
    %521 = vset.pattern.permute.xlu0 0
    %522 = vperm.xlu0 %521, %v496
    %v523 = vpop.permute.xlu0 %522
    %526 = vset.pattern.permute.xlu0 0
    %527 = vperm.xlu0 %526, %v498
    %v528 = vpop.permute.xlu0 %527
    %531 = vset.pattern.permute.xlu0 0
    %532 = vperm.xlu0 %531, %v500
    %v533 = vpop.permute.xlu0 %532
    %536 = vset.pattern.permute.xlu0 0
    %537 = vperm.xlu0 %536, %v502
    %v538 = vpop.permute.xlu0 %537
    %541 = vset.pattern.permute.xlu0 0
    %542 = vperm.xlu0 %541, %v504
    %v543 = vpop.permute.xlu0 %542
    %v545 = vmul.f32 %v508, %v46
    %v546 = vmul.f32 %v513, %v47
    %v547 = vmul.f32 %v518, %v48
    %v548 = vmul.f32 %v523, %v49
    %v549 = vmul.f32 %v528, %v50
    %v550 = vmul.f32 %v533, %v51
    %v551 = vmul.f32 %v538, %v52
    %v552 = vmul.f32 %v543, %v53
    %v553 = vsel %vm58, %v545, 0.0
    %v554 = vrot.slane %v553, 4
    %v555 = vadd.f32 %v553, %v554
    %v556 = vrot.slane %v555, 2
    %v557 = vadd.f32 %v555, %v556
    %v558 = vrot.slane %v557, 1
    %v559 = vadd.f32 %v557, %v558
    %v560 = vsel %vm58, %v546, 0.0
    %v561 = vrot.slane %v560, 4
    %v562 = vadd.f32 %v560, %v561
    %v563 = vrot.slane %v562, 2
    %v564 = vadd.f32 %v562, %v563
    %v565 = vrot.slane %v564, 1
    %v566 = vadd.f32 %v564, %v565
    %v567 = vsel %vm58, %v547, 0.0
    %v568 = vrot.slane %v567, 4
    %v569 = vadd.f32 %v567, %v568
    %v570 = vrot.slane %v569, 2
    %v571 = vadd.f32 %v569, %v570
    %v572 = vrot.slane %v571, 1
    %v573 = vadd.f32 %v571, %v572
    %v574 = vsel %vm58, %v548, 0.0
    %v575 = vrot.slane %v574, 4
    %v576 = vadd.f32 %v574, %v575
    %v577 = vrot.slane %v576, 2
    %v578 = vadd.f32 %v576, %v577
    %v579 = vrot.slane %v578, 1
    %v580 = vadd.f32 %v578, %v579
    %v581 = vsel %vm58, %v549, 0.0
    %v582 = vrot.slane %v581, 4
    %v583 = vadd.f32 %v581, %v582
    %v584 = vrot.slane %v583, 2
    %v585 = vadd.f32 %v583, %v584
    %v586 = vrot.slane %v585, 1
    %v587 = vadd.f32 %v585, %v586
    %v588 = vsel %vm58, %v550, 0.0
    %v589 = vrot.slane %v588, 4
    %v590 = vadd.f32 %v588, %v589
    %v591 = vrot.slane %v590, 2
    %v592 = vadd.f32 %v590, %v591
    %v593 = vrot.slane %v592, 1
    %v594 = vadd.f32 %v592, %v593
    %v595 = vsel %vm58, %v551, 0.0
    %v596 = vrot.slane %v595, 4
    %v597 = vadd.f32 %v595, %v596
    %v598 = vrot.slane %v597, 2
    %v599 = vadd.f32 %v597, %v598
    %v600 = vrot.slane %v599, 1
    %v601 = vadd.f32 %v599, %v600
    %v602 = vsel %vm58, %v552, 0.0
    %v603 = vrot.slane %v602, 4
    %v604 = vadd.f32 %v602, %v603
    %v605 = vrot.slane %v604, 2
    %v606 = vadd.f32 %v604, %v605
    %v607 = vrot.slane %v606, 1
    %v608 = vadd.f32 %v606, %v607
    %v617 = vsel %vm289, %v566, %v559
    %v618 = vsel %vm291, %v573, %v617
    %v619 = vsel %vm293, %v580, %v618
    %v620 = vsel %vm295, %v587, %v619
    %v621 = vsel %vm297, %v594, %v620
    %v622 = vsel %vm299, %v601, %v621
    %v623 = vsel %vm301, %v608, %v622
    %625 = vst.msk [vmem:[#allocation7] sm:$0xff] %vm58, %v623
    %v626 = vlaneseq
    %v627 = vshrl.u32 %v626, 7
    %v628 = vsub.s32 %v256, %v627
    %v629 = vrot.slane %v508, %v628
    %v630 = vlaneseq
    %v631 = vshrl.u32 %v630, 7
    %v632 = vsub.s32 %v256, %v631
    %v633 = vrot.slane %v513, %v632
    %v634 = vlaneseq
    %v635 = vshrl.u32 %v634, 7
    %v636 = vsub.s32 %v256, %v635
    %v637 = vrot.slane %v518, %v636
    %v638 = vlaneseq
    %v639 = vshrl.u32 %v638, 7
    %v640 = vsub.s32 %v256, %v639
    %v641 = vrot.slane %v523, %v640
    %v642 = vlaneseq
    %v643 = vshrl.u32 %v642, 7
    %v644 = vsub.s32 %v256, %v643
    %v645 = vrot.slane %v528, %v644
    %v646 = vlaneseq
    %v647 = vshrl.u32 %v646, 7
    %v648 = vsub.s32 %v256, %v647
    %v649 = vrot.slane %v533, %v648
    %v650 = vlaneseq
    %v651 = vshrl.u32 %v650, 7
    %v652 = vsub.s32 %v256, %v651
    %v653 = vrot.slane %v538, %v652
    %v654 = vlaneseq
    %v655 = vshrl.u32 %v654, 7
    %v656 = vsub.s32 %v256, %v655
    %v657 = vrot.slane %v543, %v656
    %v658 = vsel %vm289, %v633, %v629
    %v659 = vsel %vm291, %v637, %v658
    %v660 = vsel %vm293, %v641, %v659
    %v661 = vsel %vm295, %v645, %v660
    %v662 = vsel %vm297, %v649, %v661
    %v663 = vsel %vm299, %v653, %v662
    %v664 = vsel %vm301, %v657, %v663
    %666 = vst.msk [vmem:[#allocation8] sm:$0xff] %vm304, %v664
    // Predicated region
    $region22: #{tpu_custom_call.1} parent=1 // pred_check
      _
    $region23: #{tpu_custom_call.1} parent=1 // pred_check_branch
      %668 = sbr.rel (0) target = $region25
    $region24: #{tpu_custom_call.1} parent=1 // pred_region
      %s670 = ssub.s32 128, 128
      %671 = vsyncadd [#allocation4], %s670
      %s673 = sshll.u32 [#allocation7], 4
      %s674 = int_to_ptr.vmem [resolvable:$true] %s673
      %676 = dma.vmem_to_hbm [thread:$0]  %s674, 128, %s3, [#allocation4]
    $region25: #{tpu_custom_call.1} parent=1 // pred_fallthru
      _
    // Predicated region
    $region26: #{tpu_custom_call.1} parent=1 // pred_check
      _
    $region27: #{tpu_custom_call.1} parent=1 // pred_check_branch
      %678 = sbr.rel (0) target = $region29
    $region28: #{tpu_custom_call.1} parent=1 // pred_region
      %s680 = ssub.s32 128, 128
      %681 = vsyncadd [#allocation9], %s680
      %s683 = sshll.u32 [#allocation8], 4
      %s684 = int_to_ptr.vmem [resolvable:$true] %s683
      %686 = dma.vmem_to_hbm [thread:$0]  %s684, 128, %s4, [#allocation9]
    $region29: #{tpu_custom_call.1} parent=1 // pred_fallthru
      _
    // Predicated region
    $region30: #{tpu_custom_call.1} parent=1 // pred_check
      _
    $region31: #{tpu_custom_call.1} parent=1 // pred_check_branch
      %688 = sbr.rel (0) target = $region33
    $region32: #{tpu_custom_call.1} parent=1 // pred_region
      %689 = dma.done [#allocation4], 128
    $region33: #{tpu_custom_call.1} parent=1 // pred_fallthru
      _
    // Predicated region
    $region34: #{tpu_custom_call.1} parent=1 // pred_check
      _
    $region35: #{tpu_custom_call.1} parent=1 // pred_check_branch
      %691 = sbr.rel (0) target = $region37
    $region36: #{tpu_custom_call.1} parent=1 // pred_region
      %692 = dma.done [#allocation9], 128
    $region37: #{tpu_custom_call.1} parent=1 // pred_fallthru
      _
    %693 = vsyncpa [#allocation3], 1
    %694 = vsyncpa [#allocation6], 1
    %695 = vsyncpa [#allocation4], 1
    %696 = vsyncpa [#allocation9], 1

</llo_original>
